<compile_context>
chip_gen: v7x
topology: tpu7x:2x2x1
jax: 0.10.0
libtpu: 0.0.40
codegen_flags: <defaults>
</compile_context>

<pallas_src>
import functools

import jax
import jax.numpy as jnp
from jax.experimental import pallas as pl
from jax.experimental.pallas import tpu as pltpu

LANE = 128


def _round_up(v, m):
    return (v + m - 1) // m * m


# ----------------------------------------------------------------------------
# Pallas kernels
# ----------------------------------------------------------------------------
def _conv_tanh_pool_kernel(a_ref, b_ref, c_ref, d_ref, w_ref, bias_ref, o_ref):
    """Fused conv(+bias)+tanh+2x2 avg-pool for one tile of pooled output rows.

    a/b/c/d: [bm, K] bf16 im2col blocks, one per pool tap
    w:       [K, 128] bf16 (output channels zero-padded to 128 lanes)
    bias:    [1, 128] f32
    o:       [bm, 128] f32 pooled activation (lane-dense store)
    """
    w = w_ref[...]
    bias = bias_ref[...]
    acc = jnp.tanh(jnp.dot(a_ref[...], w, preferred_element_type=jnp.float32) + bias)
    acc += jnp.tanh(jnp.dot(b_ref[...], w, preferred_element_type=jnp.float32) + bias)
    acc += jnp.tanh(jnp.dot(c_ref[...], w, preferred_element_type=jnp.float32) + bias)
    acc += jnp.tanh(jnp.dot(d_ref[...], w, preferred_element_type=jnp.float32) + bias)
    o_ref[...] = acc * 0.25


def _classifier_kernel(x_ref, w3_ref, b3_ref, w4_ref, b4_ref, w5_ref, b5_ref,
                       o_ref, *, num_classes):
    """Fused conv3-as-matmul + tanh + fc1 + tanh + fc2 + log_softmax."""
    h = jnp.dot(x_ref[...], w3_ref[...], preferred_element_type=jnp.float32)
    h = jnp.tanh(h + b3_ref[...])
    h = jnp.dot(h.astype(w4_ref.dtype), w4_ref[...],
                preferred_element_type=jnp.float32)
    h = jnp.tanh(h + b4_ref[...])
    logits = jnp.dot(h.astype(w5_ref.dtype), w5_ref[...],
                     preferred_element_type=jnp.float32) + b5_ref[...]
    # Mask padded lanes so they cannot corrupt the softmax normalizer.
    lane = jax.lax.broadcasted_iota(jnp.int32, logits.shape, 1)
    logits = jnp.where(lane < num_classes, logits, jnp.float32(-1e30))
    m = jnp.max(logits, axis=-1, keepdims=True)
    z = logits - m
    lse = jnp.log(jnp.sum(jnp.exp(z), axis=-1, keepdims=True))
    o_ref[...] = z - lse


# ----------------------------------------------------------------------------
# Wrappers (NHWC glue + pallas_call plumbing)
# ----------------------------------------------------------------------------
def _pool_tap_cols(x, kh, kw, dy, dx, ph, pw):
    """im2col restricted to conv-output positions (2i+dy, 2j+dx).
    x: [N,H,W,C] -> [N*ph*pw, kh*kw*C] with feature order (ki, kj, c)."""
    n, _, _, c = x.shape
    pats = []
    for ki in range(kh):
        for kj in range(kw):
            r0, c0 = dy + ki, dx + kj
            pats.append(jax.lax.slice(
                x, (0, r0, c0, 0),
                (n, r0 + 2 * ph - 1, c0 + 2 * pw - 1, c),
                (1, 2, 2, 1)))
    cols = jnp.stack(pats, axis=3)                      # [N, PH, PW, KH*KW, C]
    return cols.reshape(n * ph * pw, kh * kw * c)


def _conv_tanh_pool(x, w, b, padding=0, block_m=512):
    """x: [N,H,W,C] f32 (NHWC); w: [O,C,KH,KW] (PyTorch layout); b: [O].
    Returns [N, OH//2, OW//2, 128] f32, channels 0..O-1 valid, rest zero."""
    if padding:
        x = jnp.pad(x, ((0, 0), (padding, padding), (padding, padding), (0, 0)))
    n, h, wd, c = x.shape
    o_ch, _, kh, kw = w.shape
    assert o_ch <= LANE
    oh, ow = h - kh + 1, wd - kw + 1
    assert oh % 2 == 0 and ow % 2 == 0, "AvgPool2d(2) needs even conv output"
    ph, pw = oh // 2, ow // 2
    k = kh * kw * c
    k_pad = _round_up(k, 8)                             # sublane alignment

    # weight [O,C,KH,KW] -> [KH*KW*C, O]; pad K (sublane) and O -> 128 (lane).
    wm = jnp.transpose(w, (2, 3, 1, 0)).reshape(k, o_ch)
    wm = jnp.pad(wm, ((0, k_pad - k), (0, LANE - o_ch))).astype(jnp.bfloat16)
    bias = jnp.pad(b, (0, LANE - o_ch)).reshape(1, LANE).astype(jnp.float32)

    taps = []
    for dy in range(2):
        for dx in range(2):
            cols = _pool_tap_cols(x, kh, kw, dy, dx, ph, pw)
            cols = jnp.pad(cols, ((0, 0), (0, k_pad - k))).astype(jnp.bfloat16)
            taps.append(cols)

    m = n * ph * pw
    bm = min(block_m, m)                                # bm==m or bm%8==0
    grid = (pl.cdiv(m, bm),)
    cost = pl.CostEstimate(
        flops=2 * 4 * m * k_pad * LANE,
        transcendentals=4 * m * LANE,
        bytes_accessed=4 * m * k_pad * 2 + k_pad * LANE * 2 + m * LANE * 4,
    )
    out = pl.pallas_call(
        _conv_tanh_pool_kernel,
        out_shape=jax.ShapeDtypeStruct((m, LANE), jnp.float32),
        grid=grid,
        in_specs=[pl.BlockSpec((bm, k_pad), lambda i: (i, 0)) for _ in range(4)]
                + [pl.BlockSpec((k_pad, LANE), lambda i: (0, 0)),
                   pl.BlockSpec((1, LANE), lambda i: (0, 0))],
        out_specs=pl.BlockSpec((bm, LANE), lambda i: (i, 0)),
        compiler_params=pltpu.CompilerParams(dimension_semantics=("parallel",)),
        cost_estimate=cost,
    )(*taps, wm, bias)
    return out.reshape(n, ph, pw, LANE)


def _classifier(x2d, params, num_classes):
    """x2d: [N, PH*PW*128] f32 (lane-padded NHWC flatten of the last pool).
    Returns [N, 128] f32 log-probs; lanes >= num_classes are junk (sliced off)."""
    n = x2d.shape[0]
    c3w, c3b = params["c3w"], params["c3b"]             # [120,16,KH,KW], [120]
    o3, c3, kh3, kw3 = c3w.shape
    assert x2d.shape[1] == kh3 * kw3 * LANE and o3 <= LANE

    w3 = jnp.transpose(c3w, (2, 3, 1, 0))               # [KH,KW,C,O]
    w3 = jnp.pad(w3, ((0, 0), (0, 0), (0, LANE - c3), (0, LANE - o3)))
    w3 = w3.reshape(kh3 * kw3 * LANE, LANE).astype(jnp.bfloat16)
    b3 = jnp.pad(c3b, (0, LANE - o3)).reshape(1, LANE).astype(jnp.float32)

    f1w, f1b = params["fc1w"], params["fc1b"]           # [84,120], [84]
    w4 = jnp.pad(f1w.T, ((0, LANE - f1w.shape[1]),
                         (0, LANE - f1w.shape[0]))).astype(jnp.bfloat16)
    b4 = jnp.pad(f1b, (0, LANE - f1b.shape[0])).reshape(1, LANE).astype(jnp.float32)

    f2w, f2b = params["fc2w"], params["fc2b"]           # [nc,84], [nc]
    w5 = jnp.pad(f2w.T, ((0, LANE - f2w.shape[1]),
                         (0, LANE - f2w.shape[0]))).astype(jnp.bfloat16)
    b5 = jnp.pad(f2b, (0, LANE - f2b.shape[0])).reshape(1, LANE).astype(jnp.float32)

    vspec = pl.BlockSpec(memory_space=pltpu.MemorySpace.VMEM)
    return pl.pallas_call(
        functools.partial(_classifier_kernel, num_classes=num_classes),
        out_shape=jax.ShapeDtypeStruct((n, LANE), jnp.float32),
        in_specs=[vspec] * 7,
        out_specs=vspec,
    )(x2d.astype(jnp.bfloat16), w3, b3, w4, b4, w5, b5)


def lenet5_forward(x_nchw, params, padding=0, num_classes=10):
    # NCHW (PyTorch spec) -> NHWC once at the boundary; NHWC thereafter.
    x = jnp.transpose(x_nchw, (0, 2, 3, 1)).astype(jnp.float32)
    o = _conv_tanh_pool(x, params["c1w"], params["c1b"], padding=padding)
    o = o[..., :params["c1w"].shape[0]]                 # keep the 6 valid channels
    o = _conv_tanh_pool(o, params["c2w"], params["c2b"])
    n = o.shape[0]
    x2d = o.reshape(n, -1)                              # [N, 5*5*128] lane-aligned
    logp = _classifier(x2d, params, num_classes)
    return logp[:, :num_classes]


# ----------------------------------------------------------------------------
# Pure-JAX reference (for correctness check only)
# ----------------------------------------------------------------------------
def _ref_forward(x, params, padding):
    def conv(xx, w, b, pad):
        o = jax.lax.conv_general_dilated(
            xx, w, window_strides=(1, 1), padding=[(pad, pad), (pad, pad)],
            dimension_numbers=("NCHW", "OIHW", "NCHW"))
        return jnp.tanh(o + b[None, :, None, None])

    def pool(xx):
        return 0.25 * (xx[:, :, 0::2, 0::2] + xx[:, :, 0::2, 1::2] +
                       xx[:, :, 1::2, 0::2] + xx[:, :, 1::2, 1::2])

    o = pool(conv(x, params["c1w"], params["c1b"], padding))
    o = pool(conv(o, params["c2w"], params["c2b"], 0))
    o = conv(o, params["c3w"], params["c3b"], 0).reshape(x.shape[0], -1)
    o = jnp.tanh(o @ params["fc1w"].T + params["fc1b"])
    o = o @ params["fc2w"].T + params["fc2b"]
    return jax.nn.log_softmax(o, axis=-1)


# ----------------------------------------------------------------------------
# Deterministic parameter initialization (PyTorch-style uniform bounds)
# ----------------------------------------------------------------------------
def init_params(key, num_classes=10):
    def u(k, shape, fan_in):
        bound = 1.0 / jnp.sqrt(fan_in)
        return jax.random.uniform(k, shape, jnp.float32, -bound, bound)

    ks = jax.random.split(key, 10)
    return {
        "c1w": u(ks[0], (6, 1, 5, 5), 1 * 5 * 5),
        "c1b": u(ks[1], (6,), 1 * 5 * 5),
        "c2w": u(ks[2], (16, 6, 5, 5), 6 * 5 * 5),
        "c2b": u(ks[3], (16,), 6 * 5 * 5),
        "c3w": u(ks[4], (120, 16, 5, 5), 16 * 5 * 5),
        "c3b": u(ks[5], (120,), 16 * 5 * 5),
        "fc1w": u(ks[6], (84, 120), 120),
        "fc1b": u(ks[7], (84,), 120),
        "fc2w": u(ks[8], (num_classes, 84), 84),
        "fc2b": u(ks[9], (num_classes,), 84),
    }


if __name__ == "__main__":
    key = jax.random.PRNGKey(0)
    k_param, k_x = jax.random.split(key)

    num_classes = 10
    params = init_params(k_param, num_classes=num_classes)

    # Default padding=0 requires 32x32 input to reach a [N,120,1,1] feature map.
    batch = 2
    x = jax.random.normal(k_x, (batch, 1, 32, 32), dtype=jnp.float32)

    fwd = jax.jit(lambda xx: lenet5_forward(xx, params, padding=0,
                                            num_classes=num_classes))
    out = jax.block_until_ready(fwd(x))

    assert out.shape == (batch, num_classes)
    # log_softmax rows should exponentiate-sum to ~1
    assert jnp.allclose(jnp.sum(jnp.exp(out), axis=-1), 1.0, atol=1e-4)

    # Compare against a pure-JAX f32 reference (bf16 MXU operands -> loose tol).
    ref = jax.block_until_ready(jax.jit(lambda xx: _ref_forward(xx, params, 0))(x))
    assert jnp.allclose(out, ref, atol=5e-2), float(jnp.max(jnp.abs(out - ref)))

    print("KERNEL_OK")
</pallas_src>

<mosaic_0001>
module attributes {stable_mosaic.version = 11 : i64} {
  func.func @_conv_tanh_pool_kernel(%arg0: i32, %arg1: memref<392x32xbf16, #tpu.memory_space<vmem>>, %arg2: memref<392x32xbf16, #tpu.memory_space<vmem>>, %arg3: memref<392x32xbf16, #tpu.memory_space<vmem>>, %arg4: memref<392x32xbf16, #tpu.memory_space<vmem>>, %arg5: memref<32x128xbf16, #tpu.memory_space<vmem>>, %arg6: memref<1x128xf32, #tpu.memory_space<vmem>>, %arg7: memref<392x128xf32, #tpu.memory_space<vmem>>) attributes {dimension_semantics = [#tpu.dimension_semantics<parallel>], iteration_bounds = array<i64: 1>, scalar_prefetch = 0 : i64, scratch_operands = 0 : i64, tpu.core_type = #tpu.core_type<tc>, window_params = [{transform_indices = @transform_0, window_bounds = array<i64: 392, 32>}, {transform_indices = @transform_1, window_bounds = array<i64: 392, 32>}, {transform_indices = @transform_2, window_bounds = array<i64: 392, 32>}, {transform_indices = @transform_3, window_bounds = array<i64: 392, 32>}, {pipeline_mode = #tpu.pipeline_mode<synchronous>, transform_indices = @transform_4, window_bounds = array<i64: 32, 128>}, {pipeline_mode = #tpu.pipeline_mode<synchronous>, transform_indices = @transform_5, window_bounds = array<i64: 1, 128>}, {transform_indices = @transform_6, window_bounds = array<i64: 392, 128>}]} {
    %c0 = arith.constant 0 : index
    %c0_0 = arith.constant 0 : index
    %0 = vector.load %arg5[%c0, %c0_0] : memref<32x128xbf16, #tpu.memory_space<vmem>>, vector<32x128xbf16>
    %c0_1 = arith.constant 0 : index
    %c0_2 = arith.constant 0 : index
    %1 = vector.load %arg6[%c0_1, %c0_2] : memref<1x128xf32, #tpu.memory_space<vmem>>, vector<1x128xf32>
    %c0_3 = arith.constant 0 : index
    %c0_4 = arith.constant 0 : index
    %2 = vector.load %arg1[%c0_3, %c0_4] : memref<392x32xbf16, #tpu.memory_space<vmem>>, vector<392x32xbf16>
    %cst = arith.constant dense<0.000000e+00> : vector<392x128xf32>
    %3 = tpu.matmul %2, %0, %cst {dimension_numbers = #tpu.dot_dimension_numbers<[1], [0], [0], [1], [0, 0, 1, 1], [], []>} : vector<392x32xbf16>, vector<32x128xbf16>, vector<392x128xf32> -> vector<392x128xf32>
    %4 = vector.broadcast %1 : vector<1x128xf32> to vector<392x128xf32>
    %5 = arith.addf %3, %4 : vector<392x128xf32>
    %6 = math.tanh %5 : vector<392x128xf32>
    %c0_5 = arith.constant 0 : index
    %c0_6 = arith.constant 0 : index
    %7 = vector.load %arg2[%c0_5, %c0_6] : memref<392x32xbf16, #tpu.memory_space<vmem>>, vector<392x32xbf16>
    %cst_7 = arith.constant dense<0.000000e+00> : vector<392x128xf32>
    %8 = tpu.matmul %7, %0, %cst_7 {dimension_numbers = #tpu.dot_dimension_numbers<[1], [0], [0], [1], [0, 0, 1, 1], [], []>} : vector<392x32xbf16>, vector<32x128xbf16>, vector<392x128xf32> -> vector<392x128xf32>
    %9 = vector.broadcast %1 : vector<1x128xf32> to vector<392x128xf32>
    %10 = arith.addf %8, %9 : vector<392x128xf32>
    %11 = math.tanh %10 : vector<392x128xf32>
    %12 = arith.addf %6, %11 : vector<392x128xf32>
    %c0_8 = arith.constant 0 : index
    %c0_9 = arith.constant 0 : index
    %13 = vector.load %arg3[%c0_8, %c0_9] : memref<392x32xbf16, #tpu.memory_space<vmem>>, vector<392x32xbf16>
    %cst_10 = arith.constant dense<0.000000e+00> : vector<392x128xf32>
    %14 = tpu.matmul %13, %0, %cst_10 {dimension_numbers = #tpu.dot_dimension_numbers<[1], [0], [0], [1], [0, 0, 1, 1], [], []>} : vector<392x32xbf16>, vector<32x128xbf16>, vector<392x128xf32> -> vector<392x128xf32>
    %15 = vector.broadcast %1 : vector<1x128xf32> to vector<392x128xf32>
    %16 = arith.addf %14, %15 : vector<392x128xf32>
    %17 = math.tanh %16 : vector<392x128xf32>
    %18 = arith.addf %12, %17 : vector<392x128xf32>
    %c0_11 = arith.constant 0 : index
    %c0_12 = arith.constant 0 : index
    %19 = vector.load %arg4[%c0_11, %c0_12] : memref<392x32xbf16, #tpu.memory_space<vmem>>, vector<392x32xbf16>
    %cst_13 = arith.constant dense<0.000000e+00> : vector<392x128xf32>
    %20 = tpu.matmul %19, %0, %cst_13 {dimension_numbers = #tpu.dot_dimension_numbers<[1], [0], [0], [1], [0, 0, 1, 1], [], []>} : vector<392x32xbf16>, vector<32x128xbf16>, vector<392x128xf32> -> vector<392x128xf32>
    %21 = vector.broadcast %1 : vector<1x128xf32> to vector<392x128xf32>
    %22 = arith.addf %20, %21 : vector<392x128xf32>
    %23 = math.tanh %22 : vector<392x128xf32>
    %24 = arith.addf %18, %23 : vector<392x128xf32>
    %cst_14 = arith.constant 2.500000e-01 : f32
    %25 = vector.broadcast %cst_14 : f32 to vector<392x128xf32>
    %26 = arith.mulf %24, %25 : vector<392x128xf32>
    %c0_15 = arith.constant 0 : index
    %c0_16 = arith.constant 0 : index
    %27 = vector.load %arg7[%c0_15, %c0_16] : memref<392x128xf32, #tpu.memory_space<vmem>>, vector<392x128xf32>
    tpu.vector_store %arg7[%c0_15, %c0_16], %26 {strides = array<i32>} : memref<392x128xf32, #tpu.memory_space<vmem>>, vector<392x128xf32>,
    return
  }
  func.func @transform_0(%arg0: i32) -> (i32, i32) {
    %c0_i32 = arith.constant 0 : i32
    %c0_i32_0 = arith.constant 0 : i32
    return %arg0, %c0_i32 : i32, i32
  }
  func.func @transform_1(%arg0: i32) -> (i32, i32) {
    %c0_i32 = arith.constant 0 : i32
    %c0_i32_0 = arith.constant 0 : i32
    return %arg0, %c0_i32 : i32, i32
  }
  func.func @transform_2(%arg0: i32) -> (i32, i32) {
    %c0_i32 = arith.constant 0 : i32
    %c0_i32_0 = arith.constant 0 : i32
    return %arg0, %c0_i32 : i32, i32
  }
  func.func @transform_3(%arg0: i32) -> (i32, i32) {
    %c0_i32 = arith.constant 0 : i32
    %c0_i32_0 = arith.constant 0 : i32
    return %arg0, %c0_i32 : i32, i32
  }
  func.func @transform_4(%arg0: i32) -> (i32, i32) {
    %c0_i32 = arith.constant 0 : i32
    %c0_i32_0 = arith.constant 0 : i32
    %c0_i32_1 = arith.constant 0 : i32
    return %c0_i32, %c0_i32_0 : i32, i32
  }
  func.func @transform_5(%arg0: i32) -> (i32, i32) {
    %c0_i32 = arith.constant 0 : i32
    %c0_i32_0 = arith.constant 0 : i32
    %c0_i32_1 = arith.constant 0 : i32
    return %c0_i32, %c0_i32_0 : i32, i32
  }
  func.func @transform_6(%arg0: i32) -> (i32, i32) {
    %c0_i32 = arith.constant 0 : i32
    %c0_i32_0 = arith.constant 0 : i32
    return %arg0, %c0_i32 : i32, i32
  }
}

module attributes {stable_mosaic.version = 11 : i64} {
  func.func @_conv_tanh_pool_kernel(%arg0: i32, %arg1: memref<50x152xbf16, #tpu.memory_space<vmem>>, %arg2: memref<50x152xbf16, #tpu.memory_space<vmem>>, %arg3: memref<50x152xbf16, #tpu.memory_space<vmem>>, %arg4: memref<50x152xbf16, #tpu.memory_space<vmem>>, %arg5: memref<152x128xbf16, #tpu.memory_space<vmem>>, %arg6: memref<1x128xf32, #tpu.memory_space<vmem>>, %arg7: memref<50x128xf32, #tpu.memory_space<vmem>>) attributes {dimension_semantics = [#tpu.dimension_semantics<parallel>], iteration_bounds = array<i64: 1>, scalar_prefetch = 0 : i64, scratch_operands = 0 : i64, tpu.core_type = #tpu.core_type<tc>, window_params = [{transform_indices = @transform_0, window_bounds = array<i64: 50, 152>}, {transform_indices = @transform_1, window_bounds = array<i64: 50, 152>}, {transform_indices = @transform_2, window_bounds = array<i64: 50, 152>}, {transform_indices = @transform_3, window_bounds = array<i64: 50, 152>}, {pipeline_mode = #tpu.pipeline_mode<synchronous>, transform_indices = @transform_4, window_bounds = array<i64: 152, 128>}, {pipeline_mode = #tpu.pipeline_mode<synchronous>, transform_indices = @transform_5, window_bounds = array<i64: 1, 128>}, {transform_indices = @transform_6, window_bounds = array<i64: 50, 128>}]} {
    %c0 = arith.constant 0 : index
    %c0_0 = arith.constant 0 : index
    %0 = vector.load %arg5[%c0, %c0_0] : memref<152x128xbf16, #tpu.memory_space<vmem>>, vector<152x128xbf16>
    %c0_1 = arith.constant 0 : index
    %c0_2 = arith.constant 0 : index
    %1 = vector.load %arg6[%c0_1, %c0_2] : memref<1x128xf32, #tpu.memory_space<vmem>>, vector<1x128xf32>
    %c0_3 = arith.constant 0 : index
    %c0_4 = arith.constant 0 : index
    %2 = vector.load %arg1[%c0_3, %c0_4] : memref<50x152xbf16, #tpu.memory_space<vmem>>, vector<50x152xbf16>
    %cst = arith.constant dense<0.000000e+00> : vector<50x128xf32>
    %3 = tpu.matmul %2, %0, %cst {dimension_numbers = #tpu.dot_dimension_numbers<[1], [0], [0], [1], [0, 0, 1, 1], [], []>} : vector<50x152xbf16>, vector<152x128xbf16>, vector<50x128xf32> -> vector<50x128xf32>
    %4 = vector.broadcast %1 : vector<1x128xf32> to vector<50x128xf32>
    %5 = arith.addf %3, %4 : vector<50x128xf32>
    %6 = math.tanh %5 : vector<50x128xf32>
    %c0_5 = arith.constant 0 : index
    %c0_6 = arith.constant 0 : index
    %7 = vector.load %arg2[%c0_5, %c0_6] : memref<50x152xbf16, #tpu.memory_space<vmem>>, vector<50x152xbf16>
    %cst_7 = arith.constant dense<0.000000e+00> : vector<50x128xf32>
    %8 = tpu.matmul %7, %0, %cst_7 {dimension_numbers = #tpu.dot_dimension_numbers<[1], [0], [0], [1], [0, 0, 1, 1], [], []>} : vector<50x152xbf16>, vector<152x128xbf16>, vector<50x128xf32> -> vector<50x128xf32>
    %9 = vector.broadcast %1 : vector<1x128xf32> to vector<50x128xf32>
    %10 = arith.addf %8, %9 : vector<50x128xf32>
    %11 = math.tanh %10 : vector<50x128xf32>
    %12 = arith.addf %6, %11 : vector<50x128xf32>
    %c0_8 = arith.constant 0 : index
    %c0_9 = arith.constant 0 : index
    %13 = vector.load %arg3[%c0_8, %c0_9] : memref<50x152xbf16, #tpu.memory_space<vmem>>, vector<50x152xbf16>
    %cst_10 = arith.constant dense<0.000000e+00> : vector<50x128xf32>
    %14 = tpu.matmul %13, %0, %cst_10 {dimension_numbers = #tpu.dot_dimension_numbers<[1], [0], [0], [1], [0, 0, 1, 1], [], []>} : vector<50x152xbf16>, vector<152x128xbf16>, vector<50x128xf32> -> vector<50x128xf32>
    %15 = vector.broadcast %1 : vector<1x128xf32> to vector<50x128xf32>
    %16 = arith.addf %14, %15 : vector<50x128xf32>
    %17 = math.tanh %16 : vector<50x128xf32>
    %18 = arith.addf %12, %17 : vector<50x128xf32>
    %c0_11 = arith.constant 0 : index
    %c0_12 = arith.constant 0 : index
    %19 = vector.load %arg4[%c0_11, %c0_12] : memref<50x152xbf16, #tpu.memory_space<vmem>>, vector<50x152xbf16>
    %cst_13 = arith.constant dense<0.000000e+00> : vector<50x128xf32>
    %20 = tpu.matmul %19, %0, %cst_13 {dimension_numbers = #tpu.dot_dimension_numbers<[1], [0], [0], [1], [0, 0, 1, 1], [], []>} : vector<50x152xbf16>, vector<152x128xbf16>, vector<50x128xf32> -> vector<50x128xf32>
    %21 = vector.broadcast %1 : vector<1x128xf32> to vector<50x128xf32>
    %22 = arith.addf %20, %21 : vector<50x128xf32>
    %23 = math.tanh %22 : vector<50x128xf32>
    %24 = arith.addf %18, %23 : vector<50x128xf32>
    %cst_14 = arith.constant 2.500000e-01 : f32
    %25 = vector.broadcast %cst_14 : f32 to vector<50x128xf32>
    %26 = arith.mulf %24, %25 : vector<50x128xf32>
    %c0_15 = arith.constant 0 : index
    %c0_16 = arith.constant 0 : index
    %27 = vector.load %arg7[%c0_15, %c0_16] : memref<50x128xf32, #tpu.memory_space<vmem>>, vector<50x128xf32>
    tpu.vector_store %arg7[%c0_15, %c0_16], %26 {strides = array<i32>} : memref<50x128xf32, #tpu.memory_space<vmem>>, vector<50x128xf32>,
    return
  }
  func.func @transform_0(%arg0: i32) -> (i32, i32) {
    %c0_i32 = arith.constant 0 : i32
    %c0_i32_0 = arith.constant 0 : i32
    return %arg0, %c0_i32 : i32, i32
  }
  func.func @transform_1(%arg0: i32) -> (i32, i32) {
    %c0_i32 = arith.constant 0 : i32
    %c0_i32_0 = arith.constant 0 : i32
    return %arg0, %c0_i32 : i32, i32
  }
  func.func @transform_2(%arg0: i32) -> (i32, i32) {
    %c0_i32 = arith.constant 0 : i32
    %c0_i32_0 = arith.constant 0 : i32
    return %arg0, %c0_i32 : i32, i32
  }
  func.func @transform_3(%arg0: i32) -> (i32, i32) {
    %c0_i32 = arith.constant 0 : i32
    %c0_i32_0 = arith.constant 0 : i32
    return %arg0, %c0_i32 : i32, i32
  }
  func.func @transform_4(%arg0: i32) -> (i32, i32) {
    %c0_i32 = arith.constant 0 : i32
    %c0_i32_0 = arith.constant 0 : i32
    %c0_i32_1 = arith.constant 0 : i32
    return %c0_i32, %c0_i32_0 : i32, i32
  }
  func.func @transform_5(%arg0: i32) -> (i32, i32) {
    %c0_i32 = arith.constant 0 : i32
    %c0_i32_0 = arith.constant 0 : i32
    %c0_i32_1 = arith.constant 0 : i32
    return %c0_i32, %c0_i32_0 : i32, i32
  }
  func.func @transform_6(%arg0: i32) -> (i32, i32) {
    %c0_i32 = arith.constant 0 : i32
    %c0_i32_0 = arith.constant 0 : i32
    return %arg0, %c0_i32 : i32, i32
  }
}

module attributes {stable_mosaic.version = 11 : i64} {
  func.func @_classifier_kernel(%arg0: memref<2x3200xbf16, #tpu.memory_space<vmem>>, %arg1: memref<3200x128xbf16, #tpu.memory_space<vmem>>, %arg2: memref<1x128xf32, #tpu.memory_space<vmem>>, %arg3: memref<128x128xbf16, #tpu.memory_space<vmem>>, %arg4: memref<1x128xf32, #tpu.memory_space<vmem>>, %arg5: memref<128x128xbf16, #tpu.memory_space<vmem>>, %arg6: memref<1x128xf32, #tpu.memory_space<vmem>>, %arg7: memref<2x128xf32, #tpu.memory_space<vmem>>) attributes {dimension_semantics = [], scalar_prefetch = 0 : i64, scratch_operands = 0 : i64, tpu.core_type = #tpu.core_type<tc>} {
    %c0 = arith.constant 0 : index
    %c0_0 = arith.constant 0 : index
    %0 = vector.load %arg0[%c0, %c0_0] : memref<2x3200xbf16, #tpu.memory_space<vmem>>, vector<2x3200xbf16>
    %c0_1 = arith.constant 0 : index
    %c0_2 = arith.constant 0 : index
    %1 = vector.load %arg1[%c0_1, %c0_2] : memref<3200x128xbf16, #tpu.memory_space<vmem>>, vector<3200x128xbf16>
    %cst = arith.constant dense<0.000000e+00> : vector<2x128xf32>
    %2 = tpu.matmul %0, %1, %cst {dimension_numbers = #tpu.dot_dimension_numbers<[1], [0], [0], [1], [0, 0, 1, 1], [], []>} : vector<2x3200xbf16>, vector<3200x128xbf16>, vector<2x128xf32> -> vector<2x128xf32>
    %c0_3 = arith.constant 0 : index
    %c0_4 = arith.constant 0 : index
    %3 = vector.load %arg2[%c0_3, %c0_4] : memref<1x128xf32, #tpu.memory_space<vmem>>, vector<1x128xf32>
    %4 = vector.broadcast %3 : vector<1x128xf32> to vector<2x128xf32>
    %5 = arith.addf %2, %4 : vector<2x128xf32>
    %6 = math.tanh %5 : vector<2x128xf32>
    %7 = arith.truncf %6 : vector<2x128xf32> to vector<2x128xbf16>
    %c0_5 = arith.constant 0 : index
    %c0_6 = arith.constant 0 : index
    %8 = vector.load %arg3[%c0_5, %c0_6] : memref<128x128xbf16, #tpu.memory_space<vmem>>, vector<128x128xbf16>
    %cst_7 = arith.constant dense<0.000000e+00> : vector<2x128xf32>
    %9 = tpu.matmul %7, %8, %cst_7 {dimension_numbers = #tpu.dot_dimension_numbers<[1], [0], [0], [1], [0, 0, 1, 1], [], []>} : vector<2x128xbf16>, vector<128x128xbf16>, vector<2x128xf32> -> vector<2x128xf32>
    %c0_8 = arith.constant 0 : index
    %c0_9 = arith.constant 0 : index
    %10 = vector.load %arg4[%c0_8, %c0_9] : memref<1x128xf32, #tpu.memory_space<vmem>>, vector<1x128xf32>
    %11 = vector.broadcast %10 : vector<1x128xf32> to vector<2x128xf32>
    %12 = arith.addf %9, %11 : vector<2x128xf32>
    %13 = math.tanh %12 : vector<2x128xf32>
    %14 = arith.truncf %13 : vector<2x128xf32> to vector<2x128xbf16>
    %c0_10 = arith.constant 0 : index
    %c0_11 = arith.constant 0 : index
    %15 = vector.load %arg5[%c0_10, %c0_11] : memref<128x128xbf16, #tpu.memory_space<vmem>>, vector<128x128xbf16>
    %cst_12 = arith.constant dense<0.000000e+00> : vector<2x128xf32>
    %16 = tpu.matmul %14, %15, %cst_12 {dimension_numbers = #tpu.dot_dimension_numbers<[1], [0], [0], [1], [0, 0, 1, 1], [], []>} : vector<2x128xbf16>, vector<128x128xbf16>, vector<2x128xf32> -> vector<2x128xf32>
    %c0_13 = arith.constant 0 : index
    %c0_14 = arith.constant 0 : index
    %17 = vector.load %arg6[%c0_13, %c0_14] : memref<1x128xf32, #tpu.memory_space<vmem>>, vector<1x128xf32>
    %18 = vector.broadcast %17 : vector<1x128xf32> to vector<2x128xf32>
    %19 = arith.addf %16, %18 : vector<2x128xf32>
    %20 = tpu.iota {dimensions = array<i32: 1>} : vector<2x128xi32>
    %c10_i32 = arith.constant 10 : i32
    %21 = vector.broadcast %c10_i32 : i32 to vector<2x128xi32>
    %22 = arith.cmpi slt, %20, %21 : vector<2x128xi32>
    %cst_15 = arith.constant -1.000000e+30 : f32
    %23 = vector.broadcast %cst_15 : f32 to vector<2x128xf32>
    %24 = arith.select %22, %19, %23 : vector<2x128xi1>, vector<2x128xf32>
    %cst_16 = arith.constant dense<0xFF800000> : vector<2xf32>
    %25 = vector.multi_reduction <maximumf>, %24, %cst_16 [1] : vector<2x128xf32> to vector<2xf32>
    %26 = vector.shape_cast %25 : vector<2xf32> to vector<2x1xf32>
    %27 = vector.broadcast %26 : vector<2x1xf32> to vector<2x128xf32>
    %28 = arith.subf %24, %27 : vector<2x128xf32>
    %29 = math.exp %28 : vector<2x128xf32>
    %cst_17 = arith.constant dense<0.000000e+00> : vector<2xf32>
    %30 = vector.multi_reduction <add>, %29, %cst_17 [1] : vector<2x128xf32> to vector<2xf32>
    %31 = vector.shape_cast %30 : vector<2xf32> to vector<2x1xf32>
    %32 = math.log %31 : vector<2x1xf32>
    %33 = vector.broadcast %32 : vector<2x1xf32> to vector<2x128xf32>
    %34 = arith.subf %28, %33 : vector<2x128xf32>
    %c0_18 = arith.constant 0 : index
    %c0_19 = arith.constant 0 : index
    %35 = vector.load %arg7[%c0_18, %c0_19] : memref<2x128xf32, #tpu.memory_space<vmem>>, vector<2x128xf32>
    tpu.vector_store %arg7[%c0_18, %c0_19], %34 {strides = array<i32>} : memref<2x128xf32, #tpu.memory_space<vmem>>, vector<2x128xf32>,
    return
  }
}

</mosaic_0001>

<llo_original>
// kernel: _lambda_.3
$region0: #{_lambda_.3}
  #allocation0 [shape = 'u32[]', space=smem, size = 0x4, offset = 0x4, fixed_abs, tag = 'smem constant byte address 0x4 - core index']
  #allocation1 [shape = 'u32[144,128]{1,0:T(1,128)}', space=vmem, size = 0x12000, scoped, tag = 'internal scratch']
  %s0 = inlined_call_operand.vmem [shape: bf16[392,32], index: 0, kind: input, shape index: {}]
  %s1 = inlined_call_operand.vmem [shape: bf16[392,32], index: 1, kind: input, shape index: {}]
  %s2 = inlined_call_operand.vmem [shape: bf16[392,32], index: 2, kind: input, shape index: {}]
  %s3 = inlined_call_operand.vmem [shape: bf16[392,32], index: 3, kind: input, shape index: {}]
  %s4 = inlined_call_operand.vmem [shape: bf16[32,128], index: 4, kind: input, shape index: {}]
  %s5 = inlined_call_operand.vmem [shape: f32[1,128], index: 5, kind: input, shape index: {}]
  %s6 = inlined_call_operand.vmem [shape: f32[392,128], index: 6, kind: output, shape index: {}]
  %s7 = sld [smem:[#allocation0]]
  $region34: #{_lambda_.3} parent=0
    _
  %s9 = ssub.s32 1, %s7
  %s10 = scalar_select 0, %s9, %s7
  // Predicated region
  $region2: #{_lambda_.3} parent=0 // pred_check
    _
  $region3: #{_lambda_.3} parent=0 // pred_check_branch
    %12 = sbr.rel (0) target = $region5
  $region4: #{_lambda_.3} parent=0 // pred_region
    _
  $region5: #{_lambda_.3} parent=0 // pred_fallthru
    _
  // Predicated region
  $region6: #{_lambda_.3} parent=0 // pred_check
    _
  $region7: #{_lambda_.3} parent=0 // pred_check_branch
    %14 = sbr.rel (0) target = $region9
  $region8: #{_lambda_.3} parent=0 // pred_region
    _
  $region9: #{_lambda_.3} parent=0 // pred_fallthru
    _
  // Predicated region
  $region10: #{_lambda_.3} parent=0 // pred_check
    _
  $region11: #{_lambda_.3} parent=0 // pred_check_branch
    %16 = sbr.rel (0) target = $region13
  $region12: #{_lambda_.3} parent=0 // pred_region
    _
  $region13: #{_lambda_.3} parent=0 // pred_fallthru
    _
  // Predicated region
  $region14: #{_lambda_.3} parent=0 // pred_check
    _
  $region15: #{_lambda_.3} parent=0 // pred_check_branch
    %18 = sbr.rel (0) target = $region17
  $region16: #{_lambda_.3} parent=0 // pred_region
    _
  $region17: #{_lambda_.3} parent=0 // pred_fallthru
    _
  // Predicated region
  $region18: #{_lambda_.3} parent=0 // pred_check
    _
  $region19: #{_lambda_.3} parent=0 // pred_check_branch
    %20 = sbr.rel (0) target = $region21
  $region20: #{_lambda_.3} parent=0 // pred_region
    _
  $region21: #{_lambda_.3} parent=0 // pred_fallthru
    _
  // Predicated region
  $region22: #{_lambda_.3} parent=0 // pred_check
    _
  $region23: #{_lambda_.3} parent=0 // pred_check_branch
    %22 = sbr.rel (0) target = $region25
  $region24: #{_lambda_.3} parent=0 // pred_region
    _
  $region25: #{_lambda_.3} parent=0 // pred_fallthru
    _
  %v24 = vld [vmem:[%s4] sm:$0xf]
  %v25 = vld [vmem:[%s4 + $0x4] sm:$0xf]
  %v26 = vld [vmem:[%s4 + $0x8] sm:$0xf]
  %v27 = vld [vmem:[%s4 + $0xc] sm:$0xf]
  %v28 = vld [vmem:[%s5] sm:$0x1]
  %v29 = vld [vmem:[%s0] sm:$0xf]
  %v30 = vld [vmem:[%s0 + $0x4] sm:$0xf]
  %v31 = vld [vmem:[%s0 + $0x8] sm:$0xf]
  %v32 = vld [vmem:[%s0 + $0xc] sm:$0xf]
  %v33 = vld [vmem:[%s0 + $0x10] sm:$0xf]
  %v34 = vld [vmem:[%s0 + $0x14] sm:$0xf]
  %v35 = vld [vmem:[%s0 + $0x18] sm:$0xf]
  %v36 = vld [vmem:[%s0 + $0x1c] sm:$0xf]
  %v37 = vld [vmem:[%s0 + $0x20] sm:$0xf]
  %v38 = vld [vmem:[%s0 + $0x24] sm:$0xf]
  %v39 = vld [vmem:[%s0 + $0x28] sm:$0xf]
  %v40 = vld [vmem:[%s0 + $0x2c] sm:$0xf]
  %v41 = vld [vmem:[%s0 + $0x30] sm:$0xf]
  %v42 = vld [vmem:[%s0 + $0x34] sm:$0xf]
  %v43 = vld [vmem:[%s0 + $0x38] sm:$0xf]
  %v44 = vld [vmem:[%s0 + $0x3c] sm:$0xf]
  %v45 = vld [vmem:[%s0 + $0x40] sm:$0xf]
  %v46 = vld [vmem:[%s0 + $0x44] sm:$0xf]
  %v47 = vld [vmem:[%s0 + $0x48] sm:$0xf]
  %v48 = vld [vmem:[%s0 + $0x4c] sm:$0xf]
  %v49 = vld [vmem:[%s0 + $0x50] sm:$0xf]
  %v50 = vld [vmem:[%s0 + $0x54] sm:$0xf]
  %v51 = vld [vmem:[%s0 + $0x58] sm:$0xf]
  %v52 = vld [vmem:[%s0 + $0x5c] sm:$0xf]
  %v53 = vld [vmem:[%s0 + $0x60] sm:$0xf]
  %v54 = vld [vmem:[%s0 + $0x64] sm:$0xf]
  %v55 = vld [vmem:[%s0 + $0x68] sm:$0xf]
  %v56 = vld [vmem:[%s0 + $0x6c] sm:$0xf]
  %v57 = vld [vmem:[%s0 + $0x70] sm:$0xf]
  %v58 = vld [vmem:[%s0 + $0x74] sm:$0xf]
  %v59 = vld [vmem:[%s0 + $0x78] sm:$0xf]
  %v60 = vld [vmem:[%s0 + $0x7c] sm:$0xf]
  %v61 = vld [vmem:[%s0 + $0x80] sm:$0xf]
  %v62 = vld [vmem:[%s0 + $0x84] sm:$0xf]
  %v63 = vld [vmem:[%s0 + $0x88] sm:$0xf]
  %v64 = vld [vmem:[%s0 + $0x8c] sm:$0xf]
  %v65 = vld [vmem:[%s0 + $0x90] sm:$0xf]
  %v66 = vld [vmem:[%s0 + $0x94] sm:$0xf]
  %v67 = vld [vmem:[%s0 + $0x98] sm:$0xf]
  %v68 = vld [vmem:[%s0 + $0x9c] sm:$0xf]
  %v69 = vld [vmem:[%s0 + $0xa0] sm:$0xf]
  %v70 = vld [vmem:[%s0 + $0xa4] sm:$0xf]
  %v71 = vld [vmem:[%s0 + $0xa8] sm:$0xf]
  %v72 = vld [vmem:[%s0 + $0xac] sm:$0xf]
  %v73 = vld [vmem:[%s0 + $0xb0] sm:$0xf]
  %v74 = vld [vmem:[%s0 + $0xb4] sm:$0xf]
  %v75 = vld [vmem:[%s0 + $0xb8] sm:$0xf]
  %v76 = vld [vmem:[%s0 + $0xbc] sm:$0xf]
  %v77 = vld [vmem:[%s0 + $0xc0] sm:$0xf]
  %v79 = vlaneseq
  %v80 = vshrl.u32 %v79, 7
  %v81 = vsub.s32 0, %v80
  %v82 = vrot.slane %v28, %v81
  %v133 = vunpack.c.l.b16 %v29
  %v134 = vunpack.c.l.b16 %v30
  %v135 = vunpack.c.l.b16 %v31
  %v136 = vunpack.c.l.b16 %v32
  %v137 = vunpack.c.l.b16 %v33
  %v138 = vunpack.c.l.b16 %v34
  %v139 = vunpack.c.l.b16 %v35
  %v140 = vunpack.c.l.b16 %v36
  %v141 = vunpack.c.l.b16 %v37
  %v142 = vunpack.c.l.b16 %v38
  %v143 = vunpack.c.l.b16 %v39
  %v144 = vunpack.c.l.b16 %v40
  %v145 = vunpack.c.l.b16 %v41
  %v146 = vunpack.c.l.b16 %v42
  %v147 = vunpack.c.l.b16 %v43
  %v148 = vunpack.c.l.b16 %v44
  %v149 = vunpack.c.l.b16 %v45
  %v150 = vunpack.c.l.b16 %v46
  %v151 = vunpack.c.l.b16 %v47
  %v152 = vunpack.c.l.b16 %v48
  %v153 = vunpack.c.l.b16 %v49
  %v154 = vunpack.c.l.b16 %v50
  %v155 = vunpack.c.l.b16 %v51
  %v156 = vunpack.c.l.b16 %v52
  %v157 = vunpack.c.l.b16 %v53
  %v158 = vunpack.c.l.b16 %v54
  %v159 = vunpack.c.l.b16 %v55
  %v160 = vunpack.c.l.b16 %v56
  %v161 = vunpack.c.l.b16 %v57
  %v162 = vunpack.c.l.b16 %v58
  %v163 = vunpack.c.l.b16 %v59
  %v164 = vunpack.c.l.b16 %v60
  %v165 = vunpack.c.l.b16 %v61
  %v166 = vunpack.c.l.b16 %v62
  %v167 = vunpack.c.l.b16 %v63
  %v168 = vunpack.c.l.b16 %v64
  %v169 = vunpack.c.l.b16 %v65
  %v170 = vunpack.c.l.b16 %v66
  %v171 = vunpack.c.l.b16 %v67
  %v172 = vunpack.c.l.b16 %v68
  %v173 = vunpack.c.l.b16 %v69
  %v174 = vunpack.c.l.b16 %v70
  %v175 = vunpack.c.l.b16 %v71
  %v176 = vunpack.c.l.b16 %v72
  %v177 = vunpack.c.l.b16 %v73
  %v178 = vunpack.c.l.b16 %v74
  %v179 = vunpack.c.l.b16 %v75
  %v180 = vunpack.c.l.b16 %v76
  %v181 = vunpack.c.l.b16 %v77
  %v182 = vpack.c.b16 %v134, %v133
  %v183 = vpack.c.b16 %v136, %v135
  %v184 = vpack.c.b16 %v138, %v137
  %v185 = vpack.c.b16 %v140, %v139
  %v186 = vpack.c.b16 %v142, %v141
  %v187 = vpack.c.b16 %v144, %v143
  %v188 = vpack.c.b16 %v146, %v145
  %v189 = vpack.c.b16 %v148, %v147
  %v190 = vpack.c.b16 %v150, %v149
  %v191 = vpack.c.b16 %v152, %v151
  %v192 = vpack.c.b16 %v154, %v153
  %v193 = vpack.c.b16 %v156, %v155
  %v194 = vpack.c.b16 %v158, %v157
  %v195 = vpack.c.b16 %v160, %v159
  %v196 = vpack.c.b16 %v162, %v161
  %v197 = vpack.c.b16 %v164, %v163
  %v198 = vpack.c.b16 %v166, %v165
  %v199 = vpack.c.b16 %v168, %v167
  %v200 = vpack.c.b16 %v170, %v169
  %v201 = vpack.c.b16 %v172, %v171
  %v202 = vpack.c.b16 %v174, %v173
  %v203 = vpack.c.b16 %v176, %v175
  %v204 = vpack.c.b16 %v178, %v177
  %v205 = vpack.c.b16 %v180, %v179
  %v206 = vpack.c.b16 %v181, %v181
  %v211 = vunpack.c.l.b16 %v24
  %v212 = vunpack.c.l.b16 %v25
  %v213 = vunpack.c.l.b16 %v26
  %v214 = vunpack.c.l.b16 %v27
  %v215 = vpack.c.b16 %v212, %v211
  %v216 = vpack.c.b16 %v214, %v213
  %vm219 = vcmask 261120
  %v221 = vsel %vm219, %v182, 0
  %v224 = vsel %vm219, %v183, 0
  %v227 = vsel %vm219, %v184, 0
  %v230 = vsel %vm219, %v185, 0
  %v233 = vsel %vm219, %v186, 0
  %v236 = vsel %vm219, %v187, 0
  %v239 = vsel %vm219, %v188, 0
  %v242 = vsel %vm219, %v189, 0
  %v245 = vsel %vm219, %v190, 0
  %v248 = vsel %vm219, %v191, 0
  %v251 = vsel %vm219, %v192, 0
  %v254 = vsel %vm219, %v193, 0
  %v257 = vsel %vm219, %v194, 0
  %v260 = vsel %vm219, %v195, 0
  %v263 = vsel %vm219, %v196, 0
  %v266 = vsel %vm219, %v197, 0
  %v269 = vsel %vm219, %v198, 0
  %v272 = vsel %vm219, %v199, 0
  %v275 = vsel %vm219, %v200, 0
  %v278 = vsel %vm219, %v201, 0
  %v281 = vsel %vm219, %v202, 0
  %v284 = vsel %vm219, %v203, 0
  %v287 = vsel %vm219, %v204, 0
  %v290 = vsel %vm219, %v205, 0
  %v293 = vsel %vm219, %v206, 0
  %295 = vmatprep.subr.bf16.mxu0 0
  %296 = vmatpush1.bf16.msra.mxu0 %v215
  %297 = vmatprep.subr.bf16.mxu0 0
  %298 = vmatpush1.bf16.msra.mxu0 %v216
  %299 = vmatprep.subr.bf16.mxu0 0
  %300 = vmatpush1.bf16.msra.mxu0 0
  %301 = vmatprep.subr.bf16.mxu0 0
  %302 = vmatpush1.bf16.msra.mxu0 0
  %303 = vmatprep.subr.bf16.mxu0 0
  %304 = vmatpush1.bf16.msra.mxu0 0
  %305 = vmatprep.subr.bf16.mxu0 0
  %306 = vmatpush1.bf16.msra.mxu0 0
  %307 = vmatprep.subr.bf16.mxu0 0
  %308 = vmatpush1.bf16.msra.mxu0 0
  %309 = vmatprep.subr.bf16.mxu0 0
  %310 = vmatpush1.bf16.msra.mxu0 0
  %311 = vmatprep.subr.bf16.mxu0 0
  %312 = vmatpush1.bf16.msra.mxu0 0
  %313 = vmatprep.subr.bf16.mxu0 0
  %314 = vmatpush1.bf16.msra.mxu0 0
  %315 = vmatprep.subr.bf16.mxu0 0
  %316 = vmatpush1.bf16.msra.mxu0 0
  %317 = vmatprep.subr.bf16.mxu0 0
  %318 = vmatpush1.bf16.msra.mxu0 0
  %319 = vmatprep.subr.bf16.mxu0 0
  %320 = vmatpush1.bf16.msra.mxu0 0
  %321 = vmatprep.subr.bf16.mxu0 0
  %322 = vmatpush1.bf16.msra.mxu0 0
  %323 = vmatprep.subr.bf16.mxu0 0
  %324 = vmatpush1.bf16.msra.mxu0 0
  %325 = vmatprep.subr.bf16.mxu0 0
  %326 = vmatpush1.bf16.msra.mxu0 0
  %327 = vmatprep.mubr.bf16.mxu0 0
  %328 = vmatmul.mubr.bf16.gmra.mrb[0].mxu0 %v221
  %v329 = vpop.f32.mrb[0].mxu0
  %v330 = vadd.f32 %v82, %v329
  %v331 = vpop.f32.mrb[0].mxu0
  %v332 = vpop.f32.mrb[0].mxu0
  %v333 = vadd.f32 %v82, %v332
  %v334 = vpop.f32.mrb[0].mxu0
  %335 = vmatprep.mubr.bf16.mxu0 0
  %336 = vmatmul.mubr.bf16.gmra.mrb[0].mxu0 %v224
  %v337 = vpop.f32.mrb[0].mxu0
  %v338 = vadd.f32 %v82, %v337
  %v339 = vpop.f32.mrb[0].mxu0
  %v340 = vpop.f32.mrb[0].mxu0
  %v341 = vadd.f32 %v82, %v340
  %v342 = vpop.f32.mrb[0].mxu0
  %343 = vmatprep.mubr.bf16.mxu0 0
  %344 = vmatmul.mubr.bf16.gmra.mrb[0].mxu0 %v227
  %v345 = vpop.f32.mrb[0].mxu0
  %v346 = vadd.f32 %v82, %v345
  %v347 = vpop.f32.mrb[0].mxu0
  %v348 = vpop.f32.mrb[0].mxu0
  %v349 = vadd.f32 %v82, %v348
  %v350 = vpop.f32.mrb[0].mxu0
  %351 = vmatprep.mubr.bf16.mxu0 0
  %352 = vmatmul.mubr.bf16.gmra.mrb[0].mxu0 %v230
  %v353 = vpop.f32.mrb[0].mxu0
  %v354 = vadd.f32 %v82, %v353
  %v355 = vpop.f32.mrb[0].mxu0
  %v356 = vpop.f32.mrb[0].mxu0
  %v357 = vadd.f32 %v82, %v356
  %v358 = vpop.f32.mrb[0].mxu0
  %359 = vmatprep.mubr.bf16.mxu0 0
  %360 = vmatmul.mubr.bf16.gmra.mrb[0].mxu0 %v233
  %v361 = vpop.f32.mrb[0].mxu0
  %v362 = vadd.f32 %v82, %v361
  %v363 = vpop.f32.mrb[0].mxu0
  %v364 = vpop.f32.mrb[0].mxu0
  %v365 = vadd.f32 %v82, %v364
  %v366 = vpop.f32.mrb[0].mxu0
  %367 = vmatprep.mubr.bf16.mxu0 0
  %368 = vmatmul.mubr.bf16.gmra.mrb[0].mxu0 %v236
  %v369 = vpop.f32.mrb[0].mxu0
  %v370 = vadd.f32 %v82, %v369
  %v371 = vpop.f32.mrb[0].mxu0
  %v372 = vpop.f32.mrb[0].mxu0
  %v373 = vadd.f32 %v82, %v372
  %v374 = vpop.f32.mrb[0].mxu0
  %375 = vmatprep.mubr.bf16.mxu0 0
  %376 = vmatmul.mubr.bf16.gmra.mrb[0].mxu0 %v239
  %v377 = vpop.f32.mrb[0].mxu0
  %v378 = vadd.f32 %v82, %v377
  %v379 = vpop.f32.mrb[0].mxu0
  %v380 = vpop.f32.mrb[0].mxu0
  %v381 = vadd.f32 %v82, %v380
  %v382 = vpop.f32.mrb[0].mxu0
  %383 = vmatprep.mubr.bf16.mxu0 0
  %384 = vmatmul.mubr.bf16.gmra.mrb[0].mxu0 %v242
  %v385 = vpop.f32.mrb[0].mxu0
  %v386 = vadd.f32 %v82, %v385
  %v387 = vpop.f32.mrb[0].mxu0
  %v388 = vpop.f32.mrb[0].mxu0
  %v389 = vadd.f32 %v82, %v388
  %v390 = vpop.f32.mrb[0].mxu0
  %391 = vmatprep.mubr.bf16.mxu0 0
  %392 = vmatmul.mubr.bf16.gmra.mrb[0].mxu0 %v245
  %v393 = vpop.f32.mrb[0].mxu0
  %v394 = vadd.f32 %v82, %v393
  %v395 = vpop.f32.mrb[0].mxu0
  %v396 = vpop.f32.mrb[0].mxu0
  %v397 = vadd.f32 %v82, %v396
  %v398 = vpop.f32.mrb[0].mxu0
  %399 = vmatprep.mubr.bf16.mxu0 0
  %400 = vmatmul.mubr.bf16.gmra.mrb[0].mxu0 %v248
  %v401 = vpop.f32.mrb[0].mxu0
  %v402 = vadd.f32 %v82, %v401
  %v403 = vpop.f32.mrb[0].mxu0
  %v404 = vpop.f32.mrb[0].mxu0
  %v405 = vadd.f32 %v82, %v404
  %v406 = vpop.f32.mrb[0].mxu0
  %407 = vmatprep.mubr.bf16.mxu0 0
  %408 = vmatmul.mubr.bf16.gmra.mrb[0].mxu0 %v251
  %v409 = vpop.f32.mrb[0].mxu0
  %v410 = vadd.f32 %v82, %v409
  %v411 = vpop.f32.mrb[0].mxu0
  %v412 = vpop.f32.mrb[0].mxu0
  %v413 = vadd.f32 %v82, %v412
  %v414 = vpop.f32.mrb[0].mxu0
  %415 = vmatprep.mubr.bf16.mxu0 0
  %416 = vmatmul.mubr.bf16.gmra.mrb[0].mxu0 %v254
  %v417 = vpop.f32.mrb[0].mxu0
  %v418 = vadd.f32 %v82, %v417
  %v419 = vpop.f32.mrb[0].mxu0
  %v420 = vpop.f32.mrb[0].mxu0
  %v421 = vadd.f32 %v82, %v420
  %v422 = vpop.f32.mrb[0].mxu0
  %423 = vmatprep.mubr.bf16.mxu0 0
  %424 = vmatmul.mubr.bf16.gmra.mrb[0].mxu0 %v257
  %v425 = vpop.f32.mrb[0].mxu0
  %v426 = vadd.f32 %v82, %v425
  %v427 = vpop.f32.mrb[0].mxu0
  %v428 = vpop.f32.mrb[0].mxu0
  %v429 = vadd.f32 %v82, %v428
  %v430 = vpop.f32.mrb[0].mxu0
  %431 = vmatprep.mubr.bf16.mxu0 0
  %432 = vmatmul.mubr.bf16.gmra.mrb[0].mxu0 %v260
  %v433 = vpop.f32.mrb[0].mxu0
  %v434 = vadd.f32 %v82, %v433
  %v435 = vpop.f32.mrb[0].mxu0
  %v436 = vpop.f32.mrb[0].mxu0
  %v437 = vadd.f32 %v82, %v436
  %v438 = vpop.f32.mrb[0].mxu0
  %439 = vmatprep.mubr.bf16.mxu0 0
  %440 = vmatmul.mubr.bf16.gmra.mrb[0].mxu0 %v263
  %v441 = vpop.f32.mrb[0].mxu0
  %v442 = vadd.f32 %v82, %v441
  %v443 = vpop.f32.mrb[0].mxu0
  %v444 = vpop.f32.mrb[0].mxu0
  %v445 = vadd.f32 %v82, %v444
  %v446 = vpop.f32.mrb[0].mxu0
  %447 = vmatprep.mubr.bf16.mxu0 0
  %448 = vmatmul.mubr.bf16.gmra.mrb[0].mxu0 %v266
  %v449 = vpop.f32.mrb[0].mxu0
  %v450 = vadd.f32 %v82, %v449
  %v451 = vpop.f32.mrb[0].mxu0
  %v452 = vpop.f32.mrb[0].mxu0
  %v453 = vadd.f32 %v82, %v452
  %v454 = vpop.f32.mrb[0].mxu0
  %455 = vmatprep.mubr.bf16.mxu0 0
  %456 = vmatmul.mubr.bf16.gmra.mrb[0].mxu0 %v269
  %v457 = vpop.f32.mrb[0].mxu0
  %v458 = vadd.f32 %v82, %v457
  %v459 = vpop.f32.mrb[0].mxu0
  %v460 = vpop.f32.mrb[0].mxu0
  %v461 = vadd.f32 %v82, %v460
  %v462 = vpop.f32.mrb[0].mxu0
  %463 = vmatprep.mubr.bf16.mxu0 0
  %464 = vmatmul.mubr.bf16.gmra.mrb[0].mxu0 %v272
  %v465 = vpop.f32.mrb[0].mxu0
  %v466 = vadd.f32 %v82, %v465
  %v467 = vpop.f32.mrb[0].mxu0
  %v468 = vpop.f32.mrb[0].mxu0
  %v469 = vadd.f32 %v82, %v468
  %v470 = vpop.f32.mrb[0].mxu0
  %471 = vmatprep.mubr.bf16.mxu0 0
  %472 = vmatmul.mubr.bf16.gmra.mrb[0].mxu0 %v275
  %v473 = vpop.f32.mrb[0].mxu0
  %v474 = vadd.f32 %v82, %v473
  %v475 = vpop.f32.mrb[0].mxu0
  %v476 = vpop.f32.mrb[0].mxu0
  %v477 = vadd.f32 %v82, %v476
  %v478 = vpop.f32.mrb[0].mxu0
  %479 = vmatprep.mubr.bf16.mxu0 0
  %480 = vmatmul.mubr.bf16.gmra.mrb[0].mxu0 %v278
  %v481 = vpop.f32.mrb[0].mxu0
  %v482 = vadd.f32 %v82, %v481
  %v483 = vpop.f32.mrb[0].mxu0
  %v484 = vpop.f32.mrb[0].mxu0
  %v485 = vadd.f32 %v82, %v484
  %v486 = vpop.f32.mrb[0].mxu0
  %487 = vmatprep.mubr.bf16.mxu0 0
  %488 = vmatmul.mubr.bf16.gmra.mrb[0].mxu0 %v281
  %v489 = vpop.f32.mrb[0].mxu0
  %v490 = vadd.f32 %v82, %v489
  %v491 = vpop.f32.mrb[0].mxu0
  %v492 = vpop.f32.mrb[0].mxu0
  %v493 = vadd.f32 %v82, %v492
  %v494 = vpop.f32.mrb[0].mxu0
  %495 = vmatprep.mubr.bf16.mxu0 0
  %496 = vmatmul.mubr.bf16.gmra.mrb[0].mxu0 %v284
  %v497 = vpop.f32.mrb[0].mxu0
  %v498 = vadd.f32 %v82, %v497
  %v499 = vpop.f32.mrb[0].mxu0
  %v500 = vpop.f32.mrb[0].mxu0
  %v501 = vadd.f32 %v82, %v500
  %v502 = vpop.f32.mrb[0].mxu0
  %503 = vmatprep.mubr.bf16.mxu0 0
  %504 = vmatmul.mubr.bf16.gmra.mrb[0].mxu0 %v287
  %v505 = vpop.f32.mrb[0].mxu0
  %v506 = vadd.f32 %v82, %v505
  %v507 = vpop.f32.mrb[0].mxu0
  %v508 = vpop.f32.mrb[0].mxu0
  %v509 = vadd.f32 %v82, %v508
  %v510 = vpop.f32.mrb[0].mxu0
  %511 = vmatprep.mubr.bf16.mxu0 0
  %512 = vmatmul.mubr.bf16.gmra.mrb[0].mxu0 %v290
  %v513 = vpop.f32.mrb[0].mxu0
  %v514 = vadd.f32 %v82, %v513
  %v515 = vpop.f32.mrb[0].mxu0
  %v516 = vpop.f32.mrb[0].mxu0
  %v517 = vadd.f32 %v82, %v516
  %v518 = vpop.f32.mrb[0].mxu0
  %519 = vmatprep.mubr.bf16.mxu0 0
  %520 = vmatmul.mubr.bf16.gmra.mrb[0].mxu0 %v293
  %v521 = vpop.f32.mrb[0].mxu0
  %v522 = vadd.f32 %v82, %v521
  %v523 = vpop.f32.mrb[0].mxu0
  %v524 = vpop.f32.mrb[0].mxu0
  %v525 = vpop.f32.mrb[0].mxu0
  %526 = vdwg.mxu0
  %v527 = vtanh.pop %v330
  %v528 = vtanh.pop %v333
  %v529 = vtanh.pop %v338
  %v530 = vtanh.pop %v341
  %v531 = vtanh.pop %v346
  %v532 = vtanh.pop %v349
  %v533 = vtanh.pop %v354
  %v534 = vtanh.pop %v357
  %v535 = vtanh.pop %v362
  %v536 = vtanh.pop %v365
  %v537 = vtanh.pop %v370
  %v538 = vtanh.pop %v373
  %v539 = vtanh.pop %v378
  %v540 = vtanh.pop %v381
  %v541 = vtanh.pop %v386
  %v542 = vtanh.pop %v389
  %v543 = vtanh.pop %v394
  %v544 = vtanh.pop %v397
  %v545 = vtanh.pop %v402
  %v546 = vtanh.pop %v405
  %v547 = vtanh.pop %v410
  %v548 = vtanh.pop %v413
  %v549 = vtanh.pop %v418
  %v550 = vtanh.pop %v421
  %v551 = vtanh.pop %v426
  %v552 = vtanh.pop %v429
  %v553 = vtanh.pop %v434
  %v554 = vtanh.pop %v437
  %v555 = vtanh.pop %v442
  %v556 = vtanh.pop %v445
  %v557 = vtanh.pop %v450
  %v558 = vtanh.pop %v453
  %v559 = vtanh.pop %v458
  %v560 = vtanh.pop %v461
  %v561 = vtanh.pop %v466
  %v562 = vtanh.pop %v469
  %v563 = vtanh.pop %v474
  %v564 = vtanh.pop %v477
  %v565 = vtanh.pop %v482
  %v566 = vtanh.pop %v485
  %v567 = vtanh.pop %v490
  %v568 = vtanh.pop %v493
  %v569 = vtanh.pop %v498
  %v570 = vtanh.pop %v501
  %v571 = vtanh.pop %v506
  %v572 = vtanh.pop %v509
  %v573 = vtanh.pop %v514
  %v574 = vtanh.pop %v517
  %v575 = vtanh.pop %v522
  %v576 = vld [vmem:[%s1] sm:$0xf]
  %v577 = vld [vmem:[%s1 + $0x4] sm:$0xf]
  %v578 = vld [vmem:[%s1 + $0x8] sm:$0xf]
  %v579 = vld [vmem:[%s1 + $0xc] sm:$0xf]
  %v580 = vld [vmem:[%s1 + $0x10] sm:$0xf]
  %v581 = vld [vmem:[%s1 + $0x14] sm:$0xf]
  %v582 = vld [vmem:[%s1 + $0x18] sm:$0xf]
  %v583 = vld [vmem:[%s1 + $0x1c] sm:$0xf]
  %v584 = vld [vmem:[%s1 + $0x20] sm:$0xf]
  %v585 = vld [vmem:[%s1 + $0x24] sm:$0xf]
  %v586 = vld [vmem:[%s1 + $0x28] sm:$0xf]
  %v587 = vld [vmem:[%s1 + $0x2c] sm:$0xf]
  %v588 = vld [vmem:[%s1 + $0x30] sm:$0xf]
  %v589 = vld [vmem:[%s1 + $0x34] sm:$0xf]
  %v590 = vld [vmem:[%s1 + $0x38] sm:$0xf]
  %v591 = vld [vmem:[%s1 + $0x3c] sm:$0xf]
  %v592 = vld [vmem:[%s1 + $0x40] sm:$0xf]
  %v593 = vld [vmem:[%s1 + $0x44] sm:$0xf]
  %v594 = vld [vmem:[%s1 + $0x48] sm:$0xf]
  %v595 = vld [vmem:[%s1 + $0x4c] sm:$0xf]
  %v596 = vld [vmem:[%s1 + $0x50] sm:$0xf]
  %v597 = vld [vmem:[%s1 + $0x54] sm:$0xf]
  %v598 = vld [vmem:[%s1 + $0x58] sm:$0xf]
  %v599 = vld [vmem:[%s1 + $0x5c] sm:$0xf]
  %v600 = vld [vmem:[%s1 + $0x60] sm:$0xf]
  %v601 = vld [vmem:[%s1 + $0x64] sm:$0xf]
  %v602 = vld [vmem:[%s1 + $0x68] sm:$0xf]
  %v603 = vld [vmem:[%s1 + $0x6c] sm:$0xf]
  %v604 = vld [vmem:[%s1 + $0x70] sm:$0xf]
  %v605 = vld [vmem:[%s1 + $0x74] sm:$0xf]
  %v606 = vld [vmem:[%s1 + $0x78] sm:$0xf]
  %v607 = vld [vmem:[%s1 + $0x7c] sm:$0xf]
  %v608 = vld [vmem:[%s1 + $0x80] sm:$0xf]
  %v609 = vld [vmem:[%s1 + $0x84] sm:$0xf]
  %v610 = vld [vmem:[%s1 + $0x88] sm:$0xf]
  %v611 = vld [vmem:[%s1 + $0x8c] sm:$0xf]
  %v612 = vld [vmem:[%s1 + $0x90] sm:$0xf]
  %v613 = vld [vmem:[%s1 + $0x94] sm:$0xf]
  %v614 = vld [vmem:[%s1 + $0x98] sm:$0xf]
  %v615 = vld [vmem:[%s1 + $0x9c] sm:$0xf]
  %v616 = vld [vmem:[%s1 + $0xa0] sm:$0xf]
  %v617 = vld [vmem:[%s1 + $0xa4] sm:$0xf]
  %v618 = vld [vmem:[%s1 + $0xa8] sm:$0xf]
  %v619 = vld [vmem:[%s1 + $0xac] sm:$0xf]
  %v620 = vld [vmem:[%s1 + $0xb0] sm:$0xf]
  %v621 = vld [vmem:[%s1 + $0xb4] sm:$0xf]
  %v622 = vld [vmem:[%s1 + $0xb8] sm:$0xf]
  %v623 = vld [vmem:[%s1 + $0xbc] sm:$0xf]
  %v624 = vld [vmem:[%s1 + $0xc0] sm:$0xf]
  %v674 = vunpack.c.l.b16 %v576
  %v675 = vunpack.c.l.b16 %v577
  %v676 = vunpack.c.l.b16 %v578
  %v677 = vunpack.c.l.b16 %v579
  %v678 = vunpack.c.l.b16 %v580
  %v679 = vunpack.c.l.b16 %v581
  %v680 = vunpack.c.l.b16 %v582
  %v681 = vunpack.c.l.b16 %v583
  %v682 = vunpack.c.l.b16 %v584
  %v683 = vunpack.c.l.b16 %v585
  %v684 = vunpack.c.l.b16 %v586
  %v685 = vunpack.c.l.b16 %v587
  %v686 = vunpack.c.l.b16 %v588
  %v687 = vunpack.c.l.b16 %v589
  %v688 = vunpack.c.l.b16 %v590
  %v689 = vunpack.c.l.b16 %v591
  %v690 = vunpack.c.l.b16 %v592
  %v691 = vunpack.c.l.b16 %v593
  %v692 = vunpack.c.l.b16 %v594
  %v693 = vunpack.c.l.b16 %v595
  %v694 = vunpack.c.l.b16 %v596
  %v695 = vunpack.c.l.b16 %v597
  %v696 = vunpack.c.l.b16 %v598
  %v697 = vunpack.c.l.b16 %v599
  %v698 = vunpack.c.l.b16 %v600
  %v699 = vunpack.c.l.b16 %v601
  %v700 = vunpack.c.l.b16 %v602
  %v701 = vunpack.c.l.b16 %v603
  %v702 = vunpack.c.l.b16 %v604
  %v703 = vunpack.c.l.b16 %v605
  %v704 = vunpack.c.l.b16 %v606
  %v705 = vunpack.c.l.b16 %v607
  %v706 = vunpack.c.l.b16 %v608
  %v707 = vunpack.c.l.b16 %v609
  %v708 = vunpack.c.l.b16 %v610
  %v709 = vunpack.c.l.b16 %v611
  %v710 = vunpack.c.l.b16 %v612
  %v711 = vunpack.c.l.b16 %v613
  %v712 = vunpack.c.l.b16 %v614
  %v713 = vunpack.c.l.b16 %v615
  %v714 = vunpack.c.l.b16 %v616
  %v715 = vunpack.c.l.b16 %v617
  %v716 = vunpack.c.l.b16 %v618
  %v717 = vunpack.c.l.b16 %v619
  %v718 = vunpack.c.l.b16 %v620
  %v719 = vunpack.c.l.b16 %v621
  %v720 = vunpack.c.l.b16 %v622
  %v721 = vunpack.c.l.b16 %v623
  %v722 = vunpack.c.l.b16 %v624
  %v723 = vpack.c.b16 %v675, %v674
  %v724 = vpack.c.b16 %v677, %v676
  %v725 = vpack.c.b16 %v679, %v678
  %v726 = vpack.c.b16 %v681, %v680
  %v727 = vpack.c.b16 %v683, %v682
  %v728 = vpack.c.b16 %v685, %v684
  %v729 = vpack.c.b16 %v687, %v686
  %v730 = vpack.c.b16 %v689, %v688
  %v731 = vpack.c.b16 %v691, %v690
  %v732 = vpack.c.b16 %v693, %v692
  %v733 = vpack.c.b16 %v695, %v694
  %v734 = vpack.c.b16 %v697, %v696
  %v735 = vpack.c.b16 %v699, %v698
  %v736 = vpack.c.b16 %v701, %v700
  %v737 = vpack.c.b16 %v703, %v702
  %v738 = vpack.c.b16 %v705, %v704
  %v739 = vpack.c.b16 %v707, %v706
  %v740 = vpack.c.b16 %v709, %v708
  %v741 = vpack.c.b16 %v711, %v710
  %v742 = vpack.c.b16 %v713, %v712
  %v743 = vpack.c.b16 %v715, %v714
  %v744 = vpack.c.b16 %v717, %v716
  %v745 = vpack.c.b16 %v719, %v718
  %v746 = vpack.c.b16 %v721, %v720
  %v747 = vpack.c.b16 %v722, %v722
  %v749 = vsel %vm219, %v723, 0
  %v752 = vsel %vm219, %v724, 0
  %v755 = vsel %vm219, %v725, 0
  %v758 = vsel %vm219, %v726, 0
  %v761 = vsel %vm219, %v727, 0
  %v764 = vsel %vm219, %v728, 0
  %v767 = vsel %vm219, %v729, 0
  %v770 = vsel %vm219, %v730, 0
  %v773 = vsel %vm219, %v731, 0
  %v776 = vsel %vm219, %v732, 0
  %v779 = vsel %vm219, %v733, 0
  %v782 = vsel %vm219, %v734, 0
  %v785 = vsel %vm219, %v735, 0
  %v788 = vsel %vm219, %v736, 0
  %v791 = vsel %vm219, %v737, 0
  %v794 = vsel %vm219, %v738, 0
  %v797 = vsel %vm219, %v739, 0
  %v800 = vsel %vm219, %v740, 0
  %v803 = vsel %vm219, %v741, 0
  %v806 = vsel %vm219, %v742, 0
  %v809 = vsel %vm219, %v743, 0
  %v812 = vsel %vm219, %v744, 0
  %v815 = vsel %vm219, %v745, 0
  %v818 = vsel %vm219, %v746, 0
  %v821 = vsel %vm219, %v747, 0
  %823 = vmatprep.subr.bf16.mxu0 0
  %824 = vmatpush1.bf16.msra.mxu0 %v215
  %825 = vmatprep.subr.bf16.mxu0 0
  %826 = vmatpush1.bf16.msra.mxu0 %v216
  %827 = vmatprep.subr.bf16.mxu0 0
  %828 = vmatpush1.bf16.msra.mxu0 0
  %829 = vmatprep.subr.bf16.mxu0 0
  %830 = vmatpush1.bf16.msra.mxu0 0
  %831 = vmatprep.subr.bf16.mxu0 0
  %832 = vmatpush1.bf16.msra.mxu0 0
  %833 = vmatprep.subr.bf16.mxu0 0
  %834 = vmatpush1.bf16.msra.mxu0 0
  %835 = vmatprep.subr.bf16.mxu0 0
  %836 = vmatpush1.bf16.msra.mxu0 0
  %837 = vmatprep.subr.bf16.mxu0 0
  %838 = vmatpush1.bf16.msra.mxu0 0
  %839 = vmatprep.subr.bf16.mxu0 0
  %840 = vmatpush1.bf16.msra.mxu0 0
  %841 = vmatprep.subr.bf16.mxu0 0
  %842 = vmatpush1.bf16.msra.mxu0 0
  %843 = vmatprep.subr.bf16.mxu0 0
  %844 = vmatpush1.bf16.msra.mxu0 0
  %845 = vmatprep.subr.bf16.mxu0 0
  %846 = vmatpush1.bf16.msra.mxu0 0
  %847 = vmatprep.subr.bf16.mxu0 0
  %848 = vmatpush1.bf16.msra.mxu0 0
  %849 = vmatprep.subr.bf16.mxu0 0
  %850 = vmatpush1.bf16.msra.mxu0 0
  %851 = vmatprep.subr.bf16.mxu0 0
  %852 = vmatpush1.bf16.msra.mxu0 0
  %853 = vmatprep.subr.bf16.mxu0 0
  %854 = vmatpush1.bf16.msra.mxu0 0
  %855 = vmatprep.mubr.bf16.mxu0 0
  %856 = vmatmul.mubr.bf16.gmra.mrb[0].mxu0 %v749
  %v857 = vpop.f32.mrb[0].mxu0
  %v858 = vadd.f32 %v82, %v857
  %v859 = vpop.f32.mrb[0].mxu0
  %v860 = vpop.f32.mrb[0].mxu0
  %v861 = vadd.f32 %v82, %v860
  %v862 = vpop.f32.mrb[0].mxu0
  %863 = vmatprep.mubr.bf16.mxu0 0
  %864 = vmatmul.mubr.bf16.gmra.mrb[0].mxu0 %v752
  %v865 = vpop.f32.mrb[0].mxu0
  %v866 = vadd.f32 %v82, %v865
  %v867 = vpop.f32.mrb[0].mxu0
  %v868 = vpop.f32.mrb[0].mxu0
  %v869 = vadd.f32 %v82, %v868
  %v870 = vpop.f32.mrb[0].mxu0
  %871 = vmatprep.mubr.bf16.mxu0 0
  %872 = vmatmul.mubr.bf16.gmra.mrb[0].mxu0 %v755
  %v873 = vpop.f32.mrb[0].mxu0
  %v874 = vadd.f32 %v82, %v873
  %v875 = vpop.f32.mrb[0].mxu0
  %v876 = vpop.f32.mrb[0].mxu0
  %v877 = vadd.f32 %v82, %v876
  %v878 = vpop.f32.mrb[0].mxu0
  %879 = vmatprep.mubr.bf16.mxu0 0
  %880 = vmatmul.mubr.bf16.gmra.mrb[0].mxu0 %v758
  %v881 = vpop.f32.mrb[0].mxu0
  %v882 = vadd.f32 %v82, %v881
  %v883 = vpop.f32.mrb[0].mxu0
  %v884 = vpop.f32.mrb[0].mxu0
  %v885 = vadd.f32 %v82, %v884
  %v886 = vpop.f32.mrb[0].mxu0
  %887 = vmatprep.mubr.bf16.mxu0 0
  %888 = vmatmul.mubr.bf16.gmra.mrb[0].mxu0 %v761
  %v889 = vpop.f32.mrb[0].mxu0
  %v890 = vadd.f32 %v82, %v889
  %v891 = vpop.f32.mrb[0].mxu0
  %v892 = vpop.f32.mrb[0].mxu0
  %v893 = vadd.f32 %v82, %v892
  %v894 = vpop.f32.mrb[0].mxu0
  %895 = vmatprep.mubr.bf16.mxu0 0
  %896 = vmatmul.mubr.bf16.gmra.mrb[0].mxu0 %v764
  %v897 = vpop.f32.mrb[0].mxu0
  %v898 = vadd.f32 %v82, %v897
  %v899 = vpop.f32.mrb[0].mxu0
  %v900 = vpop.f32.mrb[0].mxu0
  %v901 = vadd.f32 %v82, %v900
  %v902 = vpop.f32.mrb[0].mxu0
  %903 = vmatprep.mubr.bf16.mxu0 0
  %904 = vmatmul.mubr.bf16.gmra.mrb[0].mxu0 %v767
  %v905 = vpop.f32.mrb[0].mxu0
  %v906 = vadd.f32 %v82, %v905
  %v907 = vpop.f32.mrb[0].mxu0
  %v908 = vpop.f32.mrb[0].mxu0
  %v909 = vadd.f32 %v82, %v908
  %v910 = vpop.f32.mrb[0].mxu0
  %911 = vmatprep.mubr.bf16.mxu0 0
  %912 = vmatmul.mubr.bf16.gmra.mrb[0].mxu0 %v770
  %v913 = vpop.f32.mrb[0].mxu0
  %v914 = vadd.f32 %v82, %v913
  %v915 = vpop.f32.mrb[0].mxu0
  %v916 = vpop.f32.mrb[0].mxu0
  %v917 = vadd.f32 %v82, %v916
  %v918 = vpop.f32.mrb[0].mxu0
  %919 = vmatprep.mubr.bf16.mxu0 0
  %920 = vmatmul.mubr.bf16.gmra.mrb[0].mxu0 %v773
  %v921 = vpop.f32.mrb[0].mxu0
  %v922 = vadd.f32 %v82, %v921
  %v923 = vpop.f32.mrb[0].mxu0
  %v924 = vpop.f32.mrb[0].mxu0
  %v925 = vadd.f32 %v82, %v924
  %v926 = vpop.f32.mrb[0].mxu0
  %927 = vmatprep.mubr.bf16.mxu0 0
  %928 = vmatmul.mubr.bf16.gmra.mrb[0].mxu0 %v776
  %v929 = vpop.f32.mrb[0].mxu0
  %v930 = vadd.f32 %v82, %v929
  %v931 = vpop.f32.mrb[0].mxu0
  %v932 = vpop.f32.mrb[0].mxu0
  %v933 = vadd.f32 %v82, %v932
  %v934 = vpop.f32.mrb[0].mxu0
  %935 = vmatprep.mubr.bf16.mxu0 0
  %936 = vmatmul.mubr.bf16.gmra.mrb[0].mxu0 %v779
  %v937 = vpop.f32.mrb[0].mxu0
  %v938 = vadd.f32 %v82, %v937
  %v939 = vpop.f32.mrb[0].mxu0
  %v940 = vpop.f32.mrb[0].mxu0
  %v941 = vadd.f32 %v82, %v940
  %v942 = vpop.f32.mrb[0].mxu0
  %943 = vmatprep.mubr.bf16.mxu0 0
  %944 = vmatmul.mubr.bf16.gmra.mrb[0].mxu0 %v782
  %v945 = vpop.f32.mrb[0].mxu0
  %v946 = vadd.f32 %v82, %v945
  %v947 = vpop.f32.mrb[0].mxu0
  %v948 = vpop.f32.mrb[0].mxu0
  %v949 = vadd.f32 %v82, %v948
  %v950 = vpop.f32.mrb[0].mxu0
  %951 = vmatprep.mubr.bf16.mxu0 0
  %952 = vmatmul.mubr.bf16.gmra.mrb[0].mxu0 %v785
  %v953 = vpop.f32.mrb[0].mxu0
  %v954 = vadd.f32 %v82, %v953
  %v955 = vpop.f32.mrb[0].mxu0
  %v956 = vpop.f32.mrb[0].mxu0
  %v957 = vadd.f32 %v82, %v956
  %v958 = vpop.f32.mrb[0].mxu0
  %959 = vmatprep.mubr.bf16.mxu0 0
  %960 = vmatmul.mubr.bf16.gmra.mrb[0].mxu0 %v788
  %v961 = vpop.f32.mrb[0].mxu0
  %v962 = vadd.f32 %v82, %v961
  %v963 = vpop.f32.mrb[0].mxu0
  %v964 = vpop.f32.mrb[0].mxu0
  %v965 = vadd.f32 %v82, %v964
  %v966 = vpop.f32.mrb[0].mxu0
  %967 = vmatprep.mubr.bf16.mxu0 0
  %968 = vmatmul.mubr.bf16.gmra.mrb[0].mxu0 %v791
  %v969 = vpop.f32.mrb[0].mxu0
  %v970 = vadd.f32 %v82, %v969
  %v971 = vpop.f32.mrb[0].mxu0
  %v972 = vpop.f32.mrb[0].mxu0
  %v973 = vadd.f32 %v82, %v972
  %v974 = vpop.f32.mrb[0].mxu0
  %975 = vmatprep.mubr.bf16.mxu0 0
  %976 = vmatmul.mubr.bf16.gmra.mrb[0].mxu0 %v794
  %v977 = vpop.f32.mrb[0].mxu0
  %v978 = vadd.f32 %v82, %v977
  %v979 = vpop.f32.mrb[0].mxu0
  %v980 = vpop.f32.mrb[0].mxu0
  %v981 = vadd.f32 %v82, %v980
  %v982 = vpop.f32.mrb[0].mxu0
  %983 = vmatprep.mubr.bf16.mxu0 0
  %984 = vmatmul.mubr.bf16.gmra.mrb[0].mxu0 %v797
  %v985 = vpop.f32.mrb[0].mxu0
  %v986 = vadd.f32 %v82, %v985
  %v987 = vpop.f32.mrb[0].mxu0
  %v988 = vpop.f32.mrb[0].mxu0
  %v989 = vadd.f32 %v82, %v988
  %v990 = vpop.f32.mrb[0].mxu0
  %991 = vmatprep.mubr.bf16.mxu0 0
  %992 = vmatmul.mubr.bf16.gmra.mrb[0].mxu0 %v800
  %v993 = vpop.f32.mrb[0].mxu0
  %v994 = vadd.f32 %v82, %v993
  %v995 = vpop.f32.mrb[0].mxu0
  %v996 = vpop.f32.mrb[0].mxu0
  %v997 = vadd.f32 %v82, %v996
  %v998 = vpop.f32.mrb[0].mxu0
  %999 = vmatprep.mubr.bf16.mxu0 0
  %1000 = vmatmul.mubr.bf16.gmra.mrb[0].mxu0 %v803
  %v1001 = vpop.f32.mrb[0].mxu0
  %v1002 = vadd.f32 %v82, %v1001
  %v1003 = vpop.f32.mrb[0].mxu0
  %v1004 = vpop.f32.mrb[0].mxu0
  %v1005 = vadd.f32 %v82, %v1004
  %v1006 = vpop.f32.mrb[0].mxu0
  %1007 = vmatprep.mubr.bf16.mxu0 0
  %1008 = vmatmul.mubr.bf16.gmra.mrb[0].mxu0 %v806
  %v1009 = vpop.f32.mrb[0].mxu0
  %v1010 = vadd.f32 %v82, %v1009
  %v1011 = vpop.f32.mrb[0].mxu0
  %v1012 = vpop.f32.mrb[0].mxu0
  %v1013 = vadd.f32 %v82, %v1012
  %v1014 = vpop.f32.mrb[0].mxu0
  %1015 = vmatprep.mubr.bf16.mxu0 0
  %1016 = vmatmul.mubr.bf16.gmra.mrb[0].mxu0 %v809
  %v1017 = vpop.f32.mrb[0].mxu0
  %v1018 = vadd.f32 %v82, %v1017
  %v1019 = vpop.f32.mrb[0].mxu0
  %v1020 = vpop.f32.mrb[0].mxu0
  %v1021 = vadd.f32 %v82, %v1020
  %v1022 = vpop.f32.mrb[0].mxu0
  %1023 = vmatprep.mubr.bf16.mxu0 0
  %1024 = vmatmul.mubr.bf16.gmra.mrb[0].mxu0 %v812
  %v1025 = vpop.f32.mrb[0].mxu0
  %v1026 = vadd.f32 %v82, %v1025
  %v1027 = vpop.f32.mrb[0].mxu0
  %v1028 = vpop.f32.mrb[0].mxu0
  %v1029 = vadd.f32 %v82, %v1028
  %v1030 = vpop.f32.mrb[0].mxu0
  %1031 = vmatprep.mubr.bf16.mxu0 0
  %1032 = vmatmul.mubr.bf16.gmra.mrb[0].mxu0 %v815
  %v1033 = vpop.f32.mrb[0].mxu0
  %v1034 = vadd.f32 %v82, %v1033
  %v1035 = vpop.f32.mrb[0].mxu0
  %v1036 = vpop.f32.mrb[0].mxu0
  %v1037 = vadd.f32 %v82, %v1036
  %v1038 = vpop.f32.mrb[0].mxu0
  %1039 = vmatprep.mubr.bf16.mxu0 0
  %1040 = vmatmul.mubr.bf16.gmra.mrb[0].mxu0 %v818
  %v1041 = vpop.f32.mrb[0].mxu0
  %v1042 = vadd.f32 %v82, %v1041
  %v1043 = vpop.f32.mrb[0].mxu0
  %v1044 = vpop.f32.mrb[0].mxu0
  %v1045 = vadd.f32 %v82, %v1044
  %v1046 = vpop.f32.mrb[0].mxu0
  %1047 = vmatprep.mubr.bf16.mxu0 0
  %1048 = vmatmul.mubr.bf16.gmra.mrb[0].mxu0 %v821
  %v1049 = vpop.f32.mrb[0].mxu0
  %v1050 = vadd.f32 %v82, %v1049
  %v1051 = vpop.f32.mrb[0].mxu0
  %v1052 = vpop.f32.mrb[0].mxu0
  %v1053 = vpop.f32.mrb[0].mxu0
  %1054 = vdwg.mxu0
  %v1055 = vtanh.pop %v858
  %v1056 = vtanh.pop %v861
  %v1057 = vtanh.pop %v866
  %v1058 = vtanh.pop %v869
  %v1059 = vtanh.pop %v874
  %v1060 = vtanh.pop %v877
  %v1061 = vtanh.pop %v882
  %v1062 = vtanh.pop %v885
  %v1063 = vtanh.pop %v890
  %v1064 = vtanh.pop %v893
  %v1065 = vtanh.pop %v898
  %v1066 = vtanh.pop %v901
  %v1067 = vtanh.pop %v906
  %v1068 = vtanh.pop %v909
  %v1069 = vtanh.pop %v914
  %v1070 = vtanh.pop %v917
  %v1071 = vtanh.pop %v922
  %v1072 = vtanh.pop %v925
  %v1073 = vtanh.pop %v930
  %v1074 = vtanh.pop %v933
  %v1075 = vtanh.pop %v938
  %v1076 = vtanh.pop %v941
  %v1077 = vtanh.pop %v946
  %v1078 = vtanh.pop %v949
  %v1079 = vtanh.pop %v954
  %v1080 = vtanh.pop %v957
  %v1081 = vtanh.pop %v962
  %v1082 = vtanh.pop %v965
  %v1083 = vtanh.pop %v970
  %v1084 = vtanh.pop %v973
  %v1085 = vtanh.pop %v978
  %v1086 = vtanh.pop %v981
  %v1087 = vtanh.pop %v986
  %v1088 = vtanh.pop %v989
  %v1089 = vtanh.pop %v994
  %v1090 = vtanh.pop %v997
  %v1091 = vtanh.pop %v1002
  %v1092 = vtanh.pop %v1005
  %v1093 = vtanh.pop %v1010
  %v1094 = vtanh.pop %v1013
  %v1095 = vtanh.pop %v1018
  %v1096 = vtanh.pop %v1021
  %v1097 = vtanh.pop %v1026
  %v1098 = vtanh.pop %v1029
  %v1099 = vtanh.pop %v1034
  %v1100 = vtanh.pop %v1037
  %v1101 = vtanh.pop %v1042
  %v1102 = vtanh.pop %v1045
  %v1103 = vtanh.pop %v1050
  %v1104 = vadd.f32 %v527, %v1055
  %v1105 = vadd.f32 %v528, %v1056
  %v1106 = vadd.f32 %v529, %v1057
  %v1107 = vadd.f32 %v530, %v1058
  %v1108 = vadd.f32 %v531, %v1059
  %v1109 = vadd.f32 %v532, %v1060
  %v1110 = vadd.f32 %v533, %v1061
  %v1111 = vadd.f32 %v534, %v1062
  %v1112 = vadd.f32 %v535, %v1063
  %v1113 = vadd.f32 %v536, %v1064
  %v1114 = vadd.f32 %v537, %v1065
  %v1115 = vadd.f32 %v538, %v1066
  %v1116 = vadd.f32 %v539, %v1067
  %v1117 = vadd.f32 %v540, %v1068
  %v1118 = vadd.f32 %v541, %v1069
  %v1119 = vadd.f32 %v542, %v1070
  %v1120 = vadd.f32 %v543, %v1071
  %v1121 = vadd.f32 %v544, %v1072
  %v1122 = vadd.f32 %v545, %v1073
  %v1123 = vadd.f32 %v546, %v1074
  %v1124 = vadd.f32 %v547, %v1075
  %v1125 = vadd.f32 %v548, %v1076
  %v1126 = vadd.f32 %v549, %v1077
  %v1127 = vadd.f32 %v550, %v1078
  %v1128 = vadd.f32 %v551, %v1079
  %v1129 = vadd.f32 %v552, %v1080
  %v1130 = vadd.f32 %v553, %v1081
  %v1131 = vadd.f32 %v554, %v1082
  %v1132 = vadd.f32 %v555, %v1083
  %v1133 = vadd.f32 %v556, %v1084
  %v1134 = vadd.f32 %v557, %v1085
  %v1135 = vadd.f32 %v558, %v1086
  %v1136 = vadd.f32 %v559, %v1087
  %v1137 = vadd.f32 %v560, %v1088
  %v1138 = vadd.f32 %v561, %v1089
  %v1139 = vadd.f32 %v562, %v1090
  %v1140 = vadd.f32 %v563, %v1091
  %v1141 = vadd.f32 %v564, %v1092
  %v1142 = vadd.f32 %v565, %v1093
  %v1143 = vadd.f32 %v566, %v1094
  %v1144 = vadd.f32 %v567, %v1095
  %v1145 = vadd.f32 %v568, %v1096
  %v1146 = vadd.f32 %v569, %v1097
  %v1147 = vadd.f32 %v570, %v1098
  %v1148 = vadd.f32 %v571, %v1099
  %v1149 = vadd.f32 %v572, %v1100
  %v1150 = vadd.f32 %v573, %v1101
  %v1151 = vadd.f32 %v574, %v1102
  %v1152 = vadd.f32 %v575, %v1103
  %v1153 = vld [vmem:[%s2] sm:$0xf]
  %v1154 = vld [vmem:[%s2 + $0x4] sm:$0xf]
  %v1155 = vld [vmem:[%s2 + $0x8] sm:$0xf]
  %v1156 = vld [vmem:[%s2 + $0xc] sm:$0xf]
  %v1157 = vld [vmem:[%s2 + $0x10] sm:$0xf]
  %v1158 = vld [vmem:[%s2 + $0x14] sm:$0xf]
  %v1159 = vld [vmem:[%s2 + $0x18] sm:$0xf]
  %v1160 = vld [vmem:[%s2 + $0x1c] sm:$0xf]
  %v1161 = vld [vmem:[%s2 + $0x20] sm:$0xf]
  %v1162 = vld [vmem:[%s2 + $0x24] sm:$0xf]
  %v1163 = vld [vmem:[%s2 + $0x28] sm:$0xf]
  %v1164 = vld [vmem:[%s2 + $0x2c] sm:$0xf]
  %v1165 = vld [vmem:[%s2 + $0x30] sm:$0xf]
  %v1166 = vld [vmem:[%s2 + $0x34] sm:$0xf]
  %v1167 = vld [vmem:[%s2 + $0x38] sm:$0xf]
  %v1168 = vld [vmem:[%s2 + $0x3c] sm:$0xf]
  %v1169 = vld [vmem:[%s2 + $0x40] sm:$0xf]
  %v1170 = vld [vmem:[%s2 + $0x44] sm:$0xf]
  %v1171 = vld [vmem:[%s2 + $0x48] sm:$0xf]
  %v1172 = vld [vmem:[%s2 + $0x4c] sm:$0xf]
  %v1173 = vld [vmem:[%s2 + $0x50] sm:$0xf]
  %v1174 = vld [vmem:[%s2 + $0x54] sm:$0xf]
  %v1175 = vld [vmem:[%s2 + $0x58] sm:$0xf]
  %v1176 = vld [vmem:[%s2 + $0x5c] sm:$0xf]
  %v1177 = vld [vmem:[%s2 + $0x60] sm:$0xf]
  %v1178 = vld [vmem:[%s2 + $0x64] sm:$0xf]
  %v1179 = vld [vmem:[%s2 + $0x68] sm:$0xf]
  %v1180 = vld [vmem:[%s2 + $0x6c] sm:$0xf]
  %v1181 = vld [vmem:[%s2 + $0x70] sm:$0xf]
  %v1182 = vld [vmem:[%s2 + $0x74] sm:$0xf]
  %v1183 = vld [vmem:[%s2 + $0x78] sm:$0xf]
  %v1184 = vld [vmem:[%s2 + $0x7c] sm:$0xf]
  %v1185 = vld [vmem:[%s2 + $0x80] sm:$0xf]
  %v1186 = vld [vmem:[%s2 + $0x84] sm:$0xf]
  %v1187 = vld [vmem:[%s2 + $0x88] sm:$0xf]
  %v1188 = vld [vmem:[%s2 + $0x8c] sm:$0xf]
  %v1189 = vld [vmem:[%s2 + $0x90] sm:$0xf]
  %v1190 = vld [vmem:[%s2 + $0x94] sm:$0xf]
  %v1191 = vld [vmem:[%s2 + $0x98] sm:$0xf]
  %v1192 = vld [vmem:[%s2 + $0x9c] sm:$0xf]
  %v1193 = vld [vmem:[%s2 + $0xa0] sm:$0xf]
  %v1194 = vld [vmem:[%s2 + $0xa4] sm:$0xf]
  %v1195 = vld [vmem:[%s2 + $0xa8] sm:$0xf]
  %v1196 = vld [vmem:[%s2 + $0xac] sm:$0xf]
  %v1197 = vld [vmem:[%s2 + $0xb0] sm:$0xf]
  %v1198 = vld [vmem:[%s2 + $0xb4] sm:$0xf]
  %v1199 = vld [vmem:[%s2 + $0xb8] sm:$0xf]
  %v1200 = vld [vmem:[%s2 + $0xbc] sm:$0xf]
  %v1201 = vld [vmem:[%s2 + $0xc0] sm:$0xf]
  %v1251 = vunpack.c.l.b16 %v1153
  %v1252 = vunpack.c.l.b16 %v1154
  %v1253 = vunpack.c.l.b16 %v1155
  %v1254 = vunpack.c.l.b16 %v1156
  %v1255 = vunpack.c.l.b16 %v1157
  %v1256 = vunpack.c.l.b16 %v1158
  %v1257 = vunpack.c.l.b16 %v1159
  %v1258 = vunpack.c.l.b16 %v1160
  %v1259 = vunpack.c.l.b16 %v1161
  %v1260 = vunpack.c.l.b16 %v1162
  %v1261 = vunpack.c.l.b16 %v1163
  %v1262 = vunpack.c.l.b16 %v1164
  %v1263 = vunpack.c.l.b16 %v1165
  %v1264 = vunpack.c.l.b16 %v1166
  %v1265 = vunpack.c.l.b16 %v1167
  %v1266 = vunpack.c.l.b16 %v1168
  %v1267 = vunpack.c.l.b16 %v1169
  %v1268 = vunpack.c.l.b16 %v1170
  %v1269 = vunpack.c.l.b16 %v1171
  %v1270 = vunpack.c.l.b16 %v1172
  %v1271 = vunpack.c.l.b16 %v1173
  %v1272 = vunpack.c.l.b16 %v1174
  %v1273 = vunpack.c.l.b16 %v1175
  %v1274 = vunpack.c.l.b16 %v1176
  %v1275 = vunpack.c.l.b16 %v1177
  %v1276 = vunpack.c.l.b16 %v1178
  %v1277 = vunpack.c.l.b16 %v1179
  %v1278 = vunpack.c.l.b16 %v1180
  %v1279 = vunpack.c.l.b16 %v1181
  %v1280 = vunpack.c.l.b16 %v1182
  %v1281 = vunpack.c.l.b16 %v1183
  %v1282 = vunpack.c.l.b16 %v1184
  %v1283 = vunpack.c.l.b16 %v1185
  %v1284 = vunpack.c.l.b16 %v1186
  %v1285 = vunpack.c.l.b16 %v1187
  %v1286 = vunpack.c.l.b16 %v1188
  %v1287 = vunpack.c.l.b16 %v1189
  %v1288 = vunpack.c.l.b16 %v1190
  %v1289 = vunpack.c.l.b16 %v1191
  %v1290 = vunpack.c.l.b16 %v1192
  %v1291 = vunpack.c.l.b16 %v1193
  %v1292 = vunpack.c.l.b16 %v1194
  %v1293 = vunpack.c.l.b16 %v1195
  %v1294 = vunpack.c.l.b16 %v1196
  %v1295 = vunpack.c.l.b16 %v1197
  %v1296 = vunpack.c.l.b16 %v1198
  %v1297 = vunpack.c.l.b16 %v1199
  %v1298 = vunpack.c.l.b16 %v1200
  %v1299 = vunpack.c.l.b16 %v1201
  %v1300 = vpack.c.b16 %v1252, %v1251
  %v1301 = vpack.c.b16 %v1254, %v1253
  %v1302 = vpack.c.b16 %v1256, %v1255
  %v1303 = vpack.c.b16 %v1258, %v1257
  %v1304 = vpack.c.b16 %v1260, %v1259
  %v1305 = vpack.c.b16 %v1262, %v1261
  %v1306 = vpack.c.b16 %v1264, %v1263
  %v1307 = vpack.c.b16 %v1266, %v1265
  %v1308 = vpack.c.b16 %v1268, %v1267
  %v1309 = vpack.c.b16 %v1270, %v1269
  %v1310 = vpack.c.b16 %v1272, %v1271
  %v1311 = vpack.c.b16 %v1274, %v1273
  %v1312 = vpack.c.b16 %v1276, %v1275
  %v1313 = vpack.c.b16 %v1278, %v1277
  %v1314 = vpack.c.b16 %v1280, %v1279
  %v1315 = vpack.c.b16 %v1282, %v1281
  %v1316 = vpack.c.b16 %v1284, %v1283
  %v1317 = vpack.c.b16 %v1286, %v1285
  %v1318 = vpack.c.b16 %v1288, %v1287
  %v1319 = vpack.c.b16 %v1290, %v1289
  %v1320 = vpack.c.b16 %v1292, %v1291
  %v1321 = vpack.c.b16 %v1294, %v1293
  %v1322 = vpack.c.b16 %v1296, %v1295
  %v1323 = vpack.c.b16 %v1298, %v1297
  %v1324 = vpack.c.b16 %v1299, %v1299
  %v1326 = vsel %vm219, %v1300, 0
  %v1329 = vsel %vm219, %v1301, 0
  %v1332 = vsel %vm219, %v1302, 0
  %v1335 = vsel %vm219, %v1303, 0
  %v1338 = vsel %vm219, %v1304, 0
  %v1341 = vsel %vm219, %v1305, 0
  %v1344 = vsel %vm219, %v1306, 0
  %v1347 = vsel %vm219, %v1307, 0
  %v1350 = vsel %vm219, %v1308, 0
  %v1353 = vsel %vm219, %v1309, 0
  %v1356 = vsel %vm219, %v1310, 0
  %v1359 = vsel %vm219, %v1311, 0
  %v1362 = vsel %vm219, %v1312, 0
  %v1365 = vsel %vm219, %v1313, 0
  %v1368 = vsel %vm219, %v1314, 0
  %v1371 = vsel %vm219, %v1315, 0
  %v1374 = vsel %vm219, %v1316, 0
  %v1377 = vsel %vm219, %v1317, 0
  %v1380 = vsel %vm219, %v1318, 0
  %v1383 = vsel %vm219, %v1319, 0
  %v1386 = vsel %vm219, %v1320, 0
  %v1389 = vsel %vm219, %v1321, 0
  %v1392 = vsel %vm219, %v1322, 0
  %v1395 = vsel %vm219, %v1323, 0
  %v1398 = vsel %vm219, %v1324, 0
  %1400 = vmatprep.subr.bf16.mxu0 0
  %1401 = vmatpush1.bf16.msra.mxu0 %v215
  %1402 = vmatprep.subr.bf16.mxu0 0
  %1403 = vmatpush1.bf16.msra.mxu0 %v216
  %1404 = vmatprep.subr.bf16.mxu0 0
  %1405 = vmatpush1.bf16.msra.mxu0 0
  %1406 = vmatprep.subr.bf16.mxu0 0
  %1407 = vmatpush1.bf16.msra.mxu0 0
  %1408 = vmatprep.subr.bf16.mxu0 0
  %1409 = vmatpush1.bf16.msra.mxu0 0
  %1410 = vmatprep.subr.bf16.mxu0 0
  %1411 = vmatpush1.bf16.msra.mxu0 0
  %1412 = vmatprep.subr.bf16.mxu0 0
  %1413 = vmatpush1.bf16.msra.mxu0 0
  %1414 = vmatprep.subr.bf16.mxu0 0
  %1415 = vmatpush1.bf16.msra.mxu0 0
  %1416 = vmatprep.subr.bf16.mxu0 0
  %1417 = vmatpush1.bf16.msra.mxu0 0
  %1418 = vmatprep.subr.bf16.mxu0 0
  %1419 = vmatpush1.bf16.msra.mxu0 0
  %1420 = vmatprep.subr.bf16.mxu0 0
  %1421 = vmatpush1.bf16.msra.mxu0 0
  %1422 = vmatprep.subr.bf16.mxu0 0
  %1423 = vmatpush1.bf16.msra.mxu0 0
  %1424 = vmatprep.subr.bf16.mxu0 0
  %1425 = vmatpush1.bf16.msra.mxu0 0
  %1426 = vmatprep.subr.bf16.mxu0 0
  %1427 = vmatpush1.bf16.msra.mxu0 0
  %1428 = vmatprep.subr.bf16.mxu0 0
  %1429 = vmatpush1.bf16.msra.mxu0 0
  %1430 = vmatprep.subr.bf16.mxu0 0
  %1431 = vmatpush1.bf16.msra.mxu0 0
  %1432 = vmatprep.mubr.bf16.mxu0 0
  %1433 = vmatmul.mubr.bf16.gmra.mrb[0].mxu0 %v1326
  %v1434 = vpop.f32.mrb[0].mxu0
  %v1435 = vadd.f32 %v82, %v1434
  %v1436 = vpop.f32.mrb[0].mxu0
  %v1437 = vpop.f32.mrb[0].mxu0
  %v1438 = vadd.f32 %v82, %v1437
  %v1439 = vpop.f32.mrb[0].mxu0
  %1440 = vmatprep.mubr.bf16.mxu0 0
  %1441 = vmatmul.mubr.bf16.gmra.mrb[0].mxu0 %v1329
  %v1442 = vpop.f32.mrb[0].mxu0
  %v1443 = vadd.f32 %v82, %v1442
  %v1444 = vpop.f32.mrb[0].mxu0
  %v1445 = vpop.f32.mrb[0].mxu0
  %v1446 = vadd.f32 %v82, %v1445
  %v1447 = vpop.f32.mrb[0].mxu0
  %1448 = vmatprep.mubr.bf16.mxu0 0
  %1449 = vmatmul.mubr.bf16.gmra.mrb[0].mxu0 %v1332
  %v1450 = vpop.f32.mrb[0].mxu0
  %v1451 = vadd.f32 %v82, %v1450
  %v1452 = vpop.f32.mrb[0].mxu0
  %v1453 = vpop.f32.mrb[0].mxu0
  %v1454 = vadd.f32 %v82, %v1453
  %v1455 = vpop.f32.mrb[0].mxu0
  %1456 = vmatprep.mubr.bf16.mxu0 0
  %1457 = vmatmul.mubr.bf16.gmra.mrb[0].mxu0 %v1335
  %v1458 = vpop.f32.mrb[0].mxu0
  %v1459 = vadd.f32 %v82, %v1458
  %v1460 = vpop.f32.mrb[0].mxu0
  %v1461 = vpop.f32.mrb[0].mxu0
  %v1462 = vadd.f32 %v82, %v1461
  %v1463 = vpop.f32.mrb[0].mxu0
  %1464 = vmatprep.mubr.bf16.mxu0 0
  %1465 = vmatmul.mubr.bf16.gmra.mrb[0].mxu0 %v1338
  %v1466 = vpop.f32.mrb[0].mxu0
  %v1467 = vadd.f32 %v82, %v1466
  %v1468 = vpop.f32.mrb[0].mxu0
  %v1469 = vpop.f32.mrb[0].mxu0
  %v1470 = vadd.f32 %v82, %v1469
  %v1471 = vpop.f32.mrb[0].mxu0
  %1472 = vmatprep.mubr.bf16.mxu0 0
  %1473 = vmatmul.mubr.bf16.gmra.mrb[0].mxu0 %v1341
  %v1474 = vpop.f32.mrb[0].mxu0
  %v1475 = vadd.f32 %v82, %v1474
  %v1476 = vpop.f32.mrb[0].mxu0
  %v1477 = vpop.f32.mrb[0].mxu0
  %v1478 = vadd.f32 %v82, %v1477
  %v1479 = vpop.f32.mrb[0].mxu0
  %1480 = vmatprep.mubr.bf16.mxu0 0
  %1481 = vmatmul.mubr.bf16.gmra.mrb[0].mxu0 %v1344
  %v1482 = vpop.f32.mrb[0].mxu0
  %v1483 = vadd.f32 %v82, %v1482
  %v1484 = vpop.f32.mrb[0].mxu0
  %v1485 = vpop.f32.mrb[0].mxu0
  %v1486 = vadd.f32 %v82, %v1485
  %v1487 = vpop.f32.mrb[0].mxu0
  %1488 = vmatprep.mubr.bf16.mxu0 0
  %1489 = vmatmul.mubr.bf16.gmra.mrb[0].mxu0 %v1347
  %v1490 = vpop.f32.mrb[0].mxu0
  %v1491 = vadd.f32 %v82, %v1490
  %v1492 = vpop.f32.mrb[0].mxu0
  %v1493 = vpop.f32.mrb[0].mxu0
  %v1494 = vadd.f32 %v82, %v1493
  %v1495 = vpop.f32.mrb[0].mxu0
  %1496 = vmatprep.mubr.bf16.mxu0 0
  %1497 = vmatmul.mubr.bf16.gmra.mrb[0].mxu0 %v1350
  %v1498 = vpop.f32.mrb[0].mxu0
  %v1499 = vadd.f32 %v82, %v1498
  %v1500 = vpop.f32.mrb[0].mxu0
  %v1501 = vpop.f32.mrb[0].mxu0
  %v1502 = vadd.f32 %v82, %v1501
  %v1503 = vpop.f32.mrb[0].mxu0
  %1504 = vmatprep.mubr.bf16.mxu0 0
  %1505 = vmatmul.mubr.bf16.gmra.mrb[0].mxu0 %v1353
  %v1506 = vpop.f32.mrb[0].mxu0
  %v1507 = vadd.f32 %v82, %v1506
  %v1508 = vpop.f32.mrb[0].mxu0
  %v1509 = vpop.f32.mrb[0].mxu0
  %v1510 = vadd.f32 %v82, %v1509
  %v1511 = vpop.f32.mrb[0].mxu0
  %1512 = vmatprep.mubr.bf16.mxu0 0
  %1513 = vmatmul.mubr.bf16.gmra.mrb[0].mxu0 %v1356
  %v1514 = vpop.f32.mrb[0].mxu0
  %v1515 = vadd.f32 %v82, %v1514
  %v1516 = vpop.f32.mrb[0].mxu0
  %v1517 = vpop.f32.mrb[0].mxu0
  %v1518 = vadd.f32 %v82, %v1517
  %v1519 = vpop.f32.mrb[0].mxu0
  %1520 = vmatprep.mubr.bf16.mxu0 0
  %1521 = vmatmul.mubr.bf16.gmra.mrb[0].mxu0 %v1359
  %v1522 = vpop.f32.mrb[0].mxu0
  %v1523 = vadd.f32 %v82, %v1522
  %v1524 = vpop.f32.mrb[0].mxu0
  %v1525 = vpop.f32.mrb[0].mxu0
  %v1526 = vadd.f32 %v82, %v1525
  %v1527 = vpop.f32.mrb[0].mxu0
  %1528 = vmatprep.mubr.bf16.mxu0 0
  %1529 = vmatmul.mubr.bf16.gmra.mrb[0].mxu0 %v1362
  %v1530 = vpop.f32.mrb[0].mxu0
  %v1531 = vadd.f32 %v82, %v1530
  %v1532 = vpop.f32.mrb[0].mxu0
  %v1533 = vpop.f32.mrb[0].mxu0
  %v1534 = vadd.f32 %v82, %v1533
  %v1535 = vpop.f32.mrb[0].mxu0
  %1536 = vmatprep.mubr.bf16.mxu0 0
  %1537 = vmatmul.mubr.bf16.gmra.mrb[0].mxu0 %v1365
  %v1538 = vpop.f32.mrb[0].mxu0
  %v1539 = vadd.f32 %v82, %v1538
  %v1540 = vpop.f32.mrb[0].mxu0
  %v1541 = vpop.f32.mrb[0].mxu0
  %v1542 = vadd.f32 %v82, %v1541
  %v1543 = vpop.f32.mrb[0].mxu0
  %1544 = vmatprep.mubr.bf16.mxu0 0
  %1545 = vmatmul.mubr.bf16.gmra.mrb[0].mxu0 %v1368
  %v1546 = vpop.f32.mrb[0].mxu0
  %v1547 = vadd.f32 %v82, %v1546
  %v1548 = vpop.f32.mrb[0].mxu0
  %v1549 = vpop.f32.mrb[0].mxu0
  %v1550 = vadd.f32 %v82, %v1549
  %v1551 = vpop.f32.mrb[0].mxu0
  %1552 = vmatprep.mubr.bf16.mxu0 0
  %1553 = vmatmul.mubr.bf16.gmra.mrb[0].mxu0 %v1371
  %v1554 = vpop.f32.mrb[0].mxu0
  %v1555 = vadd.f32 %v82, %v1554
  %v1556 = vpop.f32.mrb[0].mxu0
  %v1557 = vpop.f32.mrb[0].mxu0
  %v1558 = vadd.f32 %v82, %v1557
  %v1559 = vpop.f32.mrb[0].mxu0
  %1560 = vmatprep.mubr.bf16.mxu0 0
  %1561 = vmatmul.mubr.bf16.gmra.mrb[0].mxu0 %v1374
  %v1562 = vpop.f32.mrb[0].mxu0
  %v1563 = vadd.f32 %v82, %v1562
  %v1564 = vpop.f32.mrb[0].mxu0
  %v1565 = vpop.f32.mrb[0].mxu0
  %v1566 = vadd.f32 %v82, %v1565
  %v1567 = vpop.f32.mrb[0].mxu0
  %1568 = vmatprep.mubr.bf16.mxu0 0
  %1569 = vmatmul.mubr.bf16.gmra.mrb[0].mxu0 %v1377
  %v1570 = vpop.f32.mrb[0].mxu0
  %v1571 = vadd.f32 %v82, %v1570
  %v1572 = vpop.f32.mrb[0].mxu0
  %v1573 = vpop.f32.mrb[0].mxu0
  %v1574 = vadd.f32 %v82, %v1573
  %v1575 = vpop.f32.mrb[0].mxu0
  %1576 = vmatprep.mubr.bf16.mxu0 0
  %1577 = vmatmul.mubr.bf16.gmra.mrb[0].mxu0 %v1380
  %v1578 = vpop.f32.mrb[0].mxu0
  %v1579 = vadd.f32 %v82, %v1578
  %v1580 = vpop.f32.mrb[0].mxu0
  %v1581 = vpop.f32.mrb[0].mxu0
  %v1582 = vadd.f32 %v82, %v1581
  %v1583 = vpop.f32.mrb[0].mxu0
  %1584 = vmatprep.mubr.bf16.mxu0 0
  %1585 = vmatmul.mubr.bf16.gmra.mrb[0].mxu0 %v1383
  %v1586 = vpop.f32.mrb[0].mxu0
  %v1587 = vadd.f32 %v82, %v1586
  %v1588 = vpop.f32.mrb[0].mxu0
  %v1589 = vpop.f32.mrb[0].mxu0
  %v1590 = vadd.f32 %v82, %v1589
  %v1591 = vpop.f32.mrb[0].mxu0
  %1592 = vmatprep.mubr.bf16.mxu0 0
  %1593 = vmatmul.mubr.bf16.gmra.mrb[0].mxu0 %v1386
  %v1594 = vpop.f32.mrb[0].mxu0
  %v1595 = vadd.f32 %v82, %v1594
  %v1596 = vpop.f32.mrb[0].mxu0
  %v1597 = vpop.f32.mrb[0].mxu0
  %v1598 = vadd.f32 %v82, %v1597
  %v1599 = vpop.f32.mrb[0].mxu0
  %1600 = vmatprep.mubr.bf16.mxu0 0
  %1601 = vmatmul.mubr.bf16.gmra.mrb[0].mxu0 %v1389
  %v1602 = vpop.f32.mrb[0].mxu0
  %v1603 = vadd.f32 %v82, %v1602
  %v1604 = vpop.f32.mrb[0].mxu0
  %v1605 = vpop.f32.mrb[0].mxu0
  %v1606 = vadd.f32 %v82, %v1605
  %v1607 = vpop.f32.mrb[0].mxu0
  %1608 = vmatprep.mubr.bf16.mxu0 0
  %1609 = vmatmul.mubr.bf16.gmra.mrb[0].mxu0 %v1392
  %v1610 = vpop.f32.mrb[0].mxu0
  %v1611 = vadd.f32 %v82, %v1610
  %v1612 = vpop.f32.mrb[0].mxu0
  %v1613 = vpop.f32.mrb[0].mxu0
  %v1614 = vadd.f32 %v82, %v1613
  %v1615 = vpop.f32.mrb[0].mxu0
  %1616 = vmatprep.mubr.bf16.mxu0 0
  %1617 = vmatmul.mubr.bf16.gmra.mrb[0].mxu0 %v1395
  %v1618 = vpop.f32.mrb[0].mxu0
  %v1619 = vadd.f32 %v82, %v1618
  %v1620 = vpop.f32.mrb[0].mxu0
  %v1621 = vpop.f32.mrb[0].mxu0
  %v1622 = vadd.f32 %v82, %v1621
  %v1623 = vpop.f32.mrb[0].mxu0
  %1624 = vmatprep.mubr.bf16.mxu0 0
  %1625 = vmatmul.mubr.bf16.gmra.mrb[0].mxu0 %v1398
  %v1626 = vpop.f32.mrb[0].mxu0
  %v1627 = vadd.f32 %v82, %v1626
  %v1628 = vpop.f32.mrb[0].mxu0
  %v1629 = vpop.f32.mrb[0].mxu0
  %v1630 = vpop.f32.mrb[0].mxu0
  %1631 = vdwg.mxu0
  %v1632 = vtanh.pop %v1435
  %v1633 = vtanh.pop %v1438
  %v1634 = vtanh.pop %v1443
  %v1635 = vtanh.pop %v1446
  %v1636 = vtanh.pop %v1451
  %v1637 = vtanh.pop %v1454
  %v1638 = vtanh.pop %v1459
  %v1639 = vtanh.pop %v1462
  %v1640 = vtanh.pop %v1467
  %v1641 = vtanh.pop %v1470
  %v1642 = vtanh.pop %v1475
  %v1643 = vtanh.pop %v1478
  %v1644 = vtanh.pop %v1483
  %v1645 = vtanh.pop %v1486
  %v1646 = vtanh.pop %v1491
  %v1647 = vtanh.pop %v1494
  %v1648 = vtanh.pop %v1499
  %v1649 = vtanh.pop %v1502
  %v1650 = vtanh.pop %v1507
  %v1651 = vtanh.pop %v1510
  %v1652 = vtanh.pop %v1515
  %v1653 = vtanh.pop %v1518
  %v1654 = vtanh.pop %v1523
  %v1655 = vtanh.pop %v1526
  %v1656 = vtanh.pop %v1531
  %v1657 = vtanh.pop %v1534
  %v1658 = vtanh.pop %v1539
  %v1659 = vtanh.pop %v1542
  %v1660 = vtanh.pop %v1547
  %v1661 = vtanh.pop %v1550
  %v1662 = vtanh.pop %v1555
  %v1663 = vtanh.pop %v1558
  %v1664 = vtanh.pop %v1563
  %v1665 = vtanh.pop %v1566
  %v1666 = vtanh.pop %v1571
  %v1667 = vtanh.pop %v1574
  %v1668 = vtanh.pop %v1579
  %v1669 = vtanh.pop %v1582
  %v1670 = vtanh.pop %v1587
  %v1671 = vtanh.pop %v1590
  %v1672 = vtanh.pop %v1595
  %v1673 = vtanh.pop %v1598
  %v1674 = vtanh.pop %v1603
  %v1675 = vtanh.pop %v1606
  %v1676 = vtanh.pop %v1611
  %v1677 = vtanh.pop %v1614
  %v1678 = vtanh.pop %v1619
  %v1679 = vtanh.pop %v1622
  %v1680 = vtanh.pop %v1627
  %v1681 = vadd.f32 %v1104, %v1632
  %v1682 = vadd.f32 %v1105, %v1633
  %v1683 = vadd.f32 %v1106, %v1634
  %v1684 = vadd.f32 %v1107, %v1635
  %v1685 = vadd.f32 %v1108, %v1636
  %v1686 = vadd.f32 %v1109, %v1637
  %v1687 = vadd.f32 %v1110, %v1638
  %v1688 = vadd.f32 %v1111, %v1639
  %v1689 = vadd.f32 %v1112, %v1640
  %v1690 = vadd.f32 %v1113, %v1641
  %v1691 = vadd.f32 %v1114, %v1642
  %v1692 = vadd.f32 %v1115, %v1643
  %v1693 = vadd.f32 %v1116, %v1644
  %v1694 = vadd.f32 %v1117, %v1645
  %v1695 = vadd.f32 %v1118, %v1646
  %v1696 = vadd.f32 %v1119, %v1647
  %v1697 = vadd.f32 %v1120, %v1648
  %v1698 = vadd.f32 %v1121, %v1649
  %v1699 = vadd.f32 %v1122, %v1650
  %v1700 = vadd.f32 %v1123, %v1651
  %v1701 = vadd.f32 %v1124, %v1652
  %v1702 = vadd.f32 %v1125, %v1653
  %v1703 = vadd.f32 %v1126, %v1654
  %v1704 = vadd.f32 %v1127, %v1655
  %v1705 = vadd.f32 %v1128, %v1656
  %v1706 = vadd.f32 %v1129, %v1657
  %v1707 = vadd.f32 %v1130, %v1658
  %v1708 = vadd.f32 %v1131, %v1659
  %v1709 = vadd.f32 %v1132, %v1660
  %v1710 = vadd.f32 %v1133, %v1661
  %v1711 = vadd.f32 %v1134, %v1662
  %v1712 = vadd.f32 %v1135, %v1663
  %v1713 = vadd.f32 %v1136, %v1664
  %v1714 = vadd.f32 %v1137, %v1665
  %v1715 = vadd.f32 %v1138, %v1666
  %v1716 = vadd.f32 %v1139, %v1667
  %v1717 = vadd.f32 %v1140, %v1668
  %v1718 = vadd.f32 %v1141, %v1669
  %v1719 = vadd.f32 %v1142, %v1670
  %v1720 = vadd.f32 %v1143, %v1671
  %v1721 = vadd.f32 %v1144, %v1672
  %v1722 = vadd.f32 %v1145, %v1673
  %v1723 = vadd.f32 %v1146, %v1674
  %v1724 = vadd.f32 %v1147, %v1675
  %v1725 = vadd.f32 %v1148, %v1676
  %v1726 = vadd.f32 %v1149, %v1677
  %v1727 = vadd.f32 %v1150, %v1678
  %v1728 = vadd.f32 %v1151, %v1679
  %v1729 = vadd.f32 %v1152, %v1680
  %v1730 = vld [vmem:[%s3] sm:$0xf]
  %v1731 = vld [vmem:[%s3 + $0x4] sm:$0xf]
  %v1732 = vld [vmem:[%s3 + $0x8] sm:$0xf]
  %v1733 = vld [vmem:[%s3 + $0xc] sm:$0xf]
  %v1734 = vld [vmem:[%s3 + $0x10] sm:$0xf]
  %v1735 = vld [vmem:[%s3 + $0x14] sm:$0xf]
  %v1736 = vld [vmem:[%s3 + $0x18] sm:$0xf]
  %v1737 = vld [vmem:[%s3 + $0x1c] sm:$0xf]
  %v1738 = vld [vmem:[%s3 + $0x20] sm:$0xf]
  %v1739 = vld [vmem:[%s3 + $0x24] sm:$0xf]
  %v1740 = vld [vmem:[%s3 + $0x28] sm:$0xf]
  %v1741 = vld [vmem:[%s3 + $0x2c] sm:$0xf]
  %v1742 = vld [vmem:[%s3 + $0x30] sm:$0xf]
  %v1743 = vld [vmem:[%s3 + $0x34] sm:$0xf]
  %v1744 = vld [vmem:[%s3 + $0x38] sm:$0xf]
  %v1745 = vld [vmem:[%s3 + $0x3c] sm:$0xf]
  %v1746 = vld [vmem:[%s3 + $0x40] sm:$0xf]
  %v1747 = vld [vmem:[%s3 + $0x44] sm:$0xf]
  %v1748 = vld [vmem:[%s3 + $0x48] sm:$0xf]
  %v1749 = vld [vmem:[%s3 + $0x4c] sm:$0xf]
  %v1750 = vld [vmem:[%s3 + $0x50] sm:$0xf]
  %v1751 = vld [vmem:[%s3 + $0x54] sm:$0xf]
  %v1752 = vld [vmem:[%s3 + $0x58] sm:$0xf]
  %v1753 = vld [vmem:[%s3 + $0x5c] sm:$0xf]
  %v1754 = vld [vmem:[%s3 + $0x60] sm:$0xf]
  %v1755 = vld [vmem:[%s3 + $0x64] sm:$0xf]
  %v1756 = vld [vmem:[%s3 + $0x68] sm:$0xf]
  %v1757 = vld [vmem:[%s3 + $0x6c] sm:$0xf]
  %v1758 = vld [vmem:[%s3 + $0x70] sm:$0xf]
  %v1759 = vld [vmem:[%s3 + $0x74] sm:$0xf]
  %v1760 = vld [vmem:[%s3 + $0x78] sm:$0xf]
  %v1761 = vld [vmem:[%s3 + $0x7c] sm:$0xf]
  %v1762 = vld [vmem:[%s3 + $0x80] sm:$0xf]
  %v1763 = vld [vmem:[%s3 + $0x84] sm:$0xf]
  %v1764 = vld [vmem:[%s3 + $0x88] sm:$0xf]
  %v1765 = vld [vmem:[%s3 + $0x8c] sm:$0xf]
  %v1766 = vld [vmem:[%s3 + $0x90] sm:$0xf]
  %v1767 = vld [vmem:[%s3 + $0x94] sm:$0xf]
  %v1768 = vld [vmem:[%s3 + $0x98] sm:$0xf]
  %v1769 = vld [vmem:[%s3 + $0x9c] sm:$0xf]
  %v1770 = vld [vmem:[%s3 + $0xa0] sm:$0xf]
  %v1771 = vld [vmem:[%s3 + $0xa4] sm:$0xf]
  %v1772 = vld [vmem:[%s3 + $0xa8] sm:$0xf]
  %v1773 = vld [vmem:[%s3 + $0xac] sm:$0xf]
  %v1774 = vld [vmem:[%s3 + $0xb0] sm:$0xf]
  %v1775 = vld [vmem:[%s3 + $0xb4] sm:$0xf]
  %v1776 = vld [vmem:[%s3 + $0xb8] sm:$0xf]
  %v1777 = vld [vmem:[%s3 + $0xbc] sm:$0xf]
  %v1778 = vld [vmem:[%s3 + $0xc0] sm:$0xf]
  %v1828 = vunpack.c.l.b16 %v1730
  %v1829 = vunpack.c.l.b16 %v1731
  %v1830 = vunpack.c.l.b16 %v1732
  %v1831 = vunpack.c.l.b16 %v1733
  %v1832 = vunpack.c.l.b16 %v1734
  %v1833 = vunpack.c.l.b16 %v1735
  %v1834 = vunpack.c.l.b16 %v1736
  %v1835 = vunpack.c.l.b16 %v1737
  %v1836 = vunpack.c.l.b16 %v1738
  %v1837 = vunpack.c.l.b16 %v1739
  %v1838 = vunpack.c.l.b16 %v1740
  %v1839 = vunpack.c.l.b16 %v1741
  %v1840 = vunpack.c.l.b16 %v1742
  %v1841 = vunpack.c.l.b16 %v1743
  %v1842 = vunpack.c.l.b16 %v1744
  %v1843 = vunpack.c.l.b16 %v1745
  %v1844 = vunpack.c.l.b16 %v1746
  %v1845 = vunpack.c.l.b16 %v1747
  %v1846 = vunpack.c.l.b16 %v1748
  %v1847 = vunpack.c.l.b16 %v1749
  %v1848 = vunpack.c.l.b16 %v1750
  %v1849 = vunpack.c.l.b16 %v1751
  %v1850 = vunpack.c.l.b16 %v1752
  %v1851 = vunpack.c.l.b16 %v1753
  %v1852 = vunpack.c.l.b16 %v1754
  %v1853 = vunpack.c.l.b16 %v1755
  %v1854 = vunpack.c.l.b16 %v1756
  %v1855 = vunpack.c.l.b16 %v1757
  %v1856 = vunpack.c.l.b16 %v1758
  %v1857 = vunpack.c.l.b16 %v1759
  %v1858 = vunpack.c.l.b16 %v1760
  %v1859 = vunpack.c.l.b16 %v1761
  %v1860 = vunpack.c.l.b16 %v1762
  %v1861 = vunpack.c.l.b16 %v1763
  %v1862 = vunpack.c.l.b16 %v1764
  %v1863 = vunpack.c.l.b16 %v1765
  %v1864 = vunpack.c.l.b16 %v1766
  %v1865 = vunpack.c.l.b16 %v1767
  %v1866 = vunpack.c.l.b16 %v1768
  %v1867 = vunpack.c.l.b16 %v1769
  %v1868 = vunpack.c.l.b16 %v1770
  %v1869 = vunpack.c.l.b16 %v1771
  %v1870 = vunpack.c.l.b16 %v1772
  %v1871 = vunpack.c.l.b16 %v1773
  %v1872 = vunpack.c.l.b16 %v1774
  %v1873 = vunpack.c.l.b16 %v1775
  %v1874 = vunpack.c.l.b16 %v1776
  %v1875 = vunpack.c.l.b16 %v1777
  %v1876 = vunpack.c.l.b16 %v1778
  %v1877 = vpack.c.b16 %v1829, %v1828
  %v1878 = vpack.c.b16 %v1831, %v1830
  %v1879 = vpack.c.b16 %v1833, %v1832
  %v1880 = vpack.c.b16 %v1835, %v1834
  %v1881 = vpack.c.b16 %v1837, %v1836
  %v1882 = vpack.c.b16 %v1839, %v1838
  %v1883 = vpack.c.b16 %v1841, %v1840
  %v1884 = vpack.c.b16 %v1843, %v1842
  %v1885 = vpack.c.b16 %v1845, %v1844
  %v1886 = vpack.c.b16 %v1847, %v1846
  %v1887 = vpack.c.b16 %v1849, %v1848
  %v1888 = vpack.c.b16 %v1851, %v1850
  %v1889 = vpack.c.b16 %v1853, %v1852
  %v1890 = vpack.c.b16 %v1855, %v1854
  %v1891 = vpack.c.b16 %v1857, %v1856
  %v1892 = vpack.c.b16 %v1859, %v1858
  %v1893 = vpack.c.b16 %v1861, %v1860
  %v1894 = vpack.c.b16 %v1863, %v1862
  %v1895 = vpack.c.b16 %v1865, %v1864
  %v1896 = vpack.c.b16 %v1867, %v1866
  %v1897 = vpack.c.b16 %v1869, %v1868
  %v1898 = vpack.c.b16 %v1871, %v1870
  %v1899 = vpack.c.b16 %v1873, %v1872
  %v1900 = vpack.c.b16 %v1875, %v1874
  %v1901 = vpack.c.b16 %v1876, %v1876
  %v1903 = vsel %vm219, %v1877, 0
  %v1906 = vsel %vm219, %v1878, 0
  %v1909 = vsel %vm219, %v1879, 0
  %v1912 = vsel %vm219, %v1880, 0
  %v1915 = vsel %vm219, %v1881, 0
  %v1918 = vsel %vm219, %v1882, 0
  %v1921 = vsel %vm219, %v1883, 0
  %v1924 = vsel %vm219, %v1884, 0
  %v1927 = vsel %vm219, %v1885, 0
  %v1930 = vsel %vm219, %v1886, 0
  %v1933 = vsel %vm219, %v1887, 0
  %v1936 = vsel %vm219, %v1888, 0
  %v1939 = vsel %vm219, %v1889, 0
  %v1942 = vsel %vm219, %v1890, 0
  %v1945 = vsel %vm219, %v1891, 0
  %v1948 = vsel %vm219, %v1892, 0
  %v1951 = vsel %vm219, %v1893, 0
  %v1954 = vsel %vm219, %v1894, 0
  %v1957 = vsel %vm219, %v1895, 0
  %v1960 = vsel %vm219, %v1896, 0
  %v1963 = vsel %vm219, %v1897, 0
  %v1966 = vsel %vm219, %v1898, 0
  %v1969 = vsel %vm219, %v1899, 0
  %v1972 = vsel %vm219, %v1900, 0
  %v1975 = vsel %vm219, %v1901, 0
  %1977 = vmatprep.subr.bf16.mxu0 0
  %1978 = vmatpush1.bf16.msra.mxu0 %v215
  %1979 = vmatprep.subr.bf16.mxu0 0
  %1980 = vmatpush1.bf16.msra.mxu0 %v216
  %1981 = vmatprep.subr.bf16.mxu0 0
  %1982 = vmatpush1.bf16.msra.mxu0 0
  %1983 = vmatprep.subr.bf16.mxu0 0
  %1984 = vmatpush1.bf16.msra.mxu0 0
  %1985 = vmatprep.subr.bf16.mxu0 0
  %1986 = vmatpush1.bf16.msra.mxu0 0
  %1987 = vmatprep.subr.bf16.mxu0 0
  %1988 = vmatpush1.bf16.msra.mxu0 0
  %1989 = vmatprep.subr.bf16.mxu0 0
  %1990 = vmatpush1.bf16.msra.mxu0 0
  %1991 = vmatprep.subr.bf16.mxu0 0
  %1992 = vmatpush1.bf16.msra.mxu0 0
  %1993 = vmatprep.subr.bf16.mxu0 0
  %1994 = vmatpush1.bf16.msra.mxu0 0
  %1995 = vmatprep.subr.bf16.mxu0 0
  %1996 = vmatpush1.bf16.msra.mxu0 0
  %1997 = vmatprep.subr.bf16.mxu0 0
  %1998 = vmatpush1.bf16.msra.mxu0 0
  %1999 = vmatprep.subr.bf16.mxu0 0
  %2000 = vmatpush1.bf16.msra.mxu0 0
  %2001 = vmatprep.subr.bf16.mxu0 0
  %2002 = vmatpush1.bf16.msra.mxu0 0
  %2003 = vmatprep.subr.bf16.mxu0 0
  %2004 = vmatpush1.bf16.msra.mxu0 0
  %2005 = vmatprep.subr.bf16.mxu0 0
  %2006 = vmatpush1.bf16.msra.mxu0 0
  %2007 = vmatprep.subr.bf16.mxu0 0
  %2008 = vmatpush1.bf16.msra.mxu0 0
  %2009 = vmatprep.mubr.bf16.mxu0 0
  %2010 = vmatmul.mubr.bf16.gmra.mrb[0].mxu0 %v1903
  %v2011 = vpop.f32.mrb[0].mxu0
  %v2012 = vadd.f32 %v82, %v2011
  %v2013 = vpop.f32.mrb[0].mxu0
  %v2014 = vpop.f32.mrb[0].mxu0
  %v2015 = vadd.f32 %v82, %v2014
  %v2016 = vpop.f32.mrb[0].mxu0
  %2017 = vmatprep.mubr.bf16.mxu0 0
  %2018 = vmatmul.mubr.bf16.gmra.mrb[0].mxu0 %v1906
  %v2019 = vpop.f32.mrb[0].mxu0
  %v2020 = vadd.f32 %v82, %v2019
  %v2021 = vpop.f32.mrb[0].mxu0
  %v2022 = vpop.f32.mrb[0].mxu0
  %v2023 = vadd.f32 %v82, %v2022
  %v2024 = vpop.f32.mrb[0].mxu0
  %2025 = vmatprep.mubr.bf16.mxu0 0
  %2026 = vmatmul.mubr.bf16.gmra.mrb[0].mxu0 %v1909
  %v2027 = vpop.f32.mrb[0].mxu0
  %v2028 = vadd.f32 %v82, %v2027
  %v2029 = vpop.f32.mrb[0].mxu0
  %v2030 = vpop.f32.mrb[0].mxu0
  %v2031 = vadd.f32 %v82, %v2030
  %v2032 = vpop.f32.mrb[0].mxu0
  %2033 = vmatprep.mubr.bf16.mxu0 0
  %2034 = vmatmul.mubr.bf16.gmra.mrb[0].mxu0 %v1912
  %v2035 = vpop.f32.mrb[0].mxu0
  %v2036 = vadd.f32 %v82, %v2035
  %v2037 = vpop.f32.mrb[0].mxu0
  %v2038 = vpop.f32.mrb[0].mxu0
  %v2039 = vadd.f32 %v82, %v2038
  %v2040 = vpop.f32.mrb[0].mxu0
  %2041 = vmatprep.mubr.bf16.mxu0 0
  %2042 = vmatmul.mubr.bf16.gmra.mrb[0].mxu0 %v1915
  %v2043 = vpop.f32.mrb[0].mxu0
  %v2044 = vadd.f32 %v82, %v2043
  %v2045 = vpop.f32.mrb[0].mxu0
  %v2046 = vpop.f32.mrb[0].mxu0
  %v2047 = vadd.f32 %v82, %v2046
  %v2048 = vpop.f32.mrb[0].mxu0
  %2049 = vmatprep.mubr.bf16.mxu0 0
  %2050 = vmatmul.mubr.bf16.gmra.mrb[0].mxu0 %v1918
  %v2051 = vpop.f32.mrb[0].mxu0
  %v2052 = vadd.f32 %v82, %v2051
  %v2053 = vpop.f32.mrb[0].mxu0
  %v2054 = vpop.f32.mrb[0].mxu0
  %v2055 = vadd.f32 %v82, %v2054
  %v2056 = vpop.f32.mrb[0].mxu0
  %2057 = vmatprep.mubr.bf16.mxu0 0
  %2058 = vmatmul.mubr.bf16.gmra.mrb[0].mxu0 %v1921
  %v2059 = vpop.f32.mrb[0].mxu0
  %v2060 = vadd.f32 %v82, %v2059
  %v2061 = vpop.f32.mrb[0].mxu0
  %v2062 = vpop.f32.mrb[0].mxu0
  %v2063 = vadd.f32 %v82, %v2062
  %v2064 = vpop.f32.mrb[0].mxu0
  %2065 = vmatprep.mubr.bf16.mxu0 0
  %2066 = vmatmul.mubr.bf16.gmra.mrb[0].mxu0 %v1924
  %v2067 = vpop.f32.mrb[0].mxu0
  %v2068 = vadd.f32 %v82, %v2067
  %v2069 = vpop.f32.mrb[0].mxu0
  %v2070 = vpop.f32.mrb[0].mxu0
  %v2071 = vadd.f32 %v82, %v2070
  %v2072 = vpop.f32.mrb[0].mxu0
  %2073 = vmatprep.mubr.bf16.mxu0 0
  %2074 = vmatmul.mubr.bf16.gmra.mrb[0].mxu0 %v1927
  %v2075 = vpop.f32.mrb[0].mxu0
  %v2076 = vadd.f32 %v82, %v2075
  %v2077 = vpop.f32.mrb[0].mxu0
  %v2078 = vpop.f32.mrb[0].mxu0
  %v2079 = vadd.f32 %v82, %v2078
  %v2080 = vpop.f32.mrb[0].mxu0
  %2081 = vmatprep.mubr.bf16.mxu0 0
  %2082 = vmatmul.mubr.bf16.gmra.mrb[0].mxu0 %v1930
  %v2083 = vpop.f32.mrb[0].mxu0
  %v2084 = vadd.f32 %v82, %v2083
  %v2085 = vpop.f32.mrb[0].mxu0
  %v2086 = vpop.f32.mrb[0].mxu0
  %v2087 = vadd.f32 %v82, %v2086
  %v2088 = vpop.f32.mrb[0].mxu0
  %2089 = vmatprep.mubr.bf16.mxu0 0
  %2090 = vmatmul.mubr.bf16.gmra.mrb[0].mxu0 %v1933
  %v2091 = vpop.f32.mrb[0].mxu0
  %v2092 = vadd.f32 %v82, %v2091
  %v2093 = vpop.f32.mrb[0].mxu0
  %v2094 = vpop.f32.mrb[0].mxu0
  %v2095 = vadd.f32 %v82, %v2094
  %v2096 = vpop.f32.mrb[0].mxu0
  %2097 = vmatprep.mubr.bf16.mxu0 0
  %2098 = vmatmul.mubr.bf16.gmra.mrb[0].mxu0 %v1936
  %v2099 = vpop.f32.mrb[0].mxu0
  %v2100 = vadd.f32 %v82, %v2099
  %v2101 = vpop.f32.mrb[0].mxu0
  %v2102 = vpop.f32.mrb[0].mxu0
  %v2103 = vadd.f32 %v82, %v2102
  %v2104 = vpop.f32.mrb[0].mxu0
  %2105 = vmatprep.mubr.bf16.mxu0 0
  %2106 = vmatmul.mubr.bf16.gmra.mrb[0].mxu0 %v1939
  %v2107 = vpop.f32.mrb[0].mxu0
  %v2108 = vadd.f32 %v82, %v2107
  %v2109 = vpop.f32.mrb[0].mxu0
  %v2110 = vpop.f32.mrb[0].mxu0
  %v2111 = vadd.f32 %v82, %v2110
  %v2112 = vpop.f32.mrb[0].mxu0
  %2113 = vmatprep.mubr.bf16.mxu0 0
  %2114 = vmatmul.mubr.bf16.gmra.mrb[0].mxu0 %v1942
  %v2115 = vpop.f32.mrb[0].mxu0
  %v2116 = vadd.f32 %v82, %v2115
  %v2117 = vpop.f32.mrb[0].mxu0
  %v2118 = vpop.f32.mrb[0].mxu0
  %v2119 = vadd.f32 %v82, %v2118
  %v2120 = vpop.f32.mrb[0].mxu0
  %2121 = vmatprep.mubr.bf16.mxu0 0
  %2122 = vmatmul.mubr.bf16.gmra.mrb[0].mxu0 %v1945
  %v2123 = vpop.f32.mrb[0].mxu0
  %v2124 = vadd.f32 %v82, %v2123
  %v2125 = vpop.f32.mrb[0].mxu0
  %v2126 = vpop.f32.mrb[0].mxu0
  %v2127 = vadd.f32 %v82, %v2126
  %v2128 = vpop.f32.mrb[0].mxu0
  %2129 = vmatprep.mubr.bf16.mxu0 0
  %2130 = vmatmul.mubr.bf16.gmra.mrb[0].mxu0 %v1948
  %v2131 = vpop.f32.mrb[0].mxu0
  %v2132 = vadd.f32 %v82, %v2131
  %v2133 = vpop.f32.mrb[0].mxu0
  %v2134 = vpop.f32.mrb[0].mxu0
  %v2135 = vadd.f32 %v82, %v2134
  %v2136 = vpop.f32.mrb[0].mxu0
  %2137 = vmatprep.mubr.bf16.mxu0 0
  %2138 = vmatmul.mubr.bf16.gmra.mrb[0].mxu0 %v1951
  %v2139 = vpop.f32.mrb[0].mxu0
  %v2140 = vadd.f32 %v82, %v2139
  %v2141 = vpop.f32.mrb[0].mxu0
  %v2142 = vpop.f32.mrb[0].mxu0
  %v2143 = vadd.f32 %v82, %v2142
  %v2144 = vpop.f32.mrb[0].mxu0
  %2145 = vmatprep.mubr.bf16.mxu0 0
  %2146 = vmatmul.mubr.bf16.gmra.mrb[0].mxu0 %v1954
  %v2147 = vpop.f32.mrb[0].mxu0
  %v2148 = vadd.f32 %v82, %v2147
  %v2149 = vpop.f32.mrb[0].mxu0
  %v2150 = vpop.f32.mrb[0].mxu0
  %v2151 = vadd.f32 %v82, %v2150
  %v2152 = vpop.f32.mrb[0].mxu0
  %2153 = vmatprep.mubr.bf16.mxu0 0
  %2154 = vmatmul.mubr.bf16.gmra.mrb[0].mxu0 %v1957
  %v2155 = vpop.f32.mrb[0].mxu0
  %v2156 = vadd.f32 %v82, %v2155
  %v2157 = vpop.f32.mrb[0].mxu0
  %v2158 = vpop.f32.mrb[0].mxu0
  %v2159 = vadd.f32 %v82, %v2158
  %v2160 = vpop.f32.mrb[0].mxu0
  %2161 = vmatprep.mubr.bf16.mxu0 0
  %2162 = vmatmul.mubr.bf16.gmra.mrb[0].mxu0 %v1960
  %v2163 = vpop.f32.mrb[0].mxu0
  %v2164 = vadd.f32 %v82, %v2163
  %v2165 = vpop.f32.mrb[0].mxu0
  %v2166 = vpop.f32.mrb[0].mxu0
  %v2167 = vadd.f32 %v82, %v2166
  %v2168 = vpop.f32.mrb[0].mxu0
  %2169 = vmatprep.mubr.bf16.mxu0 0
  %2170 = vmatmul.mubr.bf16.gmra.mrb[0].mxu0 %v1963
  %v2171 = vpop.f32.mrb[0].mxu0
  %v2172 = vadd.f32 %v82, %v2171
  %v2173 = vpop.f32.mrb[0].mxu0
  %v2174 = vpop.f32.mrb[0].mxu0
  %v2175 = vadd.f32 %v82, %v2174
  %v2176 = vpop.f32.mrb[0].mxu0
  %2177 = vmatprep.mubr.bf16.mxu0 0
  %2178 = vmatmul.mubr.bf16.gmra.mrb[0].mxu0 %v1966
  %v2179 = vpop.f32.mrb[0].mxu0
  %v2180 = vadd.f32 %v82, %v2179
  %v2181 = vpop.f32.mrb[0].mxu0
  %v2182 = vpop.f32.mrb[0].mxu0
  %v2183 = vadd.f32 %v82, %v2182
  %v2184 = vpop.f32.mrb[0].mxu0
  %2185 = vmatprep.mubr.bf16.mxu0 0
  %2186 = vmatmul.mubr.bf16.gmra.mrb[0].mxu0 %v1969
  %v2187 = vpop.f32.mrb[0].mxu0
  %v2188 = vadd.f32 %v82, %v2187
  %v2189 = vpop.f32.mrb[0].mxu0
  %v2190 = vpop.f32.mrb[0].mxu0
  %v2191 = vadd.f32 %v82, %v2190
  %v2192 = vpop.f32.mrb[0].mxu0
  %2193 = vmatprep.mubr.bf16.mxu0 0
  %2194 = vmatmul.mubr.bf16.gmra.mrb[0].mxu0 %v1972
  %v2195 = vpop.f32.mrb[0].mxu0
  %v2196 = vadd.f32 %v82, %v2195
  %v2197 = vpop.f32.mrb[0].mxu0
  %v2198 = vpop.f32.mrb[0].mxu0
  %v2199 = vadd.f32 %v82, %v2198
  %v2200 = vpop.f32.mrb[0].mxu0
  %2201 = vmatprep.mubr.bf16.mxu0 0
  %2202 = vmatmul.mubr.bf16.gmra.mrb[0].mxu0 %v1975
  %v2203 = vpop.f32.mrb[0].mxu0
  %v2204 = vadd.f32 %v82, %v2203
  %v2205 = vpop.f32.mrb[0].mxu0
  %v2206 = vpop.f32.mrb[0].mxu0
  %v2207 = vpop.f32.mrb[0].mxu0
  %2208 = vdwg.mxu0
  %v2209 = vtanh.pop %v2012
  %v2210 = vtanh.pop %v2015
  %v2211 = vtanh.pop %v2020
  %v2212 = vtanh.pop %v2023
  %v2213 = vtanh.pop %v2028
  %v2214 = vtanh.pop %v2031
  %v2215 = vtanh.pop %v2036
  %v2216 = vtanh.pop %v2039
  %v2217 = vtanh.pop %v2044
  %v2218 = vtanh.pop %v2047
  %v2219 = vtanh.pop %v2052
  %v2220 = vtanh.pop %v2055
  %v2221 = vtanh.pop %v2060
  %v2222 = vtanh.pop %v2063
  %v2223 = vtanh.pop %v2068
  %v2224 = vtanh.pop %v2071
  %v2225 = vtanh.pop %v2076
  %v2226 = vtanh.pop %v2079
  %v2227 = vtanh.pop %v2084
  %v2228 = vtanh.pop %v2087
  %v2229 = vtanh.pop %v2092
  %v2230 = vtanh.pop %v2095
  %v2231 = vtanh.pop %v2100
  %v2232 = vtanh.pop %v2103
  %v2233 = vtanh.pop %v2108
  %v2234 = vtanh.pop %v2111
  %v2235 = vtanh.pop %v2116
  %v2236 = vtanh.pop %v2119
  %v2237 = vtanh.pop %v2124
  %v2238 = vtanh.pop %v2127
  %v2239 = vtanh.pop %v2132
  %v2240 = vtanh.pop %v2135
  %v2241 = vtanh.pop %v2140
  %v2242 = vtanh.pop %v2143
  %v2243 = vtanh.pop %v2148
  %v2244 = vtanh.pop %v2151
  %v2245 = vtanh.pop %v2156
  %v2246 = vtanh.pop %v2159
  %v2247 = vtanh.pop %v2164
  %v2248 = vtanh.pop %v2167
  %v2249 = vtanh.pop %v2172
  %v2250 = vtanh.pop %v2175
  %v2251 = vtanh.pop %v2180
  %v2252 = vtanh.pop %v2183
  %v2253 = vtanh.pop %v2188
  %v2254 = vtanh.pop %v2191
  %v2255 = vtanh.pop %v2196
  %v2256 = vtanh.pop %v2199
  %v2257 = vtanh.pop %v2204
  %v2258 = vadd.f32 %v1681, %v2209
  %v2259 = vadd.f32 %v1682, %v2210
  %v2260 = vadd.f32 %v1683, %v2211
  %v2261 = vadd.f32 %v1684, %v2212
  %v2262 = vadd.f32 %v1685, %v2213
  %v2263 = vadd.f32 %v1686, %v2214
  %v2264 = vadd.f32 %v1687, %v2215
  %v2265 = vadd.f32 %v1688, %v2216
  %v2266 = vadd.f32 %v1689, %v2217
  %v2267 = vadd.f32 %v1690, %v2218
  %v2268 = vadd.f32 %v1691, %v2219
  %v2269 = vadd.f32 %v1692, %v2220
  %v2270 = vadd.f32 %v1693, %v2221
  %v2271 = vadd.f32 %v1694, %v2222
  %v2272 = vadd.f32 %v1695, %v2223
  %v2273 = vadd.f32 %v1696, %v2224
  %v2274 = vadd.f32 %v1697, %v2225
  %v2275 = vadd.f32 %v1698, %v2226
  %v2276 = vadd.f32 %v1699, %v2227
  %v2277 = vadd.f32 %v1700, %v2228
  %v2278 = vadd.f32 %v1701, %v2229
  %v2279 = vadd.f32 %v1702, %v2230
  %v2280 = vadd.f32 %v1703, %v2231
  %v2281 = vadd.f32 %v1704, %v2232
  %v2282 = vadd.f32 %v1705, %v2233
  %v2283 = vadd.f32 %v1706, %v2234
  %v2284 = vadd.f32 %v1707, %v2235
  %v2285 = vadd.f32 %v1708, %v2236
  %v2286 = vadd.f32 %v1709, %v2237
  %v2287 = vadd.f32 %v1710, %v2238
  %v2288 = vadd.f32 %v1711, %v2239
  %v2289 = vadd.f32 %v1712, %v2240
  %v2290 = vadd.f32 %v1713, %v2241
  %v2291 = vadd.f32 %v1714, %v2242
  %v2292 = vadd.f32 %v1715, %v2243
  %v2293 = vadd.f32 %v1716, %v2244
  %v2294 = vadd.f32 %v1717, %v2245
  %v2295 = vadd.f32 %v1718, %v2246
  %v2296 = vadd.f32 %v1719, %v2247
  %v2297 = vadd.f32 %v1720, %v2248
  %v2298 = vadd.f32 %v1721, %v2249
  %v2299 = vadd.f32 %v1722, %v2250
  %v2300 = vadd.f32 %v1723, %v2251
  %v2301 = vadd.f32 %v1724, %v2252
  %v2302 = vadd.f32 %v1725, %v2253
  %v2303 = vadd.f32 %v1726, %v2254
  %v2304 = vadd.f32 %v1727, %v2255
  %v2305 = vadd.f32 %v1728, %v2256
  %v2306 = vadd.f32 %v1729, %v2257
  %v2307 = vmul.f32 %v2258, 0.25
  %v2308 = vmul.f32 %v2259, 0.25
  %v2309 = vmul.f32 %v2260, 0.25
  %v2310 = vmul.f32 %v2261, 0.25
  %v2311 = vmul.f32 %v2262, 0.25
  %v2312 = vmul.f32 %v2263, 0.25
  %v2313 = vmul.f32 %v2264, 0.25
  %v2314 = vmul.f32 %v2265, 0.25
  %v2315 = vmul.f32 %v2266, 0.25
  %v2316 = vmul.f32 %v2267, 0.25
  %v2317 = vmul.f32 %v2268, 0.25
  %v2318 = vmul.f32 %v2269, 0.25
  %v2319 = vmul.f32 %v2270, 0.25
  %v2320 = vmul.f32 %v2271, 0.25
  %v2321 = vmul.f32 %v2272, 0.25
  %v2322 = vmul.f32 %v2273, 0.25
  %v2323 = vmul.f32 %v2274, 0.25
  %v2324 = vmul.f32 %v2275, 0.25
  %v2325 = vmul.f32 %v2276, 0.25
  %v2326 = vmul.f32 %v2277, 0.25
  %v2327 = vmul.f32 %v2278, 0.25
  %v2328 = vmul.f32 %v2279, 0.25
  %v2329 = vmul.f32 %v2280, 0.25
  %v2330 = vmul.f32 %v2281, 0.25
  %v2331 = vmul.f32 %v2282, 0.25
  %v2332 = vmul.f32 %v2283, 0.25
  %v2333 = vmul.f32 %v2284, 0.25
  %v2334 = vmul.f32 %v2285, 0.25
  %v2335 = vmul.f32 %v2286, 0.25
  %v2336 = vmul.f32 %v2287, 0.25
  %v2337 = vmul.f32 %v2288, 0.25
  %v2338 = vmul.f32 %v2289, 0.25
  %v2339 = vmul.f32 %v2290, 0.25
  %v2340 = vmul.f32 %v2291, 0.25
  %v2341 = vmul.f32 %v2292, 0.25
  %v2342 = vmul.f32 %v2293, 0.25
  %v2343 = vmul.f32 %v2294, 0.25
  %v2344 = vmul.f32 %v2295, 0.25
  %v2345 = vmul.f32 %v2296, 0.25
  %v2346 = vmul.f32 %v2297, 0.25
  %v2347 = vmul.f32 %v2298, 0.25
  %v2348 = vmul.f32 %v2299, 0.25
  %v2349 = vmul.f32 %v2300, 0.25
  %v2350 = vmul.f32 %v2301, 0.25
  %v2351 = vmul.f32 %v2302, 0.25
  %v2352 = vmul.f32 %v2303, 0.25
  %v2353 = vmul.f32 %v2304, 0.25
  %v2354 = vmul.f32 %v2305, 0.25
  %v2355 = vmul.f32 %v2306, 0.25
  %2356 = vst [vmem:[%s6] sm:$0xff] %v2307
  %2357 = vst [vmem:[%s6 + $0x8] sm:$0xff] %v2308
  %2358 = vst [vmem:[%s6 + $0x10] sm:$0xff] %v2309
  %2359 = vst [vmem:[%s6 + $0x18] sm:$0xff] %v2310
  %2360 = vst [vmem:[%s6 + $0x20] sm:$0xff] %v2311
  %2361 = vst [vmem:[%s6 + $0x28] sm:$0xff] %v2312
  %2362 = vst [vmem:[%s6 + $0x30] sm:$0xff] %v2313
  %2363 = vst [vmem:[%s6 + $0x38] sm:$0xff] %v2314
  %2364 = vst [vmem:[%s6 + $0x40] sm:$0xff] %v2315
  %2365 = vst [vmem:[%s6 + $0x48] sm:$0xff] %v2316
  %2366 = vst [vmem:[%s6 + $0x50] sm:$0xff] %v2317
  %2367 = vst [vmem:[%s6 + $0x58] sm:$0xff] %v2318
  %2368 = vst [vmem:[%s6 + $0x60] sm:$0xff] %v2319
  %2369 = vst [vmem:[%s6 + $0x68] sm:$0xff] %v2320
  %2370 = vst [vmem:[%s6 + $0x70] sm:$0xff] %v2321
  %2371 = vst [vmem:[%s6 + $0x78] sm:$0xff] %v2322
  %2372 = vst [vmem:[%s6 + $0x80] sm:$0xff] %v2323
  %2373 = vst [vmem:[%s6 + $0x88] sm:$0xff] %v2324
  %2374 = vst [vmem:[%s6 + $0x90] sm:$0xff] %v2325
  %2375 = vst [vmem:[%s6 + $0x98] sm:$0xff] %v2326
  %2376 = vst [vmem:[%s6 + $0xa0] sm:$0xff] %v2327
  %2377 = vst [vmem:[%s6 + $0xa8] sm:$0xff] %v2328
  %2378 = vst [vmem:[%s6 + $0xb0] sm:$0xff] %v2329
  %2379 = vst [vmem:[%s6 + $0xb8] sm:$0xff] %v2330
  %2380 = vst [vmem:[%s6 + $0xc0] sm:$0xff] %v2331
  %2381 = vst [vmem:[%s6 + $0xc8] sm:$0xff] %v2332
  %2382 = vst [vmem:[%s6 + $0xd0] sm:$0xff] %v2333
  %2383 = vst [vmem:[%s6 + $0xd8] sm:$0xff] %v2334
  %2384 = vst [vmem:[%s6 + $0xe0] sm:$0xff] %v2335
  %2385 = vst [vmem:[%s6 + $0xe8] sm:$0xff] %v2336
  %2386 = vst [vmem:[%s6 + $0xf0] sm:$0xff] %v2337
  %2387 = vst [vmem:[%s6 + $0xf8] sm:$0xff] %v2338
  %2388 = vst [vmem:[%s6 + $0x100] sm:$0xff] %v2339
  %2389 = vst [vmem:[%s6 + $0x108] sm:$0xff] %v2340
  %2390 = vst [vmem:[%s6 + $0x110] sm:$0xff] %v2341
  %2391 = vst [vmem:[%s6 + $0x118] sm:$0xff] %v2342
  %2392 = vst [vmem:[%s6 + $0x120] sm:$0xff] %v2343
  %2393 = vst [vmem:[%s6 + $0x128] sm:$0xff] %v2344
  %2394 = vst [vmem:[%s6 + $0x130] sm:$0xff] %v2345
  %2395 = vst [vmem:[%s6 + $0x138] sm:$0xff] %v2346
  %2396 = vst [vmem:[%s6 + $0x140] sm:$0xff] %v2347
  %2397 = vst [vmem:[%s6 + $0x148] sm:$0xff] %v2348
  %2398 = vst [vmem:[%s6 + $0x150] sm:$0xff] %v2349
  %2399 = vst [vmem:[%s6 + $0x158] sm:$0xff] %v2350
  %2400 = vst [vmem:[%s6 + $0x160] sm:$0xff] %v2351
  %2401 = vst [vmem:[%s6 + $0x168] sm:$0xff] %v2352
  %2402 = vst [vmem:[%s6 + $0x170] sm:$0xff] %v2353
  %2403 = vst [vmem:[%s6 + $0x178] sm:$0xff] %v2354
  %2404 = vst [vmem:[%s6 + $0x180] sm:$0xff] %v2355
  // Predicated region
  $region26: #{_lambda_.3} parent=0 // pred_check
    _
  $region27: #{_lambda_.3} parent=0 // pred_check_branch
    %2406 = sbr.rel (0) target = $region29
  $region28: #{_lambda_.3} parent=0 // pred_region
    _
  $region29: #{_lambda_.3} parent=0 // pred_fallthru
    _
  // Predicated region
  $region30: #{_lambda_.3} parent=0 // pred_check
    _
  $region31: #{_lambda_.3} parent=0 // pred_check_branch
    %2408 = sbr.rel (0) target = $region33
  $region32: #{_lambda_.3} parent=0 // pred_region
    _
  $region33: #{_lambda_.3} parent=0 // pred_fallthru
    _

// kernel: _lambda_.4
$region0: #{_lambda_.4}
  #allocation0 [shape = 'u32[]', space=smem, size = 0x4, offset = 0x4, fixed_abs, tag = 'smem constant byte address 0x4 - core index']
  #allocation1 [shape = 'u32[144,128]{1,0:T(1,128)}', space=vmem, size = 0x12000, scoped, tag = 'internal scratch']
  %s0 = inlined_call_operand.vmem [shape: bf16[50,152], index: 0, kind: input, shape index: {}]
  %s1 = inlined_call_operand.vmem [shape: bf16[50,152], index: 1, kind: input, shape index: {}]
  %s2 = inlined_call_operand.vmem [shape: bf16[50,152], index: 2, kind: input, shape index: {}]
  %s3 = inlined_call_operand.vmem [shape: bf16[50,152], index: 3, kind: input, shape index: {}]
  %s4 = inlined_call_operand.vmem [shape: bf16[152,128], index: 4, kind: input, shape index: {}]
  %s5 = inlined_call_operand.vmem [shape: f32[1,128], index: 5, kind: input, shape index: {}]
  %s6 = inlined_call_operand.vmem [shape: f32[50,128], index: 6, kind: output, shape index: {}]
  %s7 = sld [smem:[#allocation0]]
  $region34: #{_lambda_.4} parent=0
    _
  %s9 = ssub.s32 1, %s7
  %s10 = scalar_select 0, %s9, %s7
  // Predicated region
  $region2: #{_lambda_.4} parent=0 // pred_check
    _
  $region3: #{_lambda_.4} parent=0 // pred_check_branch
    %12 = sbr.rel (0) target = $region5
  $region4: #{_lambda_.4} parent=0 // pred_region
    _
  $region5: #{_lambda_.4} parent=0 // pred_fallthru
    _
  // Predicated region
  $region6: #{_lambda_.4} parent=0 // pred_check
    _
  $region7: #{_lambda_.4} parent=0 // pred_check_branch
    %14 = sbr.rel (0) target = $region9
  $region8: #{_lambda_.4} parent=0 // pred_region
    _
  $region9: #{_lambda_.4} parent=0 // pred_fallthru
    _
  // Predicated region
  $region10: #{_lambda_.4} parent=0 // pred_check
    _
  $region11: #{_lambda_.4} parent=0 // pred_check_branch
    %16 = sbr.rel (0) target = $region13
  $region12: #{_lambda_.4} parent=0 // pred_region
    _
  $region13: #{_lambda_.4} parent=0 // pred_fallthru
    _
  // Predicated region
  $region14: #{_lambda_.4} parent=0 // pred_check
    _
  $region15: #{_lambda_.4} parent=0 // pred_check_branch
    %18 = sbr.rel (0) target = $region17
  $region16: #{_lambda_.4} parent=0 // pred_region
    _
  $region17: #{_lambda_.4} parent=0 // pred_fallthru
    _
  // Predicated region
  $region18: #{_lambda_.4} parent=0 // pred_check
    _
  $region19: #{_lambda_.4} parent=0 // pred_check_branch
    %20 = sbr.rel (0) target = $region21
  $region20: #{_lambda_.4} parent=0 // pred_region
    _
  $region21: #{_lambda_.4} parent=0 // pred_fallthru
    _
  // Predicated region
  $region22: #{_lambda_.4} parent=0 // pred_check
    _
  $region23: #{_lambda_.4} parent=0 // pred_check_branch
    %22 = sbr.rel (0) target = $region25
  $region24: #{_lambda_.4} parent=0 // pred_region
    _
  $region25: #{_lambda_.4} parent=0 // pred_fallthru
    _
  %v24 = vld [vmem:[%s4] sm:$0xf]
  %v25 = vld [vmem:[%s4 + $0x4] sm:$0xf]
  %v26 = vld [vmem:[%s4 + $0x8] sm:$0xf]
  %v27 = vld [vmem:[%s4 + $0xc] sm:$0xf]
  %v28 = vld [vmem:[%s4 + $0x10] sm:$0xf]
  %v29 = vld [vmem:[%s4 + $0x14] sm:$0xf]
  %v30 = vld [vmem:[%s4 + $0x18] sm:$0xf]
  %v31 = vld [vmem:[%s4 + $0x1c] sm:$0xf]
  %v32 = vld [vmem:[%s4 + $0x20] sm:$0xf]
  %v33 = vld [vmem:[%s4 + $0x24] sm:$0xf]
  %v34 = vld [vmem:[%s4 + $0x28] sm:$0xf]
  %v35 = vld [vmem:[%s4 + $0x2c] sm:$0xf]
  %v36 = vld [vmem:[%s4 + $0x30] sm:$0xf]
  %v37 = vld [vmem:[%s4 + $0x34] sm:$0xf]
  %v38 = vld [vmem:[%s4 + $0x38] sm:$0xf]
  %v39 = vld [vmem:[%s4 + $0x3c] sm:$0xf]
  %v40 = vld [vmem:[%s4 + $0x40] sm:$0xf]
  %v41 = vld [vmem:[%s4 + $0x44] sm:$0xf]
  %v42 = vld [vmem:[%s4 + $0x48] sm:$0xf]
  %v43 = vld [vmem:[%s5] sm:$0x1]
  %v44 = vld [vmem:[%s0] sm:$0xff]
  %v45 = vld [vmem:[%s0 + $0x8] sm:$0xff]
  %v46 = vld [vmem:[%s0 + $0x10] sm:$0xff]
  %v47 = vld [vmem:[%s0 + $0x18] sm:$0xff]
  %v48 = vld [vmem:[%s0 + $0x20] sm:$0xff]
  %v49 = vld [vmem:[%s0 + $0x28] sm:$0xff]
  %v50 = vld [vmem:[%s0 + $0x30] sm:$0x11]
  %v52 = vlaneseq
  %v53 = vshrl.u32 %v52, 7
  %v54 = vsub.s32 0, %v53
  %v55 = vrot.slane %v43, %v54
  %v64 = vunpack.c.l.b16 %v44
  %v65 = vunpack.c.h.b16 %v44
  %v66 = vunpack.c.l.b16 %v45
  %v67 = vunpack.c.h.b16 %v45
  %v68 = vunpack.c.l.b16 %v46
  %v69 = vunpack.c.h.b16 %v46
  %v70 = vunpack.c.l.b16 %v47
  %v71 = vunpack.c.h.b16 %v47
  %v72 = vunpack.c.l.b16 %v48
  %v73 = vunpack.c.h.b16 %v48
  %v74 = vunpack.c.l.b16 %v49
  %v75 = vunpack.c.h.b16 %v49
  %v76 = vunpack.c.l.b16 %v50
  %v77 = vunpack.c.h.b16 %v50
  %v78 = vpack.c.b16 %v66, %v64
  %v79 = vpack.c.b16 %v67, %v65
  %v80 = vpack.c.b16 %v70, %v68
  %v81 = vpack.c.b16 %v71, %v69
  %v82 = vpack.c.b16 %v74, %v72
  %v83 = vpack.c.b16 %v75, %v73
  %v84 = vpack.c.b16 %v76, %v76
  %v85 = vpack.c.b16 %v77, %v77
  %v109 = vunpack.c.l.b16 %v24
  %v110 = vunpack.c.l.b16 %v25
  %v111 = vunpack.c.l.b16 %v26
  %v112 = vunpack.c.l.b16 %v27
  %v113 = vunpack.c.l.b16 %v28
  %v114 = vunpack.c.l.b16 %v29
  %v115 = vunpack.c.l.b16 %v30
  %v116 = vunpack.c.l.b16 %v31
  %v117 = vunpack.c.l.b16 %v32
  %v118 = vunpack.c.l.b16 %v33
  %v119 = vunpack.c.l.b16 %v34
  %v120 = vunpack.c.l.b16 %v35
  %v121 = vunpack.c.l.b16 %v36
  %v122 = vunpack.c.l.b16 %v37
  %v123 = vunpack.c.l.b16 %v38
  %v124 = vunpack.c.l.b16 %v39
  %v125 = vunpack.c.l.b16 %v40
  %v126 = vunpack.c.l.b16 %v41
  %v127 = vunpack.c.l.b16 %v42
  %v128 = vpack.c.b16 %v110, %v109
  %v129 = vpack.c.b16 %v112, %v111
  %v130 = vpack.c.b16 %v114, %v113
  %v131 = vpack.c.b16 %v116, %v115
  %v132 = vpack.c.b16 %v118, %v117
  %v133 = vpack.c.b16 %v120, %v119
  %v134 = vpack.c.b16 %v122, %v121
  %v135 = vpack.c.b16 %v124, %v123
  %v136 = vpack.c.b16 %v126, %v125
  %v137 = vpack.c.b16 %v127, %v127
  %vm147 = vcmask 195584
  %v149 = vsel %vm147, %v79, 0
  %v152 = vsel %vm147, %v81, 0
  %v155 = vsel %vm147, %v83, 0
  %v158 = vsel %vm147, %v85, 0
  %vm160 = vcmask 1043456
  %v162 = vsel %vm160, %v137, 0
  %164 = vmatprep.subr.bf16.mxu0 0
  %165 = vmatpush1.bf16.msra.mxu0 %v128
  %166 = vmatprep.subr.bf16.mxu0 0
  %167 = vmatpush1.bf16.msra.mxu0 %v129
  %168 = vmatprep.subr.bf16.mxu0 0
  %169 = vmatpush1.bf16.msra.mxu0 %v130
  %170 = vmatprep.subr.bf16.mxu0 0
  %171 = vmatpush1.bf16.msra.mxu0 %v131
  %172 = vmatprep.subr.bf16.mxu0 0
  %173 = vmatpush1.bf16.msra.mxu0 %v132
  %174 = vmatprep.subr.bf16.mxu0 0
  %175 = vmatpush1.bf16.msra.mxu0 %v133
  %176 = vmatprep.subr.bf16.mxu0 0
  %177 = vmatpush1.bf16.msra.mxu0 %v134
  %178 = vmatprep.subr.bf16.mxu0 0
  %179 = vmatpush1.bf16.msra.mxu0 %v135
  %180 = vmatprep.subr.bf16.mxu0 0
  %181 = vmatpush1.bf16.msra.mxu0 %v136
  %182 = vmatprep.subr.bf16.mxu0 0
  %183 = vmatpush1.bf16.msra.mxu0 %v162
  %184 = vmatprep.subr.bf16.mxu0 0
  %185 = vmatpush1.bf16.msra.mxu0 0
  %186 = vmatprep.subr.bf16.mxu0 0
  %187 = vmatpush1.bf16.msra.mxu0 0
  %188 = vmatprep.subr.bf16.mxu0 0
  %189 = vmatpush1.bf16.msra.mxu0 0
  %190 = vmatprep.subr.bf16.mxu0 0
  %191 = vmatpush1.bf16.msra.mxu0 0
  %192 = vmatprep.subr.bf16.mxu0 0
  %193 = vmatpush1.bf16.msra.mxu0 0
  %194 = vmatprep.subr.bf16.mxu0 0
  %195 = vmatpush1.bf16.msra.mxu0 0
  %196 = vmatprep.mubr.bf16.mxu0 %v149
  %197 = vmatmul.mubr.bf16.gmra.mrb[0].mxu0 %v78
  %v198 = vpop.f32.mrb[0].mxu0
  %v199 = vadd.f32 %v55, %v198
  %v200 = vpop.f32.mrb[0].mxu0
  %v201 = vpop.f32.mrb[0].mxu0
  %v202 = vadd.f32 %v55, %v201
  %v203 = vpop.f32.mrb[0].mxu0
  %204 = vmatprep.mubr.bf16.mxu0 %v152
  %205 = vmatmul.mubr.bf16.gmra.mrb[0].mxu0 %v80
  %v206 = vpop.f32.mrb[0].mxu0
  %v207 = vadd.f32 %v55, %v206
  %v208 = vpop.f32.mrb[0].mxu0
  %v209 = vpop.f32.mrb[0].mxu0
  %v210 = vadd.f32 %v55, %v209
  %v211 = vpop.f32.mrb[0].mxu0
  %212 = vmatprep.mubr.bf16.mxu0 %v155
  %213 = vmatmul.mubr.bf16.gmra.mrb[0].mxu0 %v82
  %v214 = vpop.f32.mrb[0].mxu0
  %v215 = vadd.f32 %v55, %v214
  %v216 = vpop.f32.mrb[0].mxu0
  %v217 = vpop.f32.mrb[0].mxu0
  %v218 = vadd.f32 %v55, %v217
  %v219 = vpop.f32.mrb[0].mxu0
  %220 = vmatprep.mubr.bf16.mxu0 %v158
  %221 = vmatmul.mubr.bf16.gmra.mrb[0].mxu0 %v84
  %v222 = vpop.f32.mrb[0].mxu0
  %v223 = vadd.f32 %v55, %v222
  %v224 = vpop.f32.mrb[0].mxu0
  %v225 = vpop.f32.mrb[0].mxu0
  %v226 = vpop.f32.mrb[0].mxu0
  %227 = vdwg.mxu0
  %v228 = vtanh.pop %v199
  %v229 = vtanh.pop %v202
  %v230 = vtanh.pop %v207
  %v231 = vtanh.pop %v210
  %v232 = vtanh.pop %v215
  %v233 = vtanh.pop %v218
  %v234 = vtanh.pop %v223
  %v235 = vld [vmem:[%s1] sm:$0xff]
  %v236 = vld [vmem:[%s1 + $0x8] sm:$0xff]
  %v237 = vld [vmem:[%s1 + $0x10] sm:$0xff]
  %v238 = vld [vmem:[%s1 + $0x18] sm:$0xff]
  %v239 = vld [vmem:[%s1 + $0x20] sm:$0xff]
  %v240 = vld [vmem:[%s1 + $0x28] sm:$0xff]
  %v241 = vld [vmem:[%s1 + $0x30] sm:$0x11]
  %v249 = vunpack.c.l.b16 %v235
  %v250 = vunpack.c.h.b16 %v235
  %v251 = vunpack.c.l.b16 %v236
  %v252 = vunpack.c.h.b16 %v236
  %v253 = vunpack.c.l.b16 %v237
  %v254 = vunpack.c.h.b16 %v237
  %v255 = vunpack.c.l.b16 %v238
  %v256 = vunpack.c.h.b16 %v238
  %v257 = vunpack.c.l.b16 %v239
  %v258 = vunpack.c.h.b16 %v239
  %v259 = vunpack.c.l.b16 %v240
  %v260 = vunpack.c.h.b16 %v240
  %v261 = vunpack.c.l.b16 %v241
  %v262 = vunpack.c.h.b16 %v241
  %v263 = vpack.c.b16 %v251, %v249
  %v264 = vpack.c.b16 %v252, %v250
  %v265 = vpack.c.b16 %v255, %v253
  %v266 = vpack.c.b16 %v256, %v254
  %v267 = vpack.c.b16 %v259, %v257
  %v268 = vpack.c.b16 %v260, %v258
  %v269 = vpack.c.b16 %v261, %v261
  %v270 = vpack.c.b16 %v262, %v262
  %v276 = vsel %vm147, %v264, 0
  %v279 = vsel %vm147, %v266, 0
  %v282 = vsel %vm147, %v268, 0
  %v285 = vsel %vm147, %v270, 0
  %287 = vmatprep.subr.bf16.mxu0 0
  %288 = vmatpush1.bf16.msra.mxu0 %v128
  %289 = vmatprep.subr.bf16.mxu0 0
  %290 = vmatpush1.bf16.msra.mxu0 %v129
  %291 = vmatprep.subr.bf16.mxu0 0
  %292 = vmatpush1.bf16.msra.mxu0 %v130
  %293 = vmatprep.subr.bf16.mxu0 0
  %294 = vmatpush1.bf16.msra.mxu0 %v131
  %295 = vmatprep.subr.bf16.mxu0 0
  %296 = vmatpush1.bf16.msra.mxu0 %v132
  %297 = vmatprep.subr.bf16.mxu0 0
  %298 = vmatpush1.bf16.msra.mxu0 %v133
  %299 = vmatprep.subr.bf16.mxu0 0
  %300 = vmatpush1.bf16.msra.mxu0 %v134
  %301 = vmatprep.subr.bf16.mxu0 0
  %302 = vmatpush1.bf16.msra.mxu0 %v135
  %303 = vmatprep.subr.bf16.mxu0 0
  %304 = vmatpush1.bf16.msra.mxu0 %v136
  %305 = vmatprep.subr.bf16.mxu0 0
  %306 = vmatpush1.bf16.msra.mxu0 %v162
  %307 = vmatprep.subr.bf16.mxu0 0
  %308 = vmatpush1.bf16.msra.mxu0 0
  %309 = vmatprep.subr.bf16.mxu0 0
  %310 = vmatpush1.bf16.msra.mxu0 0
  %311 = vmatprep.subr.bf16.mxu0 0
  %312 = vmatpush1.bf16.msra.mxu0 0
  %313 = vmatprep.subr.bf16.mxu0 0
  %314 = vmatpush1.bf16.msra.mxu0 0
  %315 = vmatprep.subr.bf16.mxu0 0
  %316 = vmatpush1.bf16.msra.mxu0 0
  %317 = vmatprep.subr.bf16.mxu0 0
  %318 = vmatpush1.bf16.msra.mxu0 0
  %319 = vmatprep.mubr.bf16.mxu0 %v276
  %320 = vmatmul.mubr.bf16.gmra.mrb[0].mxu0 %v263
  %v321 = vpop.f32.mrb[0].mxu0
  %v322 = vadd.f32 %v55, %v321
  %v323 = vpop.f32.mrb[0].mxu0
  %v324 = vpop.f32.mrb[0].mxu0
  %v325 = vadd.f32 %v55, %v324
  %v326 = vpop.f32.mrb[0].mxu0
  %327 = vmatprep.mubr.bf16.mxu0 %v279
  %328 = vmatmul.mubr.bf16.gmra.mrb[0].mxu0 %v265
  %v329 = vpop.f32.mrb[0].mxu0
  %v330 = vadd.f32 %v55, %v329
  %v331 = vpop.f32.mrb[0].mxu0
  %v332 = vpop.f32.mrb[0].mxu0
  %v333 = vadd.f32 %v55, %v332
  %v334 = vpop.f32.mrb[0].mxu0
  %335 = vmatprep.mubr.bf16.mxu0 %v282
  %336 = vmatmul.mubr.bf16.gmra.mrb[0].mxu0 %v267
  %v337 = vpop.f32.mrb[0].mxu0
  %v338 = vadd.f32 %v55, %v337
  %v339 = vpop.f32.mrb[0].mxu0
  %v340 = vpop.f32.mrb[0].mxu0
  %v341 = vadd.f32 %v55, %v340
  %v342 = vpop.f32.mrb[0].mxu0
  %343 = vmatprep.mubr.bf16.mxu0 %v285
  %344 = vmatmul.mubr.bf16.gmra.mrb[0].mxu0 %v269
  %v345 = vpop.f32.mrb[0].mxu0
  %v346 = vadd.f32 %v55, %v345
  %v347 = vpop.f32.mrb[0].mxu0
  %v348 = vpop.f32.mrb[0].mxu0
  %v349 = vpop.f32.mrb[0].mxu0
  %350 = vdwg.mxu0
  %v351 = vtanh.pop %v322
  %v352 = vtanh.pop %v325
  %v353 = vtanh.pop %v330
  %v354 = vtanh.pop %v333
  %v355 = vtanh.pop %v338
  %v356 = vtanh.pop %v341
  %v357 = vtanh.pop %v346
  %v358 = vadd.f32 %v228, %v351
  %v359 = vadd.f32 %v229, %v352
  %v360 = vadd.f32 %v230, %v353
  %v361 = vadd.f32 %v231, %v354
  %v362 = vadd.f32 %v232, %v355
  %v363 = vadd.f32 %v233, %v356
  %v364 = vadd.f32 %v234, %v357
  %v365 = vld [vmem:[%s2] sm:$0xff]
  %v366 = vld [vmem:[%s2 + $0x8] sm:$0xff]
  %v367 = vld [vmem:[%s2 + $0x10] sm:$0xff]
  %v368 = vld [vmem:[%s2 + $0x18] sm:$0xff]
  %v369 = vld [vmem:[%s2 + $0x20] sm:$0xff]
  %v370 = vld [vmem:[%s2 + $0x28] sm:$0xff]
  %v371 = vld [vmem:[%s2 + $0x30] sm:$0x11]
  %v379 = vunpack.c.l.b16 %v365
  %v380 = vunpack.c.h.b16 %v365
  %v381 = vunpack.c.l.b16 %v366
  %v382 = vunpack.c.h.b16 %v366
  %v383 = vunpack.c.l.b16 %v367
  %v384 = vunpack.c.h.b16 %v367
  %v385 = vunpack.c.l.b16 %v368
  %v386 = vunpack.c.h.b16 %v368
  %v387 = vunpack.c.l.b16 %v369
  %v388 = vunpack.c.h.b16 %v369
  %v389 = vunpack.c.l.b16 %v370
  %v390 = vunpack.c.h.b16 %v370
  %v391 = vunpack.c.l.b16 %v371
  %v392 = vunpack.c.h.b16 %v371
  %v393 = vpack.c.b16 %v381, %v379
  %v394 = vpack.c.b16 %v382, %v380
  %v395 = vpack.c.b16 %v385, %v383
  %v396 = vpack.c.b16 %v386, %v384
  %v397 = vpack.c.b16 %v389, %v387
  %v398 = vpack.c.b16 %v390, %v388
  %v399 = vpack.c.b16 %v391, %v391
  %v400 = vpack.c.b16 %v392, %v392
  %v406 = vsel %vm147, %v394, 0
  %v409 = vsel %vm147, %v396, 0
  %v412 = vsel %vm147, %v398, 0
  %v415 = vsel %vm147, %v400, 0
  %417 = vmatprep.subr.bf16.mxu0 0
  %418 = vmatpush1.bf16.msra.mxu0 %v128
  %419 = vmatprep.subr.bf16.mxu0 0
  %420 = vmatpush1.bf16.msra.mxu0 %v129
  %421 = vmatprep.subr.bf16.mxu0 0
  %422 = vmatpush1.bf16.msra.mxu0 %v130
  %423 = vmatprep.subr.bf16.mxu0 0
  %424 = vmatpush1.bf16.msra.mxu0 %v131
  %425 = vmatprep.subr.bf16.mxu0 0
  %426 = vmatpush1.bf16.msra.mxu0 %v132
  %427 = vmatprep.subr.bf16.mxu0 0
  %428 = vmatpush1.bf16.msra.mxu0 %v133
  %429 = vmatprep.subr.bf16.mxu0 0
  %430 = vmatpush1.bf16.msra.mxu0 %v134
  %431 = vmatprep.subr.bf16.mxu0 0
  %432 = vmatpush1.bf16.msra.mxu0 %v135
  %433 = vmatprep.subr.bf16.mxu0 0
  %434 = vmatpush1.bf16.msra.mxu0 %v136
  %435 = vmatprep.subr.bf16.mxu0 0
  %436 = vmatpush1.bf16.msra.mxu0 %v162
  %437 = vmatprep.subr.bf16.mxu0 0
  %438 = vmatpush1.bf16.msra.mxu0 0
  %439 = vmatprep.subr.bf16.mxu0 0
  %440 = vmatpush1.bf16.msra.mxu0 0
  %441 = vmatprep.subr.bf16.mxu0 0
  %442 = vmatpush1.bf16.msra.mxu0 0
  %443 = vmatprep.subr.bf16.mxu0 0
  %444 = vmatpush1.bf16.msra.mxu0 0
  %445 = vmatprep.subr.bf16.mxu0 0
  %446 = vmatpush1.bf16.msra.mxu0 0
  %447 = vmatprep.subr.bf16.mxu0 0
  %448 = vmatpush1.bf16.msra.mxu0 0
  %449 = vmatprep.mubr.bf16.mxu0 %v406
  %450 = vmatmul.mubr.bf16.gmra.mrb[0].mxu0 %v393
  %v451 = vpop.f32.mrb[0].mxu0
  %v452 = vadd.f32 %v55, %v451
  %v453 = vpop.f32.mrb[0].mxu0
  %v454 = vpop.f32.mrb[0].mxu0
  %v455 = vadd.f32 %v55, %v454
  %v456 = vpop.f32.mrb[0].mxu0
  %457 = vmatprep.mubr.bf16.mxu0 %v409
  %458 = vmatmul.mubr.bf16.gmra.mrb[0].mxu0 %v395
  %v459 = vpop.f32.mrb[0].mxu0
  %v460 = vadd.f32 %v55, %v459
  %v461 = vpop.f32.mrb[0].mxu0
  %v462 = vpop.f32.mrb[0].mxu0
  %v463 = vadd.f32 %v55, %v462
  %v464 = vpop.f32.mrb[0].mxu0
  %465 = vmatprep.mubr.bf16.mxu0 %v412
  %466 = vmatmul.mubr.bf16.gmra.mrb[0].mxu0 %v397
  %v467 = vpop.f32.mrb[0].mxu0
  %v468 = vadd.f32 %v55, %v467
  %v469 = vpop.f32.mrb[0].mxu0
  %v470 = vpop.f32.mrb[0].mxu0
  %v471 = vadd.f32 %v55, %v470
  %v472 = vpop.f32.mrb[0].mxu0
  %473 = vmatprep.mubr.bf16.mxu0 %v415
  %474 = vmatmul.mubr.bf16.gmra.mrb[0].mxu0 %v399
  %v475 = vpop.f32.mrb[0].mxu0
  %v476 = vadd.f32 %v55, %v475
  %v477 = vpop.f32.mrb[0].mxu0
  %v478 = vpop.f32.mrb[0].mxu0
  %v479 = vpop.f32.mrb[0].mxu0
  %480 = vdwg.mxu0
  %v481 = vtanh.pop %v452
  %v482 = vtanh.pop %v455
  %v483 = vtanh.pop %v460
  %v484 = vtanh.pop %v463
  %v485 = vtanh.pop %v468
  %v486 = vtanh.pop %v471
  %v487 = vtanh.pop %v476
  %v488 = vadd.f32 %v358, %v481
  %v489 = vadd.f32 %v359, %v482
  %v490 = vadd.f32 %v360, %v483
  %v491 = vadd.f32 %v361, %v484
  %v492 = vadd.f32 %v362, %v485
  %v493 = vadd.f32 %v363, %v486
  %v494 = vadd.f32 %v364, %v487
  %v495 = vld [vmem:[%s3] sm:$0xff]
  %v496 = vld [vmem:[%s3 + $0x8] sm:$0xff]
  %v497 = vld [vmem:[%s3 + $0x10] sm:$0xff]
  %v498 = vld [vmem:[%s3 + $0x18] sm:$0xff]
  %v499 = vld [vmem:[%s3 + $0x20] sm:$0xff]
  %v500 = vld [vmem:[%s3 + $0x28] sm:$0xff]
  %v501 = vld [vmem:[%s3 + $0x30] sm:$0x11]
  %v509 = vunpack.c.l.b16 %v495
  %v510 = vunpack.c.h.b16 %v495
  %v511 = vunpack.c.l.b16 %v496
  %v512 = vunpack.c.h.b16 %v496
  %v513 = vunpack.c.l.b16 %v497
  %v514 = vunpack.c.h.b16 %v497
  %v515 = vunpack.c.l.b16 %v498
  %v516 = vunpack.c.h.b16 %v498
  %v517 = vunpack.c.l.b16 %v499
  %v518 = vunpack.c.h.b16 %v499
  %v519 = vunpack.c.l.b16 %v500
  %v520 = vunpack.c.h.b16 %v500
  %v521 = vunpack.c.l.b16 %v501
  %v522 = vunpack.c.h.b16 %v501
  %v523 = vpack.c.b16 %v511, %v509
  %v524 = vpack.c.b16 %v512, %v510
  %v525 = vpack.c.b16 %v515, %v513
  %v526 = vpack.c.b16 %v516, %v514
  %v527 = vpack.c.b16 %v519, %v517
  %v528 = vpack.c.b16 %v520, %v518
  %v529 = vpack.c.b16 %v521, %v521
  %v530 = vpack.c.b16 %v522, %v522
  %v536 = vsel %vm147, %v524, 0
  %v539 = vsel %vm147, %v526, 0
  %v542 = vsel %vm147, %v528, 0
  %v545 = vsel %vm147, %v530, 0
  %547 = vmatprep.subr.bf16.mxu0 0
  %548 = vmatpush1.bf16.msra.mxu0 %v128
  %549 = vmatprep.subr.bf16.mxu0 0
  %550 = vmatpush1.bf16.msra.mxu0 %v129
  %551 = vmatprep.subr.bf16.mxu0 0
  %552 = vmatpush1.bf16.msra.mxu0 %v130
  %553 = vmatprep.subr.bf16.mxu0 0
  %554 = vmatpush1.bf16.msra.mxu0 %v131
  %555 = vmatprep.subr.bf16.mxu0 0
  %556 = vmatpush1.bf16.msra.mxu0 %v132
  %557 = vmatprep.subr.bf16.mxu0 0
  %558 = vmatpush1.bf16.msra.mxu0 %v133
  %559 = vmatprep.subr.bf16.mxu0 0
  %560 = vmatpush1.bf16.msra.mxu0 %v134
  %561 = vmatprep.subr.bf16.mxu0 0
  %562 = vmatpush1.bf16.msra.mxu0 %v135
  %563 = vmatprep.subr.bf16.mxu0 0
  %564 = vmatpush1.bf16.msra.mxu0 %v136
  %565 = vmatprep.subr.bf16.mxu0 0
  %566 = vmatpush1.bf16.msra.mxu0 %v162
  %567 = vmatprep.subr.bf16.mxu0 0
  %568 = vmatpush1.bf16.msra.mxu0 0
  %569 = vmatprep.subr.bf16.mxu0 0
  %570 = vmatpush1.bf16.msra.mxu0 0
  %571 = vmatprep.subr.bf16.mxu0 0
  %572 = vmatpush1.bf16.msra.mxu0 0
  %573 = vmatprep.subr.bf16.mxu0 0
  %574 = vmatpush1.bf16.msra.mxu0 0
  %575 = vmatprep.subr.bf16.mxu0 0
  %576 = vmatpush1.bf16.msra.mxu0 0
  %577 = vmatprep.subr.bf16.mxu0 0
  %578 = vmatpush1.bf16.msra.mxu0 0
  %579 = vmatprep.mubr.bf16.mxu0 %v536
  %580 = vmatmul.mubr.bf16.gmra.mrb[0].mxu0 %v523
  %v581 = vpop.f32.mrb[0].mxu0
  %v582 = vadd.f32 %v55, %v581
  %v583 = vpop.f32.mrb[0].mxu0
  %v584 = vpop.f32.mrb[0].mxu0
  %v585 = vadd.f32 %v55, %v584
  %v586 = vpop.f32.mrb[0].mxu0
  %587 = vmatprep.mubr.bf16.mxu0 %v539
  %588 = vmatmul.mubr.bf16.gmra.mrb[0].mxu0 %v525
  %v589 = vpop.f32.mrb[0].mxu0
  %v590 = vadd.f32 %v55, %v589
  %v591 = vpop.f32.mrb[0].mxu0
  %v592 = vpop.f32.mrb[0].mxu0
  %v593 = vadd.f32 %v55, %v592
  %v594 = vpop.f32.mrb[0].mxu0
  %595 = vmatprep.mubr.bf16.mxu0 %v542
  %596 = vmatmul.mubr.bf16.gmra.mrb[0].mxu0 %v527
  %v597 = vpop.f32.mrb[0].mxu0
  %v598 = vadd.f32 %v55, %v597
  %v599 = vpop.f32.mrb[0].mxu0
  %v600 = vpop.f32.mrb[0].mxu0
  %v601 = vadd.f32 %v55, %v600
  %v602 = vpop.f32.mrb[0].mxu0
  %603 = vmatprep.mubr.bf16.mxu0 %v545
  %604 = vmatmul.mubr.bf16.gmra.mrb[0].mxu0 %v529
  %v605 = vpop.f32.mrb[0].mxu0
  %v606 = vadd.f32 %v55, %v605
  %v607 = vpop.f32.mrb[0].mxu0
  %v608 = vpop.f32.mrb[0].mxu0
  %v609 = vpop.f32.mrb[0].mxu0
  %610 = vdwg.mxu0
  %v611 = vtanh.pop %v582
  %v612 = vtanh.pop %v585
  %v613 = vtanh.pop %v590
  %v614 = vtanh.pop %v593
  %v615 = vtanh.pop %v598
  %v616 = vtanh.pop %v601
  %v617 = vtanh.pop %v606
  %v618 = vadd.f32 %v488, %v611
  %v619 = vadd.f32 %v489, %v612
  %v620 = vadd.f32 %v490, %v613
  %v621 = vadd.f32 %v491, %v614
  %v622 = vadd.f32 %v492, %v615
  %v623 = vadd.f32 %v493, %v616
  %v624 = vadd.f32 %v494, %v617
  %v625 = vmul.f32 %v618, 0.25
  %v626 = vmul.f32 %v619, 0.25
  %v627 = vmul.f32 %v620, 0.25
  %v628 = vmul.f32 %v621, 0.25
  %v629 = vmul.f32 %v622, 0.25
  %v630 = vmul.f32 %v623, 0.25
  %v631 = vmul.f32 %v624, 0.25
  %632 = vst [vmem:[%s6] sm:$0xff] %v625
  %633 = vst [vmem:[%s6 + $0x8] sm:$0xff] %v626
  %634 = vst [vmem:[%s6 + $0x10] sm:$0xff] %v627
  %635 = vst [vmem:[%s6 + $0x18] sm:$0xff] %v628
  %636 = vst [vmem:[%s6 + $0x20] sm:$0xff] %v629
  %637 = vst [vmem:[%s6 + $0x28] sm:$0xff] %v630
  %638 = vst [vmem:[%s6 + $0x30] sm:$0x3] %v631
  // Predicated region
  $region26: #{_lambda_.4} parent=0 // pred_check
    _
  $region27: #{_lambda_.4} parent=0 // pred_check_branch
    %640 = sbr.rel (0) target = $region29
  $region28: #{_lambda_.4} parent=0 // pred_region
    _
  $region29: #{_lambda_.4} parent=0 // pred_fallthru
    _
  // Predicated region
  $region30: #{_lambda_.4} parent=0 // pred_check
    _
  $region31: #{_lambda_.4} parent=0 // pred_check_branch
    %642 = sbr.rel (0) target = $region33
  $region32: #{_lambda_.4} parent=0 // pred_region
    _
  $region33: #{_lambda_.4} parent=0 // pred_fallthru
    _

// kernel: _lambda_.5
$region0: #{_lambda_.5}
  #allocation0 [shape = 'u32[]', space=smem, size = 0x4, offset = 0x4, fixed_abs, tag = 'smem constant byte address 0x4 - core index']
  #allocation1 [shape = 'u32[144,128]{1,0:T(1,128)}', space=vmem, size = 0x12000, scoped, tag = 'internal scratch']
  %s0 = inlined_call_operand.vmem [shape: bf16[2,3200], index: 0, kind: input, shape index: {}]
  %s1 = inlined_call_operand.vmem [shape: bf16[3200,128], index: 1, kind: input, shape index: {}]
  %s2 = inlined_call_operand.vmem [shape: f32[1,128], index: 2, kind: input, shape index: {}]
  %s3 = inlined_call_operand.vmem [shape: bf16[128,128], index: 3, kind: input, shape index: {}]
  %s4 = inlined_call_operand.vmem [shape: f32[1,128], index: 4, kind: input, shape index: {}]
  %s5 = inlined_call_operand.vmem [shape: bf16[128,128], index: 5, kind: input, shape index: {}]
  %s6 = inlined_call_operand.vmem [shape: f32[1,128], index: 6, kind: input, shape index: {}]
  %s7 = inlined_call_operand.hbm [shape: f32[2,128], index: 7, kind: output, shape index: {}]
  %s8 = sld [smem:[#allocation0]]
  $region38: #{_lambda_.5} parent=0
    _
  %s10 = ssub.s32 1, %s8
  %s11 = scalar_select 0, %s10, %s8
  $region1: #{_lambda_.5} parent=0
    #allocation2 [shape = 'u8[1024]{0}', space=vmem, size = 0x400, scoped, tag = 'output window, operand 0, single buffered']
    #allocation3 [shape = 's32[1]{0}', space=sflag, size = 0x4, scoped, tag = 'scoped memory for _lambda_.5']
    %12 = vsyncpa [#allocation3], 0
    // Predicated region
    $region2: #{_lambda_.5} parent=1 // pred_check
      _
    $region3: #{_lambda_.5} parent=1 // pred_check_branch
      %14 = sbr.rel (0) target = $region5
    $region4: #{_lambda_.5} parent=1 // pred_region
      _
    $region5: #{_lambda_.5} parent=1 // pred_fallthru
      _
    // Predicated region
    $region6: #{_lambda_.5} parent=1 // pred_check
      _
    $region7: #{_lambda_.5} parent=1 // pred_check_branch
      %16 = sbr.rel (0) target = $region9
    $region8: #{_lambda_.5} parent=1 // pred_region
      _
    $region9: #{_lambda_.5} parent=1 // pred_fallthru
      _
    // Predicated region
    $region10: #{_lambda_.5} parent=1 // pred_check
      _
    $region11: #{_lambda_.5} parent=1 // pred_check_branch
      %18 = sbr.rel (0) target = $region13
    $region12: #{_lambda_.5} parent=1 // pred_region
      _
    $region13: #{_lambda_.5} parent=1 // pred_fallthru
      _
    // Predicated region
    $region14: #{_lambda_.5} parent=1 // pred_check
      _
    $region15: #{_lambda_.5} parent=1 // pred_check_branch
      %20 = sbr.rel (0) target = $region17
    $region16: #{_lambda_.5} parent=1 // pred_region
      _
    $region17: #{_lambda_.5} parent=1 // pred_fallthru
      _
    // Predicated region
    $region18: #{_lambda_.5} parent=1 // pred_check
      _
    $region19: #{_lambda_.5} parent=1 // pred_check_branch
      %22 = sbr.rel (0) target = $region21
    $region20: #{_lambda_.5} parent=1 // pred_region
      _
    $region21: #{_lambda_.5} parent=1 // pred_fallthru
      _
    // Predicated region
    $region22: #{_lambda_.5} parent=1 // pred_check
      _
    $region23: #{_lambda_.5} parent=1 // pred_check_branch
      %24 = sbr.rel (0) target = $region25
    $region24: #{_lambda_.5} parent=1 // pred_region
      _
    $region25: #{_lambda_.5} parent=1 // pred_fallthru
      _
    // Predicated region
    $region26: #{_lambda_.5} parent=1 // pred_check
      _
    $region27: #{_lambda_.5} parent=1 // pred_check_branch
      %26 = sbr.rel (0) target = $region29
    $region28: #{_lambda_.5} parent=1 // pred_region
      _
    $region29: #{_lambda_.5} parent=1 // pred_fallthru
      _
    %v28 = vld [vmem:[%s0] sm:$0xff]
    %v29 = vld [vmem:[%s0 + $0x8] sm:$0xff]
    %v30 = vld [vmem:[%s0 + $0x10] sm:$0xff]
    %v31 = vld [vmem:[%s0 + $0x18] sm:$0x1]
    %v32 = vld [vmem:[%s1] sm:$0xf]
    %v33 = vld [vmem:[%s1 + $0x4] sm:$0xf]
    %v34 = vld [vmem:[%s1 + $0x8] sm:$0xf]
    %v35 = vld [vmem:[%s1 + $0xc] sm:$0xf]
    %v36 = vld [vmem:[%s1 + $0x10] sm:$0xf]
    %v37 = vld [vmem:[%s1 + $0x14] sm:$0xf]
    %v38 = vld [vmem:[%s1 + $0x18] sm:$0xf]
    %v39 = vld [vmem:[%s1 + $0x1c] sm:$0xf]
    %v40 = vld [vmem:[%s1 + $0x20] sm:$0xf]
    %v41 = vld [vmem:[%s1 + $0x24] sm:$0xf]
    %v42 = vld [vmem:[%s1 + $0x28] sm:$0xf]
    %v43 = vld [vmem:[%s1 + $0x2c] sm:$0xf]
    %v44 = vld [vmem:[%s1 + $0x30] sm:$0xf]
    %v45 = vld [vmem:[%s1 + $0x34] sm:$0xf]
    %v46 = vld [vmem:[%s1 + $0x38] sm:$0xf]
    %v47 = vld [vmem:[%s1 + $0x3c] sm:$0xf]
    %v48 = vld [vmem:[%s1 + $0x40] sm:$0xf]
    %v49 = vld [vmem:[%s1 + $0x44] sm:$0xf]
    %v50 = vld [vmem:[%s1 + $0x48] sm:$0xf]
    %v51 = vld [vmem:[%s1 + $0x4c] sm:$0xf]
    %v52 = vld [vmem:[%s1 + $0x50] sm:$0xf]
    %v53 = vld [vmem:[%s1 + $0x54] sm:$0xf]
    %v54 = vld [vmem:[%s1 + $0x58] sm:$0xf]
    %v55 = vld [vmem:[%s1 + $0x5c] sm:$0xf]
    %v56 = vld [vmem:[%s1 + $0x60] sm:$0xf]
    %v57 = vld [vmem:[%s1 + $0x64] sm:$0xf]
    %v58 = vld [vmem:[%s1 + $0x68] sm:$0xf]
    %v59 = vld [vmem:[%s1 + $0x6c] sm:$0xf]
    %v60 = vld [vmem:[%s1 + $0x70] sm:$0xf]
    %v61 = vld [vmem:[%s1 + $0x74] sm:$0xf]
    %v62 = vld [vmem:[%s1 + $0x78] sm:$0xf]
    %v63 = vld [vmem:[%s1 + $0x7c] sm:$0xf]
    %v64 = vld [vmem:[%s1 + $0x80] sm:$0xf]
    %v65 = vld [vmem:[%s1 + $0x84] sm:$0xf]
    %v66 = vld [vmem:[%s1 + $0x88] sm:$0xf]
    %v67 = vld [vmem:[%s1 + $0x8c] sm:$0xf]
    %v68 = vld [vmem:[%s1 + $0x90] sm:$0xf]
    %v69 = vld [vmem:[%s1 + $0x94] sm:$0xf]
    %v70 = vld [vmem:[%s1 + $0x98] sm:$0xf]
    %v71 = vld [vmem:[%s1 + $0x9c] sm:$0xf]
    %v72 = vld [vmem:[%s1 + $0xa0] sm:$0xf]
    %v73 = vld [vmem:[%s1 + $0xa4] sm:$0xf]
    %v74 = vld [vmem:[%s1 + $0xa8] sm:$0xf]
    %v75 = vld [vmem:[%s1 + $0xac] sm:$0xf]
    %v76 = vld [vmem:[%s1 + $0xb0] sm:$0xf]
    %v77 = vld [vmem:[%s1 + $0xb4] sm:$0xf]
    %v78 = vld [vmem:[%s1 + $0xb8] sm:$0xf]
    %v79 = vld [vmem:[%s1 + $0xbc] sm:$0xf]
    %v80 = vld [vmem:[%s1 + $0xc0] sm:$0xf]
    %v81 = vld [vmem:[%s1 + $0xc4] sm:$0xf]
    %v82 = vld [vmem:[%s1 + $0xc8] sm:$0xf]
    %v83 = vld [vmem:[%s1 + $0xcc] sm:$0xf]
    %v84 = vld [vmem:[%s1 + $0xd0] sm:$0xf]
    %v85 = vld [vmem:[%s1 + $0xd4] sm:$0xf]
    %v86 = vld [vmem:[%s1 + $0xd8] sm:$0xf]
    %v87 = vld [vmem:[%s1 + $0xdc] sm:$0xf]
    %v88 = vld [vmem:[%s1 + $0xe0] sm:$0xf]
    %v89 = vld [vmem:[%s1 + $0xe4] sm:$0xf]
    %v90 = vld [vmem:[%s1 + $0xe8] sm:$0xf]
    %v91 = vld [vmem:[%s1 + $0xec] sm:$0xf]
    %v92 = vld [vmem:[%s1 + $0xf0] sm:$0xf]
    %v93 = vld [vmem:[%s1 + $0xf4] sm:$0xf]
    %v94 = vld [vmem:[%s1 + $0xf8] sm:$0xf]
    %v95 = vld [vmem:[%s1 + $0xfc] sm:$0xf]
    %v96 = vld [vmem:[%s1 + $0x100] sm:$0xf]
    %v97 = vld [vmem:[%s1 + $0x104] sm:$0xf]
    %v98 = vld [vmem:[%s1 + $0x108] sm:$0xf]
    %v99 = vld [vmem:[%s1 + $0x10c] sm:$0xf]
    %v100 = vld [vmem:[%s1 + $0x110] sm:$0xf]
    %v101 = vld [vmem:[%s1 + $0x114] sm:$0xf]
    %v102 = vld [vmem:[%s1 + $0x118] sm:$0xf]
    %v103 = vld [vmem:[%s1 + $0x11c] sm:$0xf]
    %v104 = vld [vmem:[%s1 + $0x120] sm:$0xf]
    %v105 = vld [vmem:[%s1 + $0x124] sm:$0xf]
    %v106 = vld [vmem:[%s1 + $0x128] sm:$0xf]
    %v107 = vld [vmem:[%s1 + $0x12c] sm:$0xf]
    %v108 = vld [vmem:[%s1 + $0x130] sm:$0xf]
    %v109 = vld [vmem:[%s1 + $0x134] sm:$0xf]
    %v110 = vld [vmem:[%s1 + $0x138] sm:$0xf]
    %v111 = vld [vmem:[%s1 + $0x13c] sm:$0xf]
    %v112 = vld [vmem:[%s1 + $0x140] sm:$0xf]
    %v113 = vld [vmem:[%s1 + $0x144] sm:$0xf]
    %v114 = vld [vmem:[%s1 + $0x148] sm:$0xf]
    %v115 = vld [vmem:[%s1 + $0x14c] sm:$0xf]
    %v116 = vld [vmem:[%s1 + $0x150] sm:$0xf]
    %v117 = vld [vmem:[%s1 + $0x154] sm:$0xf]
    %v118 = vld [vmem:[%s1 + $0x158] sm:$0xf]
    %v119 = vld [vmem:[%s1 + $0x15c] sm:$0xf]
    %v120 = vld [vmem:[%s1 + $0x160] sm:$0xf]
    %v121 = vld [vmem:[%s1 + $0x164] sm:$0xf]
    %v122 = vld [vmem:[%s1 + $0x168] sm:$0xf]
    %v123 = vld [vmem:[%s1 + $0x16c] sm:$0xf]
    %v124 = vld [vmem:[%s1 + $0x170] sm:$0xf]
    %v125 = vld [vmem:[%s1 + $0x174] sm:$0xf]
    %v126 = vld [vmem:[%s1 + $0x178] sm:$0xf]
    %v127 = vld [vmem:[%s1 + $0x17c] sm:$0xf]
    %v128 = vld [vmem:[%s1 + $0x180] sm:$0xf]
    %v129 = vld [vmem:[%s1 + $0x184] sm:$0xf]
    %v130 = vld [vmem:[%s1 + $0x188] sm:$0xf]
    %v131 = vld [vmem:[%s1 + $0x18c] sm:$0xf]
    %v132 = vld [vmem:[%s1 + $0x190] sm:$0xf]
    %v133 = vld [vmem:[%s1 + $0x194] sm:$0xf]
    %v134 = vld [vmem:[%s1 + $0x198] sm:$0xf]
    %v135 = vld [vmem:[%s1 + $0x19c] sm:$0xf]
    %v136 = vld [vmem:[%s1 + $0x1a0] sm:$0xf]
    %v137 = vld [vmem:[%s1 + $0x1a4] sm:$0xf]
    %v138 = vld [vmem:[%s1 + $0x1a8] sm:$0xf]
    %v139 = vld [vmem:[%s1 + $0x1ac] sm:$0xf]
    %v140 = vld [vmem:[%s1 + $0x1b0] sm:$0xf]
    %v141 = vld [vmem:[%s1 + $0x1b4] sm:$0xf]
    %v142 = vld [vmem:[%s1 + $0x1b8] sm:$0xf]
    %v143 = vld [vmem:[%s1 + $0x1bc] sm:$0xf]
    %v144 = vld [vmem:[%s1 + $0x1c0] sm:$0xf]
    %v145 = vld [vmem:[%s1 + $0x1c4] sm:$0xf]
    %v146 = vld [vmem:[%s1 + $0x1c8] sm:$0xf]
    %v147 = vld [vmem:[%s1 + $0x1cc] sm:$0xf]
    %v148 = vld [vmem:[%s1 + $0x1d0] sm:$0xf]
    %v149 = vld [vmem:[%s1 + $0x1d4] sm:$0xf]
    %v150 = vld [vmem:[%s1 + $0x1d8] sm:$0xf]
    %v151 = vld [vmem:[%s1 + $0x1dc] sm:$0xf]
    %v152 = vld [vmem:[%s1 + $0x1e0] sm:$0xf]
    %v153 = vld [vmem:[%s1 + $0x1e4] sm:$0xf]
    %v154 = vld [vmem:[%s1 + $0x1e8] sm:$0xf]
    %v155 = vld [vmem:[%s1 + $0x1ec] sm:$0xf]
    %v156 = vld [vmem:[%s1 + $0x1f0] sm:$0xf]
    %v157 = vld [vmem:[%s1 + $0x1f4] sm:$0xf]
    %v158 = vld [vmem:[%s1 + $0x1f8] sm:$0xf]
    %v159 = vld [vmem:[%s1 + $0x1fc] sm:$0xf]
    %v160 = vld [vmem:[%s1 + $0x200] sm:$0xf]
    %v161 = vld [vmem:[%s1 + $0x204] sm:$0xf]
    %v162 = vld [vmem:[%s1 + $0x208] sm:$0xf]
    %v163 = vld [vmem:[%s1 + $0x20c] sm:$0xf]
    %v164 = vld [vmem:[%s1 + $0x210] sm:$0xf]
    %v165 = vld [vmem:[%s1 + $0x214] sm:$0xf]
    %v166 = vld [vmem:[%s1 + $0x218] sm:$0xf]
    %v167 = vld [vmem:[%s1 + $0x21c] sm:$0xf]
    %v168 = vld [vmem:[%s1 + $0x220] sm:$0xf]
    %v169 = vld [vmem:[%s1 + $0x224] sm:$0xf]
    %v170 = vld [vmem:[%s1 + $0x228] sm:$0xf]
    %v171 = vld [vmem:[%s1 + $0x22c] sm:$0xf]
    %v172 = vld [vmem:[%s1 + $0x230] sm:$0xf]
    %v173 = vld [vmem:[%s1 + $0x234] sm:$0xf]
    %v174 = vld [vmem:[%s1 + $0x238] sm:$0xf]
    %v175 = vld [vmem:[%s1 + $0x23c] sm:$0xf]
    %v176 = vld [vmem:[%s1 + $0x240] sm:$0xf]
    %v177 = vld [vmem:[%s1 + $0x244] sm:$0xf]
    %v178 = vld [vmem:[%s1 + $0x248] sm:$0xf]
    %v179 = vld [vmem:[%s1 + $0x24c] sm:$0xf]
    %v180 = vld [vmem:[%s1 + $0x250] sm:$0xf]
    %v181 = vld [vmem:[%s1 + $0x254] sm:$0xf]
    %v182 = vld [vmem:[%s1 + $0x258] sm:$0xf]
    %v183 = vld [vmem:[%s1 + $0x25c] sm:$0xf]
    %v184 = vld [vmem:[%s1 + $0x260] sm:$0xf]
    %v185 = vld [vmem:[%s1 + $0x264] sm:$0xf]
    %v186 = vld [vmem:[%s1 + $0x268] sm:$0xf]
    %v187 = vld [vmem:[%s1 + $0x26c] sm:$0xf]
    %v188 = vld [vmem:[%s1 + $0x270] sm:$0xf]
    %v189 = vld [vmem:[%s1 + $0x274] sm:$0xf]
    %v190 = vld [vmem:[%s1 + $0x278] sm:$0xf]
    %v191 = vld [vmem:[%s1 + $0x27c] sm:$0xf]
    %v192 = vld [vmem:[%s1 + $0x280] sm:$0xf]
    %v193 = vld [vmem:[%s1 + $0x284] sm:$0xf]
    %v194 = vld [vmem:[%s1 + $0x288] sm:$0xf]
    %v195 = vld [vmem:[%s1 + $0x28c] sm:$0xf]
    %v196 = vld [vmem:[%s1 + $0x290] sm:$0xf]
    %v197 = vld [vmem:[%s1 + $0x294] sm:$0xf]
    %v198 = vld [vmem:[%s1 + $0x298] sm:$0xf]
    %v199 = vld [vmem:[%s1 + $0x29c] sm:$0xf]
    %v200 = vld [vmem:[%s1 + $0x2a0] sm:$0xf]
    %v201 = vld [vmem:[%s1 + $0x2a4] sm:$0xf]
    %v202 = vld [vmem:[%s1 + $0x2a8] sm:$0xf]
    %v203 = vld [vmem:[%s1 + $0x2ac] sm:$0xf]
    %v204 = vld [vmem:[%s1 + $0x2b0] sm:$0xf]
    %v205 = vld [vmem:[%s1 + $0x2b4] sm:$0xf]
    %v206 = vld [vmem:[%s1 + $0x2b8] sm:$0xf]
    %v207 = vld [vmem:[%s1 + $0x2bc] sm:$0xf]
    %v208 = vld [vmem:[%s1 + $0x2c0] sm:$0xf]
    %v209 = vld [vmem:[%s1 + $0x2c4] sm:$0xf]
    %v210 = vld [vmem:[%s1 + $0x2c8] sm:$0xf]
    %v211 = vld [vmem:[%s1 + $0x2cc] sm:$0xf]
    %v212 = vld [vmem:[%s1 + $0x2d0] sm:$0xf]
    %v213 = vld [vmem:[%s1 + $0x2d4] sm:$0xf]
    %v214 = vld [vmem:[%s1 + $0x2d8] sm:$0xf]
    %v215 = vld [vmem:[%s1 + $0x2dc] sm:$0xf]
    %v216 = vld [vmem:[%s1 + $0x2e0] sm:$0xf]
    %v217 = vld [vmem:[%s1 + $0x2e4] sm:$0xf]
    %v218 = vld [vmem:[%s1 + $0x2e8] sm:$0xf]
    %v219 = vld [vmem:[%s1 + $0x2ec] sm:$0xf]
    %v220 = vld [vmem:[%s1 + $0x2f0] sm:$0xf]
    %v221 = vld [vmem:[%s1 + $0x2f4] sm:$0xf]
    %v222 = vld [vmem:[%s1 + $0x2f8] sm:$0xf]
    %v223 = vld [vmem:[%s1 + $0x2fc] sm:$0xf]
    %v224 = vld [vmem:[%s1 + $0x300] sm:$0xf]
    %v225 = vld [vmem:[%s1 + $0x304] sm:$0xf]
    %v226 = vld [vmem:[%s1 + $0x308] sm:$0xf]
    %v227 = vld [vmem:[%s1 + $0x30c] sm:$0xf]
    %v228 = vld [vmem:[%s1 + $0x310] sm:$0xf]
    %v229 = vld [vmem:[%s1 + $0x314] sm:$0xf]
    %v230 = vld [vmem:[%s1 + $0x318] sm:$0xf]
    %v231 = vld [vmem:[%s1 + $0x31c] sm:$0xf]
    %v232 = vld [vmem:[%s1 + $0x320] sm:$0xf]
    %v233 = vld [vmem:[%s1 + $0x324] sm:$0xf]
    %v234 = vld [vmem:[%s1 + $0x328] sm:$0xf]
    %v235 = vld [vmem:[%s1 + $0x32c] sm:$0xf]
    %v236 = vld [vmem:[%s1 + $0x330] sm:$0xf]
    %v237 = vld [vmem:[%s1 + $0x334] sm:$0xf]
    %v238 = vld [vmem:[%s1 + $0x338] sm:$0xf]
    %v239 = vld [vmem:[%s1 + $0x33c] sm:$0xf]
    %v240 = vld [vmem:[%s1 + $0x340] sm:$0xf]
    %v241 = vld [vmem:[%s1 + $0x344] sm:$0xf]
    %v242 = vld [vmem:[%s1 + $0x348] sm:$0xf]
    %v243 = vld [vmem:[%s1 + $0x34c] sm:$0xf]
    %v244 = vld [vmem:[%s1 + $0x350] sm:$0xf]
    %v245 = vld [vmem:[%s1 + $0x354] sm:$0xf]
    %v246 = vld [vmem:[%s1 + $0x358] sm:$0xf]
    %v247 = vld [vmem:[%s1 + $0x35c] sm:$0xf]
    %v248 = vld [vmem:[%s1 + $0x360] sm:$0xf]
    %v249 = vld [vmem:[%s1 + $0x364] sm:$0xf]
    %v250 = vld [vmem:[%s1 + $0x368] sm:$0xf]
    %v251 = vld [vmem:[%s1 + $0x36c] sm:$0xf]
    %v252 = vld [vmem:[%s1 + $0x370] sm:$0xf]
    %v253 = vld [vmem:[%s1 + $0x374] sm:$0xf]
    %v254 = vld [vmem:[%s1 + $0x378] sm:$0xf]
    %v255 = vld [vmem:[%s1 + $0x37c] sm:$0xf]
    %v256 = vld [vmem:[%s1 + $0x380] sm:$0xf]
    %v257 = vld [vmem:[%s1 + $0x384] sm:$0xf]
    %v258 = vld [vmem:[%s1 + $0x388] sm:$0xf]
    %v259 = vld [vmem:[%s1 + $0x38c] sm:$0xf]
    %v260 = vld [vmem:[%s1 + $0x390] sm:$0xf]
    %v261 = vld [vmem:[%s1 + $0x394] sm:$0xf]
    %v262 = vld [vmem:[%s1 + $0x398] sm:$0xf]
    %v263 = vld [vmem:[%s1 + $0x39c] sm:$0xf]
    %v264 = vld [vmem:[%s1 + $0x3a0] sm:$0xf]
    %v265 = vld [vmem:[%s1 + $0x3a4] sm:$0xf]
    %v266 = vld [vmem:[%s1 + $0x3a8] sm:$0xf]
    %v267 = vld [vmem:[%s1 + $0x3ac] sm:$0xf]
    %v268 = vld [vmem:[%s1 + $0x3b0] sm:$0xf]
    %v269 = vld [vmem:[%s1 + $0x3b4] sm:$0xf]
    %v270 = vld [vmem:[%s1 + $0x3b8] sm:$0xf]
    %v271 = vld [vmem:[%s1 + $0x3bc] sm:$0xf]
    %v272 = vld [vmem:[%s1 + $0x3c0] sm:$0xf]
    %v273 = vld [vmem:[%s1 + $0x3c4] sm:$0xf]
    %v274 = vld [vmem:[%s1 + $0x3c8] sm:$0xf]
    %v275 = vld [vmem:[%s1 + $0x3cc] sm:$0xf]
    %v276 = vld [vmem:[%s1 + $0x3d0] sm:$0xf]
    %v277 = vld [vmem:[%s1 + $0x3d4] sm:$0xf]
    %v278 = vld [vmem:[%s1 + $0x3d8] sm:$0xf]
    %v279 = vld [vmem:[%s1 + $0x3dc] sm:$0xf]
    %v280 = vld [vmem:[%s1 + $0x3e0] sm:$0xf]
    %v281 = vld [vmem:[%s1 + $0x3e4] sm:$0xf]
    %v282 = vld [vmem:[%s1 + $0x3e8] sm:$0xf]
    %v283 = vld [vmem:[%s1 + $0x3ec] sm:$0xf]
    %v284 = vld [vmem:[%s1 + $0x3f0] sm:$0xf]
    %v285 = vld [vmem:[%s1 + $0x3f4] sm:$0xf]
    %v286 = vld [vmem:[%s1 + $0x3f8] sm:$0xf]
    %v287 = vld [vmem:[%s1 + $0x3fc] sm:$0xf]
    %v288 = vld [vmem:[%s1 + $0x400] sm:$0xf]
    %v289 = vld [vmem:[%s1 + $0x404] sm:$0xf]
    %v290 = vld [vmem:[%s1 + $0x408] sm:$0xf]
    %v291 = vld [vmem:[%s1 + $0x40c] sm:$0xf]
    %v292 = vld [vmem:[%s1 + $0x410] sm:$0xf]
    %v293 = vld [vmem:[%s1 + $0x414] sm:$0xf]
    %v294 = vld [vmem:[%s1 + $0x418] sm:$0xf]
    %v295 = vld [vmem:[%s1 + $0x41c] sm:$0xf]
    %v296 = vld [vmem:[%s1 + $0x420] sm:$0xf]
    %v297 = vld [vmem:[%s1 + $0x424] sm:$0xf]
    %v298 = vld [vmem:[%s1 + $0x428] sm:$0xf]
    %v299 = vld [vmem:[%s1 + $0x42c] sm:$0xf]
    %v300 = vld [vmem:[%s1 + $0x430] sm:$0xf]
    %v301 = vld [vmem:[%s1 + $0x434] sm:$0xf]
    %v302 = vld [vmem:[%s1 + $0x438] sm:$0xf]
    %v303 = vld [vmem:[%s1 + $0x43c] sm:$0xf]
    %v304 = vld [vmem:[%s1 + $0x440] sm:$0xf]
    %v305 = vld [vmem:[%s1 + $0x444] sm:$0xf]
    %v306 = vld [vmem:[%s1 + $0x448] sm:$0xf]
    %v307 = vld [vmem:[%s1 + $0x44c] sm:$0xf]
    %v308 = vld [vmem:[%s1 + $0x450] sm:$0xf]
    %v309 = vld [vmem:[%s1 + $0x454] sm:$0xf]
    %v310 = vld [vmem:[%s1 + $0x458] sm:$0xf]
    %v311 = vld [vmem:[%s1 + $0x45c] sm:$0xf]
    %v312 = vld [vmem:[%s1 + $0x460] sm:$0xf]
    %v313 = vld [vmem:[%s1 + $0x464] sm:$0xf]
    %v314 = vld [vmem:[%s1 + $0x468] sm:$0xf]
    %v315 = vld [vmem:[%s1 + $0x46c] sm:$0xf]
    %v316 = vld [vmem:[%s1 + $0x470] sm:$0xf]
    %v317 = vld [vmem:[%s1 + $0x474] sm:$0xf]
    %v318 = vld [vmem:[%s1 + $0x478] sm:$0xf]
    %v319 = vld [vmem:[%s1 + $0x47c] sm:$0xf]
    %v320 = vld [vmem:[%s1 + $0x480] sm:$0xf]
    %v321 = vld [vmem:[%s1 + $0x484] sm:$0xf]
    %v322 = vld [vmem:[%s1 + $0x488] sm:$0xf]
    %v323 = vld [vmem:[%s1 + $0x48c] sm:$0xf]
    %v324 = vld [vmem:[%s1 + $0x490] sm:$0xf]
    %v325 = vld [vmem:[%s1 + $0x494] sm:$0xf]
    %v326 = vld [vmem:[%s1 + $0x498] sm:$0xf]
    %v327 = vld [vmem:[%s1 + $0x49c] sm:$0xf]
    %v328 = vld [vmem:[%s1 + $0x4a0] sm:$0xf]
    %v329 = vld [vmem:[%s1 + $0x4a4] sm:$0xf]
    %v330 = vld [vmem:[%s1 + $0x4a8] sm:$0xf]
    %v331 = vld [vmem:[%s1 + $0x4ac] sm:$0xf]
    %v332 = vld [vmem:[%s1 + $0x4b0] sm:$0xf]
    %v333 = vld [vmem:[%s1 + $0x4b4] sm:$0xf]
    %v334 = vld [vmem:[%s1 + $0x4b8] sm:$0xf]
    %v335 = vld [vmem:[%s1 + $0x4bc] sm:$0xf]
    %v336 = vld [vmem:[%s1 + $0x4c0] sm:$0xf]
    %v337 = vld [vmem:[%s1 + $0x4c4] sm:$0xf]
    %v338 = vld [vmem:[%s1 + $0x4c8] sm:$0xf]
    %v339 = vld [vmem:[%s1 + $0x4cc] sm:$0xf]
    %v340 = vld [vmem:[%s1 + $0x4d0] sm:$0xf]
    %v341 = vld [vmem:[%s1 + $0x4d4] sm:$0xf]
    %v342 = vld [vmem:[%s1 + $0x4d8] sm:$0xf]
    %v343 = vld [vmem:[%s1 + $0x4dc] sm:$0xf]
    %v344 = vld [vmem:[%s1 + $0x4e0] sm:$0xf]
    %v345 = vld [vmem:[%s1 + $0x4e4] sm:$0xf]
    %v346 = vld [vmem:[%s1 + $0x4e8] sm:$0xf]
    %v347 = vld [vmem:[%s1 + $0x4ec] sm:$0xf]
    %v348 = vld [vmem:[%s1 + $0x4f0] sm:$0xf]
    %v349 = vld [vmem:[%s1 + $0x4f4] sm:$0xf]
    %v350 = vld [vmem:[%s1 + $0x4f8] sm:$0xf]
    %v351 = vld [vmem:[%s1 + $0x4fc] sm:$0xf]
    %v352 = vld [vmem:[%s1 + $0x500] sm:$0xf]
    %v353 = vld [vmem:[%s1 + $0x504] sm:$0xf]
    %v354 = vld [vmem:[%s1 + $0x508] sm:$0xf]
    %v355 = vld [vmem:[%s1 + $0x50c] sm:$0xf]
    %v356 = vld [vmem:[%s1 + $0x510] sm:$0xf]
    %v357 = vld [vmem:[%s1 + $0x514] sm:$0xf]
    %v358 = vld [vmem:[%s1 + $0x518] sm:$0xf]
    %v359 = vld [vmem:[%s1 + $0x51c] sm:$0xf]
    %v360 = vld [vmem:[%s1 + $0x520] sm:$0xf]
    %v361 = vld [vmem:[%s1 + $0x524] sm:$0xf]
    %v362 = vld [vmem:[%s1 + $0x528] sm:$0xf]
    %v363 = vld [vmem:[%s1 + $0x52c] sm:$0xf]
    %v364 = vld [vmem:[%s1 + $0x530] sm:$0xf]
    %v365 = vld [vmem:[%s1 + $0x534] sm:$0xf]
    %v366 = vld [vmem:[%s1 + $0x538] sm:$0xf]
    %v367 = vld [vmem:[%s1 + $0x53c] sm:$0xf]
    %v368 = vld [vmem:[%s1 + $0x540] sm:$0xf]
    %v369 = vld [vmem:[%s1 + $0x544] sm:$0xf]
    %v370 = vld [vmem:[%s1 + $0x548] sm:$0xf]
    %v371 = vld [vmem:[%s1 + $0x54c] sm:$0xf]
    %v372 = vld [vmem:[%s1 + $0x550] sm:$0xf]
    %v373 = vld [vmem:[%s1 + $0x554] sm:$0xf]
    %v374 = vld [vmem:[%s1 + $0x558] sm:$0xf]
    %v375 = vld [vmem:[%s1 + $0x55c] sm:$0xf]
    %v376 = vld [vmem:[%s1 + $0x560] sm:$0xf]
    %v377 = vld [vmem:[%s1 + $0x564] sm:$0xf]
    %v378 = vld [vmem:[%s1 + $0x568] sm:$0xf]
    %v379 = vld [vmem:[%s1 + $0x56c] sm:$0xf]
    %v380 = vld [vmem:[%s1 + $0x570] sm:$0xf]
    %v381 = vld [vmem:[%s1 + $0x574] sm:$0xf]
    %v382 = vld [vmem:[%s1 + $0x578] sm:$0xf]
    %v383 = vld [vmem:[%s1 + $0x57c] sm:$0xf]
    %v384 = vld [vmem:[%s1 + $0x580] sm:$0xf]
    %v385 = vld [vmem:[%s1 + $0x584] sm:$0xf]
    %v386 = vld [vmem:[%s1 + $0x588] sm:$0xf]
    %v387 = vld [vmem:[%s1 + $0x58c] sm:$0xf]
    %v388 = vld [vmem:[%s1 + $0x590] sm:$0xf]
    %v389 = vld [vmem:[%s1 + $0x594] sm:$0xf]
    %v390 = vld [vmem:[%s1 + $0x598] sm:$0xf]
    %v391 = vld [vmem:[%s1 + $0x59c] sm:$0xf]
    %v392 = vld [vmem:[%s1 + $0x5a0] sm:$0xf]
    %v393 = vld [vmem:[%s1 + $0x5a4] sm:$0xf]
    %v394 = vld [vmem:[%s1 + $0x5a8] sm:$0xf]
    %v395 = vld [vmem:[%s1 + $0x5ac] sm:$0xf]
    %v396 = vld [vmem:[%s1 + $0x5b0] sm:$0xf]
    %v397 = vld [vmem:[%s1 + $0x5b4] sm:$0xf]
    %v398 = vld [vmem:[%s1 + $0x5b8] sm:$0xf]
    %v399 = vld [vmem:[%s1 + $0x5bc] sm:$0xf]
    %v400 = vld [vmem:[%s1 + $0x5c0] sm:$0xf]
    %v401 = vld [vmem:[%s1 + $0x5c4] sm:$0xf]
    %v402 = vld [vmem:[%s1 + $0x5c8] sm:$0xf]
    %v403 = vld [vmem:[%s1 + $0x5cc] sm:$0xf]
    %v404 = vld [vmem:[%s1 + $0x5d0] sm:$0xf]
    %v405 = vld [vmem:[%s1 + $0x5d4] sm:$0xf]
    %v406 = vld [vmem:[%s1 + $0x5d8] sm:$0xf]
    %v407 = vld [vmem:[%s1 + $0x5dc] sm:$0xf]
    %v408 = vld [vmem:[%s1 + $0x5e0] sm:$0xf]
    %v409 = vld [vmem:[%s1 + $0x5e4] sm:$0xf]
    %v410 = vld [vmem:[%s1 + $0x5e8] sm:$0xf]
    %v411 = vld [vmem:[%s1 + $0x5ec] sm:$0xf]
    %v412 = vld [vmem:[%s1 + $0x5f0] sm:$0xf]
    %v413 = vld [vmem:[%s1 + $0x5f4] sm:$0xf]
    %v414 = vld [vmem:[%s1 + $0x5f8] sm:$0xf]
    %v415 = vld [vmem:[%s1 + $0x5fc] sm:$0xf]
    %v416 = vld [vmem:[%s1 + $0x600] sm:$0xf]
    %v417 = vld [vmem:[%s1 + $0x604] sm:$0xf]
    %v418 = vld [vmem:[%s1 + $0x608] sm:$0xf]
    %v419 = vld [vmem:[%s1 + $0x60c] sm:$0xf]
    %v420 = vld [vmem:[%s1 + $0x610] sm:$0xf]
    %v421 = vld [vmem:[%s1 + $0x614] sm:$0xf]
    %v422 = vld [vmem:[%s1 + $0x618] sm:$0xf]
    %v423 = vld [vmem:[%s1 + $0x61c] sm:$0xf]
    %v424 = vld [vmem:[%s1 + $0x620] sm:$0xf]
    %v425 = vld [vmem:[%s1 + $0x624] sm:$0xf]
    %v426 = vld [vmem:[%s1 + $0x628] sm:$0xf]
    %v427 = vld [vmem:[%s1 + $0x62c] sm:$0xf]
    %v428 = vld [vmem:[%s1 + $0x630] sm:$0xf]
    %v429 = vld [vmem:[%s1 + $0x634] sm:$0xf]
    %v430 = vld [vmem:[%s1 + $0x638] sm:$0xf]
    %v431 = vld [vmem:[%s1 + $0x63c] sm:$0xf]
    %v432 = vld [vmem:[%s2] sm:$0x1]
    %v434 = vlaneseq
    %v435 = vshrl.u32 %v434, 7
    %v436 = vsub.s32 0, %v435
    %v437 = vrot.slane %v432, %v436
    %v443 = vcombine.high %v28, %v28
    %v445 = vunpack.c.l.s4 1966171168
    %v446 = vunpack.c.0.s8 %v445
    %v447 = vlaneseq
    %v448 = vshrl.u32 %v447, 7
    %v449 = vsub.s32 %v446, %v448
    %v450 = vrot.slane %v28, %v449
    %v452 = vunpack.c.l.s4 1966171168
    %v453 = vunpack.c.0.s8 %v452
    %v454 = vlaneseq
    %v455 = vshrl.u32 %v454, 7
    %v456 = vsub.s32 %v453, %v455
    %v457 = vrot.slane %v443, %v456
    %v458 = vcombine.high %v450, %v450
    %v459 = vcombine.high %v457, %v457
    %v461 = vunpack.c.l.s4 1966171168
    %v462 = vunpack.c.0.s8 %v461
    %v463 = vlaneseq
    %v464 = vshrl.u32 %v463, 7
    %v465 = vsub.s32 %v462, %v464
    %v466 = vrot.slane %v450, %v465
    %v468 = vunpack.c.l.s4 1966171168
    %v469 = vunpack.c.0.s8 %v468
    %v470 = vlaneseq
    %v471 = vshrl.u32 %v470, 7
    %v472 = vsub.s32 %v469, %v471
    %v473 = vrot.slane %v457, %v472
    %v475 = vunpack.c.l.s4 1966171168
    %v476 = vunpack.c.0.s8 %v475
    %v477 = vlaneseq
    %v478 = vshrl.u32 %v477, 7
    %v479 = vsub.s32 %v476, %v478
    %v480 = vrot.slane %v458, %v479
    %v482 = vunpack.c.l.s4 1966171168
    %v483 = vunpack.c.0.s8 %v482
    %v484 = vlaneseq
    %v485 = vshrl.u32 %v484, 7
    %v486 = vsub.s32 %v483, %v485
    %v487 = vrot.slane %v459, %v486
    %v488 = vcombine.high %v466, %v466
    %v489 = vcombine.high %v473, %v473
    %v490 = vcombine.high %v480, %v480
    %v491 = vcombine.high %v487, %v487
    %v492 = vcombine.high %v29, %v29
    %v494 = vunpack.c.l.s4 1966171168
    %v495 = vunpack.c.0.s8 %v494
    %v496 = vlaneseq
    %v497 = vshrl.u32 %v496, 7
    %v498 = vsub.s32 %v495, %v497
    %v499 = vrot.slane %v29, %v498
    %v501 = vunpack.c.l.s4 1966171168
    %v502 = vunpack.c.0.s8 %v501
    %v503 = vlaneseq
    %v504 = vshrl.u32 %v503, 7
    %v505 = vsub.s32 %v502, %v504
    %v506 = vrot.slane %v492, %v505
    %v507 = vcombine.high %v499, %v499
    %v508 = vcombine.high %v506, %v506
    %v510 = vunpack.c.l.s4 1966171168
    %v511 = vunpack.c.0.s8 %v510
    %v512 = vlaneseq
    %v513 = vshrl.u32 %v512, 7
    %v514 = vsub.s32 %v511, %v513
    %v515 = vrot.slane %v499, %v514
    %v517 = vunpack.c.l.s4 1966171168
    %v518 = vunpack.c.0.s8 %v517
    %v519 = vlaneseq
    %v520 = vshrl.u32 %v519, 7
    %v521 = vsub.s32 %v518, %v520
    %v522 = vrot.slane %v506, %v521
    %v524 = vunpack.c.l.s4 1966171168
    %v525 = vunpack.c.0.s8 %v524
    %v526 = vlaneseq
    %v527 = vshrl.u32 %v526, 7
    %v528 = vsub.s32 %v525, %v527
    %v529 = vrot.slane %v507, %v528
    %v531 = vunpack.c.l.s4 1966171168
    %v532 = vunpack.c.0.s8 %v531
    %v533 = vlaneseq
    %v534 = vshrl.u32 %v533, 7
    %v535 = vsub.s32 %v532, %v534
    %v536 = vrot.slane %v508, %v535
    %v537 = vcombine.high %v515, %v515
    %v538 = vcombine.high %v522, %v522
    %v539 = vcombine.high %v529, %v529
    %v540 = vcombine.high %v536, %v536
    %v541 = vcombine.high %v30, %v30
    %v543 = vunpack.c.l.s4 1966171168
    %v544 = vunpack.c.0.s8 %v543
    %v545 = vlaneseq
    %v546 = vshrl.u32 %v545, 7
    %v547 = vsub.s32 %v544, %v546
    %v548 = vrot.slane %v30, %v547
    %v550 = vunpack.c.l.s4 1966171168
    %v551 = vunpack.c.0.s8 %v550
    %v552 = vlaneseq
    %v553 = vshrl.u32 %v552, 7
    %v554 = vsub.s32 %v551, %v553
    %v555 = vrot.slane %v541, %v554
    %v556 = vcombine.high %v548, %v548
    %v557 = vcombine.high %v555, %v555
    %v559 = vunpack.c.l.s4 1966171168
    %v560 = vunpack.c.0.s8 %v559
    %v561 = vlaneseq
    %v562 = vshrl.u32 %v561, 7
    %v563 = vsub.s32 %v560, %v562
    %v564 = vrot.slane %v548, %v563
    %v566 = vunpack.c.l.s4 1966171168
    %v567 = vunpack.c.0.s8 %v566
    %v568 = vlaneseq
    %v569 = vshrl.u32 %v568, 7
    %v570 = vsub.s32 %v567, %v569
    %v571 = vrot.slane %v555, %v570
    %v573 = vunpack.c.l.s4 1966171168
    %v574 = vunpack.c.0.s8 %v573
    %v575 = vlaneseq
    %v576 = vshrl.u32 %v575, 7
    %v577 = vsub.s32 %v574, %v576
    %v578 = vrot.slane %v556, %v577
    %v580 = vunpack.c.l.s4 1966171168
    %v581 = vunpack.c.0.s8 %v580
    %v582 = vlaneseq
    %v583 = vshrl.u32 %v582, 7
    %v584 = vsub.s32 %v581, %v583
    %v585 = vrot.slane %v557, %v584
    %v586 = vcombine.high %v564, %v564
    %v587 = vcombine.high %v571, %v571
    %v588 = vcombine.high %v578, %v578
    %v589 = vcombine.high %v585, %v585
    %v591 = vunpack.c.l.s4 1966171168
    %v592 = vunpack.c.0.s8 %v591
    %v593 = vlaneseq
    %v594 = vshrl.u32 %v593, 7
    %v595 = vsub.s32 %v592, %v594
    %v596 = vrot.slane %v31, %v595
    %v598 = vunpack.c.l.s4 1966171168
    %v599 = vunpack.c.0.s8 %v598
    %v600 = vlaneseq
    %v601 = vshrl.u32 %v600, 7
    %v602 = vsub.s32 %v599, %v601
    %v603 = vrot.slane %v596, %v602
    %v1029 = vunpack.c.l.b16 %v32
    %v1030 = vunpack.c.l.b16 %v33
    %v1031 = vunpack.c.l.b16 %v34
    %v1032 = vunpack.c.l.b16 %v35
    %v1033 = vunpack.c.l.b16 %v36
    %v1034 = vunpack.c.l.b16 %v37
    %v1035 = vunpack.c.l.b16 %v38
    %v1036 = vunpack.c.l.b16 %v39
    %v1037 = vunpack.c.l.b16 %v40
    %v1038 = vunpack.c.l.b16 %v41
    %v1039 = vunpack.c.l.b16 %v42
    %v1040 = vunpack.c.l.b16 %v43
    %v1041 = vunpack.c.l.b16 %v44
    %v1042 = vunpack.c.l.b16 %v45
    %v1043 = vunpack.c.l.b16 %v46
    %v1044 = vunpack.c.l.b16 %v47
    %v1045 = vunpack.c.l.b16 %v48
    %v1046 = vunpack.c.l.b16 %v49
    %v1047 = vunpack.c.l.b16 %v50
    %v1048 = vunpack.c.l.b16 %v51
    %v1049 = vunpack.c.l.b16 %v52
    %v1050 = vunpack.c.l.b16 %v53
    %v1051 = vunpack.c.l.b16 %v54
    %v1052 = vunpack.c.l.b16 %v55
    %v1053 = vunpack.c.l.b16 %v56
    %v1054 = vunpack.c.l.b16 %v57
    %v1055 = vunpack.c.l.b16 %v58
    %v1056 = vunpack.c.l.b16 %v59
    %v1057 = vunpack.c.l.b16 %v60
    %v1058 = vunpack.c.l.b16 %v61
    %v1059 = vunpack.c.l.b16 %v62
    %v1060 = vunpack.c.l.b16 %v63
    %v1061 = vunpack.c.l.b16 %v64
    %v1062 = vunpack.c.l.b16 %v65
    %v1063 = vunpack.c.l.b16 %v66
    %v1064 = vunpack.c.l.b16 %v67
    %v1065 = vunpack.c.l.b16 %v68
    %v1066 = vunpack.c.l.b16 %v69
    %v1067 = vunpack.c.l.b16 %v70
    %v1068 = vunpack.c.l.b16 %v71
    %v1069 = vunpack.c.l.b16 %v72
    %v1070 = vunpack.c.l.b16 %v73
    %v1071 = vunpack.c.l.b16 %v74
    %v1072 = vunpack.c.l.b16 %v75
    %v1073 = vunpack.c.l.b16 %v76
    %v1074 = vunpack.c.l.b16 %v77
    %v1075 = vunpack.c.l.b16 %v78
    %v1076 = vunpack.c.l.b16 %v79
    %v1077 = vunpack.c.l.b16 %v80
    %v1078 = vunpack.c.l.b16 %v81
    %v1079 = vunpack.c.l.b16 %v82
    %v1080 = vunpack.c.l.b16 %v83
    %v1081 = vunpack.c.l.b16 %v84
    %v1082 = vunpack.c.l.b16 %v85
    %v1083 = vunpack.c.l.b16 %v86
    %v1084 = vunpack.c.l.b16 %v87
    %v1085 = vunpack.c.l.b16 %v88
    %v1086 = vunpack.c.l.b16 %v89
    %v1087 = vunpack.c.l.b16 %v90
    %v1088 = vunpack.c.l.b16 %v91
    %v1089 = vunpack.c.l.b16 %v92
    %v1090 = vunpack.c.l.b16 %v93
    %v1091 = vunpack.c.l.b16 %v94
    %v1092 = vunpack.c.l.b16 %v95
    %v1093 = vunpack.c.l.b16 %v96
    %v1094 = vunpack.c.l.b16 %v97
    %v1095 = vunpack.c.l.b16 %v98
    %v1096 = vunpack.c.l.b16 %v99
    %v1097 = vunpack.c.l.b16 %v100
    %v1098 = vunpack.c.l.b16 %v101
    %v1099 = vunpack.c.l.b16 %v102
    %v1100 = vunpack.c.l.b16 %v103
    %v1101 = vunpack.c.l.b16 %v104
    %v1102 = vunpack.c.l.b16 %v105
    %v1103 = vunpack.c.l.b16 %v106
    %v1104 = vunpack.c.l.b16 %v107
    %v1105 = vunpack.c.l.b16 %v108
    %v1106 = vunpack.c.l.b16 %v109
    %v1107 = vunpack.c.l.b16 %v110
    %v1108 = vunpack.c.l.b16 %v111
    %v1109 = vunpack.c.l.b16 %v112
    %v1110 = vunpack.c.l.b16 %v113
    %v1111 = vunpack.c.l.b16 %v114
    %v1112 = vunpack.c.l.b16 %v115
    %v1113 = vunpack.c.l.b16 %v116
    %v1114 = vunpack.c.l.b16 %v117
    %v1115 = vunpack.c.l.b16 %v118
    %v1116 = vunpack.c.l.b16 %v119
    %v1117 = vunpack.c.l.b16 %v120
    %v1118 = vunpack.c.l.b16 %v121
    %v1119 = vunpack.c.l.b16 %v122
    %v1120 = vunpack.c.l.b16 %v123
    %v1121 = vunpack.c.l.b16 %v124
    %v1122 = vunpack.c.l.b16 %v125
    %v1123 = vunpack.c.l.b16 %v126
    %v1124 = vunpack.c.l.b16 %v127
    %v1125 = vunpack.c.l.b16 %v128
    %v1126 = vunpack.c.l.b16 %v129
    %v1127 = vunpack.c.l.b16 %v130
    %v1128 = vunpack.c.l.b16 %v131
    %v1129 = vunpack.c.l.b16 %v132
    %v1130 = vunpack.c.l.b16 %v133
    %v1131 = vunpack.c.l.b16 %v134
    %v1132 = vunpack.c.l.b16 %v135
    %v1133 = vunpack.c.l.b16 %v136
    %v1134 = vunpack.c.l.b16 %v137
    %v1135 = vunpack.c.l.b16 %v138
    %v1136 = vunpack.c.l.b16 %v139
    %v1137 = vunpack.c.l.b16 %v140
    %v1138 = vunpack.c.l.b16 %v141
    %v1139 = vunpack.c.l.b16 %v142
    %v1140 = vunpack.c.l.b16 %v143
    %v1141 = vunpack.c.l.b16 %v144
    %v1142 = vunpack.c.l.b16 %v145
    %v1143 = vunpack.c.l.b16 %v146
    %v1144 = vunpack.c.l.b16 %v147
    %v1145 = vunpack.c.l.b16 %v148
    %v1146 = vunpack.c.l.b16 %v149
    %v1147 = vunpack.c.l.b16 %v150
    %v1148 = vunpack.c.l.b16 %v151
    %v1149 = vunpack.c.l.b16 %v152
    %v1150 = vunpack.c.l.b16 %v153
    %v1151 = vunpack.c.l.b16 %v154
    %v1152 = vunpack.c.l.b16 %v155
    %v1153 = vunpack.c.l.b16 %v156
    %v1154 = vunpack.c.l.b16 %v157
    %v1155 = vunpack.c.l.b16 %v158
    %v1156 = vunpack.c.l.b16 %v159
    %v1157 = vunpack.c.l.b16 %v160
    %v1158 = vunpack.c.l.b16 %v161
    %v1159 = vunpack.c.l.b16 %v162
    %v1160 = vunpack.c.l.b16 %v163
    %v1161 = vunpack.c.l.b16 %v164
    %v1162 = vunpack.c.l.b16 %v165
    %v1163 = vunpack.c.l.b16 %v166
    %v1164 = vunpack.c.l.b16 %v167
    %v1165 = vunpack.c.l.b16 %v168
    %v1166 = vunpack.c.l.b16 %v169
    %v1167 = vunpack.c.l.b16 %v170
    %v1168 = vunpack.c.l.b16 %v171
    %v1169 = vunpack.c.l.b16 %v172
    %v1170 = vunpack.c.l.b16 %v173
    %v1171 = vunpack.c.l.b16 %v174
    %v1172 = vunpack.c.l.b16 %v175
    %v1173 = vunpack.c.l.b16 %v176
    %v1174 = vunpack.c.l.b16 %v177
    %v1175 = vunpack.c.l.b16 %v178
    %v1176 = vunpack.c.l.b16 %v179
    %v1177 = vunpack.c.l.b16 %v180
    %v1178 = vunpack.c.l.b16 %v181
    %v1179 = vunpack.c.l.b16 %v182
    %v1180 = vunpack.c.l.b16 %v183
    %v1181 = vunpack.c.l.b16 %v184
    %v1182 = vunpack.c.l.b16 %v185
    %v1183 = vunpack.c.l.b16 %v186
    %v1184 = vunpack.c.l.b16 %v187
    %v1185 = vunpack.c.l.b16 %v188
    %v1186 = vunpack.c.l.b16 %v189
    %v1187 = vunpack.c.l.b16 %v190
    %v1188 = vunpack.c.l.b16 %v191
    %v1189 = vunpack.c.l.b16 %v192
    %v1190 = vunpack.c.l.b16 %v193
    %v1191 = vunpack.c.l.b16 %v194
    %v1192 = vunpack.c.l.b16 %v195
    %v1193 = vunpack.c.l.b16 %v196
    %v1194 = vunpack.c.l.b16 %v197
    %v1195 = vunpack.c.l.b16 %v198
    %v1196 = vunpack.c.l.b16 %v199
    %v1197 = vunpack.c.l.b16 %v200
    %v1198 = vunpack.c.l.b16 %v201
    %v1199 = vunpack.c.l.b16 %v202
    %v1200 = vunpack.c.l.b16 %v203
    %v1201 = vunpack.c.l.b16 %v204
    %v1202 = vunpack.c.l.b16 %v205
    %v1203 = vunpack.c.l.b16 %v206
    %v1204 = vunpack.c.l.b16 %v207
    %v1205 = vunpack.c.l.b16 %v208
    %v1206 = vunpack.c.l.b16 %v209
    %v1207 = vunpack.c.l.b16 %v210
    %v1208 = vunpack.c.l.b16 %v211
    %v1209 = vunpack.c.l.b16 %v212
    %v1210 = vunpack.c.l.b16 %v213
    %v1211 = vunpack.c.l.b16 %v214
    %v1212 = vunpack.c.l.b16 %v215
    %v1213 = vunpack.c.l.b16 %v216
    %v1214 = vunpack.c.l.b16 %v217
    %v1215 = vunpack.c.l.b16 %v218
    %v1216 = vunpack.c.l.b16 %v219
    %v1217 = vunpack.c.l.b16 %v220
    %v1218 = vunpack.c.l.b16 %v221
    %v1219 = vunpack.c.l.b16 %v222
    %v1220 = vunpack.c.l.b16 %v223
    %v1221 = vunpack.c.l.b16 %v224
    %v1222 = vunpack.c.l.b16 %v225
    %v1223 = vunpack.c.l.b16 %v226
    %v1224 = vunpack.c.l.b16 %v227
    %v1225 = vunpack.c.l.b16 %v228
    %v1226 = vunpack.c.l.b16 %v229
    %v1227 = vunpack.c.l.b16 %v230
    %v1228 = vunpack.c.l.b16 %v231
    %v1229 = vunpack.c.l.b16 %v232
    %v1230 = vunpack.c.l.b16 %v233
    %v1231 = vunpack.c.l.b16 %v234
    %v1232 = vunpack.c.l.b16 %v235
    %v1233 = vunpack.c.l.b16 %v236
    %v1234 = vunpack.c.l.b16 %v237
    %v1235 = vunpack.c.l.b16 %v238
    %v1236 = vunpack.c.l.b16 %v239
    %v1237 = vunpack.c.l.b16 %v240
    %v1238 = vunpack.c.l.b16 %v241
    %v1239 = vunpack.c.l.b16 %v242
    %v1240 = vunpack.c.l.b16 %v243
    %v1241 = vunpack.c.l.b16 %v244
    %v1242 = vunpack.c.l.b16 %v245
    %v1243 = vunpack.c.l.b16 %v246
    %v1244 = vunpack.c.l.b16 %v247
    %v1245 = vunpack.c.l.b16 %v248
    %v1246 = vunpack.c.l.b16 %v249
    %v1247 = vunpack.c.l.b16 %v250
    %v1248 = vunpack.c.l.b16 %v251
    %v1249 = vunpack.c.l.b16 %v252
    %v1250 = vunpack.c.l.b16 %v253
    %v1251 = vunpack.c.l.b16 %v254
    %v1252 = vunpack.c.l.b16 %v255
    %v1253 = vunpack.c.l.b16 %v256
    %v1254 = vunpack.c.l.b16 %v257
    %v1255 = vunpack.c.l.b16 %v258
    %v1256 = vunpack.c.l.b16 %v259
    %v1257 = vunpack.c.l.b16 %v260
    %v1258 = vunpack.c.l.b16 %v261
    %v1259 = vunpack.c.l.b16 %v262
    %v1260 = vunpack.c.l.b16 %v263
    %v1261 = vunpack.c.l.b16 %v264
    %v1262 = vunpack.c.l.b16 %v265
    %v1263 = vunpack.c.l.b16 %v266
    %v1264 = vunpack.c.l.b16 %v267
    %v1265 = vunpack.c.l.b16 %v268
    %v1266 = vunpack.c.l.b16 %v269
    %v1267 = vunpack.c.l.b16 %v270
    %v1268 = vunpack.c.l.b16 %v271
    %v1269 = vunpack.c.l.b16 %v272
    %v1270 = vunpack.c.l.b16 %v273
    %v1271 = vunpack.c.l.b16 %v274
    %v1272 = vunpack.c.l.b16 %v275
    %v1273 = vunpack.c.l.b16 %v276
    %v1274 = vunpack.c.l.b16 %v277
    %v1275 = vunpack.c.l.b16 %v278
    %v1276 = vunpack.c.l.b16 %v279
    %v1277 = vunpack.c.l.b16 %v280
    %v1278 = vunpack.c.l.b16 %v281
    %v1279 = vunpack.c.l.b16 %v282
    %v1280 = vunpack.c.l.b16 %v283
    %v1281 = vunpack.c.l.b16 %v284
    %v1282 = vunpack.c.l.b16 %v285
    %v1283 = vunpack.c.l.b16 %v286
    %v1284 = vunpack.c.l.b16 %v287
    %v1285 = vunpack.c.l.b16 %v288
    %v1286 = vunpack.c.l.b16 %v289
    %v1287 = vunpack.c.l.b16 %v290
    %v1288 = vunpack.c.l.b16 %v291
    %v1289 = vunpack.c.l.b16 %v292
    %v1290 = vunpack.c.l.b16 %v293
    %v1291 = vunpack.c.l.b16 %v294
    %v1292 = vunpack.c.l.b16 %v295
    %v1293 = vunpack.c.l.b16 %v296
    %v1294 = vunpack.c.l.b16 %v297
    %v1295 = vunpack.c.l.b16 %v298
    %v1296 = vunpack.c.l.b16 %v299
    %v1297 = vunpack.c.l.b16 %v300
    %v1298 = vunpack.c.l.b16 %v301
    %v1299 = vunpack.c.l.b16 %v302
    %v1300 = vunpack.c.l.b16 %v303
    %v1301 = vunpack.c.l.b16 %v304
    %v1302 = vunpack.c.l.b16 %v305
    %v1303 = vunpack.c.l.b16 %v306
    %v1304 = vunpack.c.l.b16 %v307
    %v1305 = vunpack.c.l.b16 %v308
    %v1306 = vunpack.c.l.b16 %v309
    %v1307 = vunpack.c.l.b16 %v310
    %v1308 = vunpack.c.l.b16 %v311
    %v1309 = vunpack.c.l.b16 %v312
    %v1310 = vunpack.c.l.b16 %v313
    %v1311 = vunpack.c.l.b16 %v314
    %v1312 = vunpack.c.l.b16 %v315
    %v1313 = vunpack.c.l.b16 %v316
    %v1314 = vunpack.c.l.b16 %v317
    %v1315 = vunpack.c.l.b16 %v318
    %v1316 = vunpack.c.l.b16 %v319
    %v1317 = vunpack.c.l.b16 %v320
    %v1318 = vunpack.c.l.b16 %v321
    %v1319 = vunpack.c.l.b16 %v322
    %v1320 = vunpack.c.l.b16 %v323
    %v1321 = vunpack.c.l.b16 %v324
    %v1322 = vunpack.c.l.b16 %v325
    %v1323 = vunpack.c.l.b16 %v326
    %v1324 = vunpack.c.l.b16 %v327
    %v1325 = vunpack.c.l.b16 %v328
    %v1326 = vunpack.c.l.b16 %v329
    %v1327 = vunpack.c.l.b16 %v330
    %v1328 = vunpack.c.l.b16 %v331
    %v1329 = vunpack.c.l.b16 %v332
    %v1330 = vunpack.c.l.b16 %v333
    %v1331 = vunpack.c.l.b16 %v334
    %v1332 = vunpack.c.l.b16 %v335
    %v1333 = vunpack.c.l.b16 %v336
    %v1334 = vunpack.c.l.b16 %v337
    %v1335 = vunpack.c.l.b16 %v338
    %v1336 = vunpack.c.l.b16 %v339
    %v1337 = vunpack.c.l.b16 %v340
    %v1338 = vunpack.c.l.b16 %v341
    %v1339 = vunpack.c.l.b16 %v342
    %v1340 = vunpack.c.l.b16 %v343
    %v1341 = vunpack.c.l.b16 %v344
    %v1342 = vunpack.c.l.b16 %v345
    %v1343 = vunpack.c.l.b16 %v346
    %v1344 = vunpack.c.l.b16 %v347
    %v1345 = vunpack.c.l.b16 %v348
    %v1346 = vunpack.c.l.b16 %v349
    %v1347 = vunpack.c.l.b16 %v350
    %v1348 = vunpack.c.l.b16 %v351
    %v1349 = vunpack.c.l.b16 %v352
    %v1350 = vunpack.c.l.b16 %v353
    %v1351 = vunpack.c.l.b16 %v354
    %v1352 = vunpack.c.l.b16 %v355
    %v1353 = vunpack.c.l.b16 %v356
    %v1354 = vunpack.c.l.b16 %v357
    %v1355 = vunpack.c.l.b16 %v358
    %v1356 = vunpack.c.l.b16 %v359
    %v1357 = vunpack.c.l.b16 %v360
    %v1358 = vunpack.c.l.b16 %v361
    %v1359 = vunpack.c.l.b16 %v362
    %v1360 = vunpack.c.l.b16 %v363
    %v1361 = vunpack.c.l.b16 %v364
    %v1362 = vunpack.c.l.b16 %v365
    %v1363 = vunpack.c.l.b16 %v366
    %v1364 = vunpack.c.l.b16 %v367
    %v1365 = vunpack.c.l.b16 %v368
    %v1366 = vunpack.c.l.b16 %v369
    %v1367 = vunpack.c.l.b16 %v370
    %v1368 = vunpack.c.l.b16 %v371
    %v1369 = vunpack.c.l.b16 %v372
    %v1370 = vunpack.c.l.b16 %v373
    %v1371 = vunpack.c.l.b16 %v374
    %v1372 = vunpack.c.l.b16 %v375
    %v1373 = vunpack.c.l.b16 %v376
    %v1374 = vunpack.c.l.b16 %v377
    %v1375 = vunpack.c.l.b16 %v378
    %v1376 = vunpack.c.l.b16 %v379
    %v1377 = vunpack.c.l.b16 %v380
    %v1378 = vunpack.c.l.b16 %v381
    %v1379 = vunpack.c.l.b16 %v382
    %v1380 = vunpack.c.l.b16 %v383
    %v1381 = vunpack.c.l.b16 %v384
    %v1382 = vunpack.c.l.b16 %v385
    %v1383 = vunpack.c.l.b16 %v386
    %v1384 = vunpack.c.l.b16 %v387
    %v1385 = vunpack.c.l.b16 %v388
    %v1386 = vunpack.c.l.b16 %v389
    %v1387 = vunpack.c.l.b16 %v390
    %v1388 = vunpack.c.l.b16 %v391
    %v1389 = vunpack.c.l.b16 %v392
    %v1390 = vunpack.c.l.b16 %v393
    %v1391 = vunpack.c.l.b16 %v394
    %v1392 = vunpack.c.l.b16 %v395
    %v1393 = vunpack.c.l.b16 %v396
    %v1394 = vunpack.c.l.b16 %v397
    %v1395 = vunpack.c.l.b16 %v398
    %v1396 = vunpack.c.l.b16 %v399
    %v1397 = vunpack.c.l.b16 %v400
    %v1398 = vunpack.c.l.b16 %v401
    %v1399 = vunpack.c.l.b16 %v402
    %v1400 = vunpack.c.l.b16 %v403
    %v1401 = vunpack.c.l.b16 %v404
    %v1402 = vunpack.c.l.b16 %v405
    %v1403 = vunpack.c.l.b16 %v406
    %v1404 = vunpack.c.l.b16 %v407
    %v1405 = vunpack.c.l.b16 %v408
    %v1406 = vunpack.c.l.b16 %v409
    %v1407 = vunpack.c.l.b16 %v410
    %v1408 = vunpack.c.l.b16 %v411
    %v1409 = vunpack.c.l.b16 %v412
    %v1410 = vunpack.c.l.b16 %v413
    %v1411 = vunpack.c.l.b16 %v414
    %v1412 = vunpack.c.l.b16 %v415
    %v1413 = vunpack.c.l.b16 %v416
    %v1414 = vunpack.c.l.b16 %v417
    %v1415 = vunpack.c.l.b16 %v418
    %v1416 = vunpack.c.l.b16 %v419
    %v1417 = vunpack.c.l.b16 %v420
    %v1418 = vunpack.c.l.b16 %v421
    %v1419 = vunpack.c.l.b16 %v422
    %v1420 = vunpack.c.l.b16 %v423
    %v1421 = vunpack.c.l.b16 %v424
    %v1422 = vunpack.c.l.b16 %v425
    %v1423 = vunpack.c.l.b16 %v426
    %v1424 = vunpack.c.l.b16 %v427
    %v1425 = vunpack.c.l.b16 %v428
    %v1426 = vunpack.c.l.b16 %v429
    %v1427 = vunpack.c.l.b16 %v430
    %v1428 = vunpack.c.l.b16 %v431
    %v1429 = vpack.c.b16 %v1030, %v1029
    %v1430 = vpack.c.b16 %v1032, %v1031
    %v1431 = vpack.c.b16 %v1034, %v1033
    %v1432 = vpack.c.b16 %v1036, %v1035
    %v1433 = vpack.c.b16 %v1038, %v1037
    %v1434 = vpack.c.b16 %v1040, %v1039
    %v1435 = vpack.c.b16 %v1042, %v1041
    %v1436 = vpack.c.b16 %v1044, %v1043
    %v1437 = vpack.c.b16 %v1046, %v1045
    %v1438 = vpack.c.b16 %v1048, %v1047
    %v1439 = vpack.c.b16 %v1050, %v1049
    %v1440 = vpack.c.b16 %v1052, %v1051
    %v1441 = vpack.c.b16 %v1054, %v1053
    %v1442 = vpack.c.b16 %v1056, %v1055
    %v1443 = vpack.c.b16 %v1058, %v1057
    %v1444 = vpack.c.b16 %v1060, %v1059
    %v1445 = vpack.c.b16 %v1062, %v1061
    %v1446 = vpack.c.b16 %v1064, %v1063
    %v1447 = vpack.c.b16 %v1066, %v1065
    %v1448 = vpack.c.b16 %v1068, %v1067
    %v1449 = vpack.c.b16 %v1070, %v1069
    %v1450 = vpack.c.b16 %v1072, %v1071
    %v1451 = vpack.c.b16 %v1074, %v1073
    %v1452 = vpack.c.b16 %v1076, %v1075
    %v1453 = vpack.c.b16 %v1078, %v1077
    %v1454 = vpack.c.b16 %v1080, %v1079
    %v1455 = vpack.c.b16 %v1082, %v1081
    %v1456 = vpack.c.b16 %v1084, %v1083
    %v1457 = vpack.c.b16 %v1086, %v1085
    %v1458 = vpack.c.b16 %v1088, %v1087
    %v1459 = vpack.c.b16 %v1090, %v1089
    %v1460 = vpack.c.b16 %v1092, %v1091
    %v1461 = vpack.c.b16 %v1094, %v1093
    %v1462 = vpack.c.b16 %v1096, %v1095
    %v1463 = vpack.c.b16 %v1098, %v1097
    %v1464 = vpack.c.b16 %v1100, %v1099
    %v1465 = vpack.c.b16 %v1102, %v1101
    %v1466 = vpack.c.b16 %v1104, %v1103
    %v1467 = vpack.c.b16 %v1106, %v1105
    %v1468 = vpack.c.b16 %v1108, %v1107
    %v1469 = vpack.c.b16 %v1110, %v1109
    %v1470 = vpack.c.b16 %v1112, %v1111
    %v1471 = vpack.c.b16 %v1114, %v1113
    %v1472 = vpack.c.b16 %v1116, %v1115
    %v1473 = vpack.c.b16 %v1118, %v1117
    %v1474 = vpack.c.b16 %v1120, %v1119
    %v1475 = vpack.c.b16 %v1122, %v1121
    %v1476 = vpack.c.b16 %v1124, %v1123
    %v1477 = vpack.c.b16 %v1126, %v1125
    %v1478 = vpack.c.b16 %v1128, %v1127
    %v1479 = vpack.c.b16 %v1130, %v1129
    %v1480 = vpack.c.b16 %v1132, %v1131
    %v1481 = vpack.c.b16 %v1134, %v1133
    %v1482 = vpack.c.b16 %v1136, %v1135
    %v1483 = vpack.c.b16 %v1138, %v1137
    %v1484 = vpack.c.b16 %v1140, %v1139
    %v1485 = vpack.c.b16 %v1142, %v1141
    %v1486 = vpack.c.b16 %v1144, %v1143
    %v1487 = vpack.c.b16 %v1146, %v1145
    %v1488 = vpack.c.b16 %v1148, %v1147
    %v1489 = vpack.c.b16 %v1150, %v1149
    %v1490 = vpack.c.b16 %v1152, %v1151
    %v1491 = vpack.c.b16 %v1154, %v1153
    %v1492 = vpack.c.b16 %v1156, %v1155
    %v1493 = vpack.c.b16 %v1158, %v1157
    %v1494 = vpack.c.b16 %v1160, %v1159
    %v1495 = vpack.c.b16 %v1162, %v1161
    %v1496 = vpack.c.b16 %v1164, %v1163
    %v1497 = vpack.c.b16 %v1166, %v1165
    %v1498 = vpack.c.b16 %v1168, %v1167
    %v1499 = vpack.c.b16 %v1170, %v1169
    %v1500 = vpack.c.b16 %v1172, %v1171
    %v1501 = vpack.c.b16 %v1174, %v1173
    %v1502 = vpack.c.b16 %v1176, %v1175
    %v1503 = vpack.c.b16 %v1178, %v1177
    %v1504 = vpack.c.b16 %v1180, %v1179
    %v1505 = vpack.c.b16 %v1182, %v1181
    %v1506 = vpack.c.b16 %v1184, %v1183
    %v1507 = vpack.c.b16 %v1186, %v1185
    %v1508 = vpack.c.b16 %v1188, %v1187
    %v1509 = vpack.c.b16 %v1190, %v1189
    %v1510 = vpack.c.b16 %v1192, %v1191
    %v1511 = vpack.c.b16 %v1194, %v1193
    %v1512 = vpack.c.b16 %v1196, %v1195
    %v1513 = vpack.c.b16 %v1198, %v1197
    %v1514 = vpack.c.b16 %v1200, %v1199
    %v1515 = vpack.c.b16 %v1202, %v1201
    %v1516 = vpack.c.b16 %v1204, %v1203
    %v1517 = vpack.c.b16 %v1206, %v1205
    %v1518 = vpack.c.b16 %v1208, %v1207
    %v1519 = vpack.c.b16 %v1210, %v1209
    %v1520 = vpack.c.b16 %v1212, %v1211
    %v1521 = vpack.c.b16 %v1214, %v1213
    %v1522 = vpack.c.b16 %v1216, %v1215
    %v1523 = vpack.c.b16 %v1218, %v1217
    %v1524 = vpack.c.b16 %v1220, %v1219
    %v1525 = vpack.c.b16 %v1222, %v1221
    %v1526 = vpack.c.b16 %v1224, %v1223
    %v1527 = vpack.c.b16 %v1226, %v1225
    %v1528 = vpack.c.b16 %v1228, %v1227
    %v1529 = vpack.c.b16 %v1230, %v1229
    %v1530 = vpack.c.b16 %v1232, %v1231
    %v1531 = vpack.c.b16 %v1234, %v1233
    %v1532 = vpack.c.b16 %v1236, %v1235
    %v1533 = vpack.c.b16 %v1238, %v1237
    %v1534 = vpack.c.b16 %v1240, %v1239
    %v1535 = vpack.c.b16 %v1242, %v1241
    %v1536 = vpack.c.b16 %v1244, %v1243
    %v1537 = vpack.c.b16 %v1246, %v1245
    %v1538 = vpack.c.b16 %v1248, %v1247
    %v1539 = vpack.c.b16 %v1250, %v1249
    %v1540 = vpack.c.b16 %v1252, %v1251
    %v1541 = vpack.c.b16 %v1254, %v1253
    %v1542 = vpack.c.b16 %v1256, %v1255
    %v1543 = vpack.c.b16 %v1258, %v1257
    %v1544 = vpack.c.b16 %v1260, %v1259
    %v1545 = vpack.c.b16 %v1262, %v1261
    %v1546 = vpack.c.b16 %v1264, %v1263
    %v1547 = vpack.c.b16 %v1266, %v1265
    %v1548 = vpack.c.b16 %v1268, %v1267
    %v1549 = vpack.c.b16 %v1270, %v1269
    %v1550 = vpack.c.b16 %v1272, %v1271
    %v1551 = vpack.c.b16 %v1274, %v1273
    %v1552 = vpack.c.b16 %v1276, %v1275
    %v1553 = vpack.c.b16 %v1278, %v1277
    %v1554 = vpack.c.b16 %v1280, %v1279
    %v1555 = vpack.c.b16 %v1282, %v1281
    %v1556 = vpack.c.b16 %v1284, %v1283
    %v1557 = vpack.c.b16 %v1286, %v1285
    %v1558 = vpack.c.b16 %v1288, %v1287
    %v1559 = vpack.c.b16 %v1290, %v1289
    %v1560 = vpack.c.b16 %v1292, %v1291
    %v1561 = vpack.c.b16 %v1294, %v1293
    %v1562 = vpack.c.b16 %v1296, %v1295
    %v1563 = vpack.c.b16 %v1298, %v1297
    %v1564 = vpack.c.b16 %v1300, %v1299
    %v1565 = vpack.c.b16 %v1302, %v1301
    %v1566 = vpack.c.b16 %v1304, %v1303
    %v1567 = vpack.c.b16 %v1306, %v1305
    %v1568 = vpack.c.b16 %v1308, %v1307
    %v1569 = vpack.c.b16 %v1310, %v1309
    %v1570 = vpack.c.b16 %v1312, %v1311
    %v1571 = vpack.c.b16 %v1314, %v1313
    %v1572 = vpack.c.b16 %v1316, %v1315
    %v1573 = vpack.c.b16 %v1318, %v1317
    %v1574 = vpack.c.b16 %v1320, %v1319
    %v1575 = vpack.c.b16 %v1322, %v1321
    %v1576 = vpack.c.b16 %v1324, %v1323
    %v1577 = vpack.c.b16 %v1326, %v1325
    %v1578 = vpack.c.b16 %v1328, %v1327
    %v1579 = vpack.c.b16 %v1330, %v1329
    %v1580 = vpack.c.b16 %v1332, %v1331
    %v1581 = vpack.c.b16 %v1334, %v1333
    %v1582 = vpack.c.b16 %v1336, %v1335
    %v1583 = vpack.c.b16 %v1338, %v1337
    %v1584 = vpack.c.b16 %v1340, %v1339
    %v1585 = vpack.c.b16 %v1342, %v1341
    %v1586 = vpack.c.b16 %v1344, %v1343
    %v1587 = vpack.c.b16 %v1346, %v1345
    %v1588 = vpack.c.b16 %v1348, %v1347
    %v1589 = vpack.c.b16 %v1350, %v1349
    %v1590 = vpack.c.b16 %v1352, %v1351
    %v1591 = vpack.c.b16 %v1354, %v1353
    %v1592 = vpack.c.b16 %v1356, %v1355
    %v1593 = vpack.c.b16 %v1358, %v1357
    %v1594 = vpack.c.b16 %v1360, %v1359
    %v1595 = vpack.c.b16 %v1362, %v1361
    %v1596 = vpack.c.b16 %v1364, %v1363
    %v1597 = vpack.c.b16 %v1366, %v1365
    %v1598 = vpack.c.b16 %v1368, %v1367
    %v1599 = vpack.c.b16 %v1370, %v1369
    %v1600 = vpack.c.b16 %v1372, %v1371
    %v1601 = vpack.c.b16 %v1374, %v1373
    %v1602 = vpack.c.b16 %v1376, %v1375
    %v1603 = vpack.c.b16 %v1378, %v1377
    %v1604 = vpack.c.b16 %v1380, %v1379
    %v1605 = vpack.c.b16 %v1382, %v1381
    %v1606 = vpack.c.b16 %v1384, %v1383
    %v1607 = vpack.c.b16 %v1386, %v1385
    %v1608 = vpack.c.b16 %v1388, %v1387
    %v1609 = vpack.c.b16 %v1390, %v1389
    %v1610 = vpack.c.b16 %v1392, %v1391
    %v1611 = vpack.c.b16 %v1394, %v1393
    %v1612 = vpack.c.b16 %v1396, %v1395
    %v1613 = vpack.c.b16 %v1398, %v1397
    %v1614 = vpack.c.b16 %v1400, %v1399
    %v1615 = vpack.c.b16 %v1402, %v1401
    %v1616 = vpack.c.b16 %v1404, %v1403
    %v1617 = vpack.c.b16 %v1406, %v1405
    %v1618 = vpack.c.b16 %v1408, %v1407
    %v1619 = vpack.c.b16 %v1410, %v1409
    %v1620 = vpack.c.b16 %v1412, %v1411
    %v1621 = vpack.c.b16 %v1414, %v1413
    %v1622 = vpack.c.b16 %v1416, %v1415
    %v1623 = vpack.c.b16 %v1418, %v1417
    %v1624 = vpack.c.b16 %v1420, %v1419
    %v1625 = vpack.c.b16 %v1422, %v1421
    %v1626 = vpack.c.b16 %v1424, %v1423
    %v1627 = vpack.c.b16 %v1426, %v1425
    %v1628 = vpack.c.b16 %v1428, %v1427
    %1829 = vmatprep.subr.bf16.mxu0 0
    %1830 = vmatpush1.bf16.msra.mxu0 %v1429
    %1831 = vmatprep.subr.bf16.mxu0 0
    %1832 = vmatpush1.bf16.msra.mxu0 %v1430
    %1833 = vmatprep.subr.bf16.mxu0 0
    %1834 = vmatpush1.bf16.msra.mxu0 %v1431
    %1835 = vmatprep.subr.bf16.mxu0 0
    %1836 = vmatpush1.bf16.msra.mxu0 %v1432
    %1837 = vmatprep.subr.bf16.mxu0 0
    %1838 = vmatpush1.bf16.msra.mxu0 %v1433
    %1839 = vmatprep.subr.bf16.mxu0 0
    %1840 = vmatpush1.bf16.msra.mxu0 %v1434
    %1841 = vmatprep.subr.bf16.mxu0 0
    %1842 = vmatpush1.bf16.msra.mxu0 %v1435
    %1843 = vmatprep.subr.bf16.mxu0 0
    %1844 = vmatpush1.bf16.msra.mxu0 %v1436
    %1845 = vmatprep.subr.bf16.mxu0 0
    %1846 = vmatpush1.bf16.msra.mxu0 %v1437
    %1847 = vmatprep.subr.bf16.mxu0 0
    %1848 = vmatpush1.bf16.msra.mxu0 %v1438
    %1849 = vmatprep.subr.bf16.mxu0 0
    %1850 = vmatpush1.bf16.msra.mxu0 %v1439
    %1851 = vmatprep.subr.bf16.mxu0 0
    %1852 = vmatpush1.bf16.msra.mxu0 %v1440
    %1853 = vmatprep.subr.bf16.mxu0 0
    %1854 = vmatpush1.bf16.msra.mxu0 %v1441
    %1855 = vmatprep.subr.bf16.mxu0 0
    %1856 = vmatpush1.bf16.msra.mxu0 %v1442
    %1857 = vmatprep.subr.bf16.mxu0 0
    %1858 = vmatpush1.bf16.msra.mxu0 %v1443
    %1859 = vmatprep.subr.bf16.mxu0 0
    %1860 = vmatpush1.bf16.msra.mxu0 %v1444
    %1861 = vmatprep.mubr.bf16.mxu0 %v480
    %1862 = vmatmul.mubr.bf16.gmra.mrb[0].mxu0 %v466
    %v1863 = vpop.f32.mrb[0].mxu0
    %v1864 = vadd.f32 %v437, %v1863
    %v1865 = vpop.f32.mrb[0].mxu0
    %v1866 = vpop.f32.mrb[0].mxu0
    %v1867 = vpop.f32.mrb[0].mxu0
    %1868 = vdwg.mxu0
    %1869 = vmatprep.subr.bf16.mxu0 0
    %1870 = vmatpush1.bf16.msra.mxu0 %v1445
    %1871 = vmatprep.subr.bf16.mxu0 0
    %1872 = vmatpush1.bf16.msra.mxu0 %v1446
    %1873 = vmatprep.subr.bf16.mxu0 0
    %1874 = vmatpush1.bf16.msra.mxu0 %v1447
    %1875 = vmatprep.subr.bf16.mxu0 0
    %1876 = vmatpush1.bf16.msra.mxu0 %v1448
    %1877 = vmatprep.subr.bf16.mxu0 0
    %1878 = vmatpush1.bf16.msra.mxu0 %v1449
    %1879 = vmatprep.subr.bf16.mxu0 0
    %1880 = vmatpush1.bf16.msra.mxu0 %v1450
    %1881 = vmatprep.subr.bf16.mxu0 0
    %1882 = vmatpush1.bf16.msra.mxu0 %v1451
    %1883 = vmatprep.subr.bf16.mxu0 0
    %1884 = vmatpush1.bf16.msra.mxu0 %v1452
    %1885 = vmatprep.subr.bf16.mxu0 0
    %1886 = vmatpush1.bf16.msra.mxu0 %v1453
    %1887 = vmatprep.subr.bf16.mxu0 0
    %1888 = vmatpush1.bf16.msra.mxu0 %v1454
    %1889 = vmatprep.subr.bf16.mxu0 0
    %1890 = vmatpush1.bf16.msra.mxu0 %v1455
    %1891 = vmatprep.subr.bf16.mxu0 0
    %1892 = vmatpush1.bf16.msra.mxu0 %v1456
    %1893 = vmatprep.subr.bf16.mxu0 0
    %1894 = vmatpush1.bf16.msra.mxu0 %v1457
    %1895 = vmatprep.subr.bf16.mxu0 0
    %1896 = vmatpush1.bf16.msra.mxu0 %v1458
    %1897 = vmatprep.subr.bf16.mxu0 0
    %1898 = vmatpush1.bf16.msra.mxu0 %v1459
    %1899 = vmatprep.subr.bf16.mxu0 0
    %1900 = vmatpush1.bf16.msra.mxu0 %v1460
    %1901 = vmatprep.mubr.bf16.mxu0 %v490
    %1902 = vmatmul.mubr.bf16.gmra.mrb[0].mxu0 %v488
    %v1903 = vpop.f32.mrb[0].mxu0
    %v1904 = vadd.f32 %v1864, %v1903
    %v1905 = vpop.f32.mrb[0].mxu0
    %v1906 = vpop.f32.mrb[0].mxu0
    %v1907 = vpop.f32.mrb[0].mxu0
    %1908 = vdwg.mxu0
    %1909 = vmatprep.subr.bf16.mxu0 0
    %1910 = vmatpush1.bf16.msra.mxu0 %v1461
    %1911 = vmatprep.subr.bf16.mxu0 0
    %1912 = vmatpush1.bf16.msra.mxu0 %v1462
    %1913 = vmatprep.subr.bf16.mxu0 0
    %1914 = vmatpush1.bf16.msra.mxu0 %v1463
    %1915 = vmatprep.subr.bf16.mxu0 0
    %1916 = vmatpush1.bf16.msra.mxu0 %v1464
    %1917 = vmatprep.subr.bf16.mxu0 0
    %1918 = vmatpush1.bf16.msra.mxu0 %v1465
    %1919 = vmatprep.subr.bf16.mxu0 0
    %1920 = vmatpush1.bf16.msra.mxu0 %v1466
    %1921 = vmatprep.subr.bf16.mxu0 0
    %1922 = vmatpush1.bf16.msra.mxu0 %v1467
    %1923 = vmatprep.subr.bf16.mxu0 0
    %1924 = vmatpush1.bf16.msra.mxu0 %v1468
    %1925 = vmatprep.subr.bf16.mxu0 0
    %1926 = vmatpush1.bf16.msra.mxu0 %v1469
    %1927 = vmatprep.subr.bf16.mxu0 0
    %1928 = vmatpush1.bf16.msra.mxu0 %v1470
    %1929 = vmatprep.subr.bf16.mxu0 0
    %1930 = vmatpush1.bf16.msra.mxu0 %v1471
    %1931 = vmatprep.subr.bf16.mxu0 0
    %1932 = vmatpush1.bf16.msra.mxu0 %v1472
    %1933 = vmatprep.subr.bf16.mxu0 0
    %1934 = vmatpush1.bf16.msra.mxu0 %v1473
    %1935 = vmatprep.subr.bf16.mxu0 0
    %1936 = vmatpush1.bf16.msra.mxu0 %v1474
    %1937 = vmatprep.subr.bf16.mxu0 0
    %1938 = vmatpush1.bf16.msra.mxu0 %v1475
    %1939 = vmatprep.subr.bf16.mxu0 0
    %1940 = vmatpush1.bf16.msra.mxu0 %v1476
    %1941 = vmatprep.mubr.bf16.mxu0 %v487
    %1942 = vmatmul.mubr.bf16.gmra.mrb[0].mxu0 %v473
    %v1943 = vpop.f32.mrb[0].mxu0
    %v1944 = vadd.f32 %v1904, %v1943
    %v1945 = vpop.f32.mrb[0].mxu0
    %v1946 = vpop.f32.mrb[0].mxu0
    %v1947 = vpop.f32.mrb[0].mxu0
    %1948 = vdwg.mxu0
    %1949 = vmatprep.subr.bf16.mxu0 0
    %1950 = vmatpush1.bf16.msra.mxu0 %v1477
    %1951 = vmatprep.subr.bf16.mxu0 0
    %1952 = vmatpush1.bf16.msra.mxu0 %v1478
    %1953 = vmatprep.subr.bf16.mxu0 0
    %1954 = vmatpush1.bf16.msra.mxu0 %v1479
    %1955 = vmatprep.subr.bf16.mxu0 0
    %1956 = vmatpush1.bf16.msra.mxu0 %v1480
    %1957 = vmatprep.subr.bf16.mxu0 0
    %1958 = vmatpush1.bf16.msra.mxu0 %v1481
    %1959 = vmatprep.subr.bf16.mxu0 0
    %1960 = vmatpush1.bf16.msra.mxu0 %v1482
    %1961 = vmatprep.subr.bf16.mxu0 0
    %1962 = vmatpush1.bf16.msra.mxu0 %v1483
    %1963 = vmatprep.subr.bf16.mxu0 0
    %1964 = vmatpush1.bf16.msra.mxu0 %v1484
    %1965 = vmatprep.subr.bf16.mxu0 0
    %1966 = vmatpush1.bf16.msra.mxu0 %v1485
    %1967 = vmatprep.subr.bf16.mxu0 0
    %1968 = vmatpush1.bf16.msra.mxu0 %v1486
    %1969 = vmatprep.subr.bf16.mxu0 0
    %1970 = vmatpush1.bf16.msra.mxu0 %v1487
    %1971 = vmatprep.subr.bf16.mxu0 0
    %1972 = vmatpush1.bf16.msra.mxu0 %v1488
    %1973 = vmatprep.subr.bf16.mxu0 0
    %1974 = vmatpush1.bf16.msra.mxu0 %v1489
    %1975 = vmatprep.subr.bf16.mxu0 0
    %1976 = vmatpush1.bf16.msra.mxu0 %v1490
    %1977 = vmatprep.subr.bf16.mxu0 0
    %1978 = vmatpush1.bf16.msra.mxu0 %v1491
    %1979 = vmatprep.subr.bf16.mxu0 0
    %1980 = vmatpush1.bf16.msra.mxu0 %v1492
    %1981 = vmatprep.mubr.bf16.mxu0 %v491
    %1982 = vmatmul.mubr.bf16.gmra.mrb[0].mxu0 %v489
    %v1983 = vpop.f32.mrb[0].mxu0
    %v1984 = vadd.f32 %v1944, %v1983
    %v1985 = vpop.f32.mrb[0].mxu0
    %v1986 = vpop.f32.mrb[0].mxu0
    %v1987 = vpop.f32.mrb[0].mxu0
    %1988 = vdwg.mxu0
    %1989 = vmatprep.subr.bf16.mxu0 0
    %1990 = vmatpush1.bf16.msra.mxu0 %v1493
    %1991 = vmatprep.subr.bf16.mxu0 0
    %1992 = vmatpush1.bf16.msra.mxu0 %v1494
    %1993 = vmatprep.subr.bf16.mxu0 0
    %1994 = vmatpush1.bf16.msra.mxu0 %v1495
    %1995 = vmatprep.subr.bf16.mxu0 0
    %1996 = vmatpush1.bf16.msra.mxu0 %v1496
    %1997 = vmatprep.subr.bf16.mxu0 0
    %1998 = vmatpush1.bf16.msra.mxu0 %v1497
    %1999 = vmatprep.subr.bf16.mxu0 0
    %2000 = vmatpush1.bf16.msra.mxu0 %v1498
    %2001 = vmatprep.subr.bf16.mxu0 0
    %2002 = vmatpush1.bf16.msra.mxu0 %v1499
    %2003 = vmatprep.subr.bf16.mxu0 0
    %2004 = vmatpush1.bf16.msra.mxu0 %v1500
    %2005 = vmatprep.subr.bf16.mxu0 0
    %2006 = vmatpush1.bf16.msra.mxu0 %v1501
    %2007 = vmatprep.subr.bf16.mxu0 0
    %2008 = vmatpush1.bf16.msra.mxu0 %v1502
    %2009 = vmatprep.subr.bf16.mxu0 0
    %2010 = vmatpush1.bf16.msra.mxu0 %v1503
    %2011 = vmatprep.subr.bf16.mxu0 0
    %2012 = vmatpush1.bf16.msra.mxu0 %v1504
    %2013 = vmatprep.subr.bf16.mxu0 0
    %2014 = vmatpush1.bf16.msra.mxu0 %v1505
    %2015 = vmatprep.subr.bf16.mxu0 0
    %2016 = vmatpush1.bf16.msra.mxu0 %v1506
    %2017 = vmatprep.subr.bf16.mxu0 0
    %2018 = vmatpush1.bf16.msra.mxu0 %v1507
    %2019 = vmatprep.subr.bf16.mxu0 0
    %2020 = vmatpush1.bf16.msra.mxu0 %v1508
    %2021 = vmatprep.mubr.bf16.mxu0 %v529
    %2022 = vmatmul.mubr.bf16.gmra.mrb[0].mxu0 %v515
    %v2023 = vpop.f32.mrb[0].mxu0
    %v2024 = vadd.f32 %v1984, %v2023
    %v2025 = vpop.f32.mrb[0].mxu0
    %v2026 = vpop.f32.mrb[0].mxu0
    %v2027 = vpop.f32.mrb[0].mxu0
    %2028 = vdwg.mxu0
    %2029 = vmatprep.subr.bf16.mxu0 0
    %2030 = vmatpush1.bf16.msra.mxu0 %v1509
    %2031 = vmatprep.subr.bf16.mxu0 0
    %2032 = vmatpush1.bf16.msra.mxu0 %v1510
    %2033 = vmatprep.subr.bf16.mxu0 0
    %2034 = vmatpush1.bf16.msra.mxu0 %v1511
    %2035 = vmatprep.subr.bf16.mxu0 0
    %2036 = vmatpush1.bf16.msra.mxu0 %v1512
    %2037 = vmatprep.subr.bf16.mxu0 0
    %2038 = vmatpush1.bf16.msra.mxu0 %v1513
    %2039 = vmatprep.subr.bf16.mxu0 0
    %2040 = vmatpush1.bf16.msra.mxu0 %v1514
    %2041 = vmatprep.subr.bf16.mxu0 0
    %2042 = vmatpush1.bf16.msra.mxu0 %v1515
    %2043 = vmatprep.subr.bf16.mxu0 0
    %2044 = vmatpush1.bf16.msra.mxu0 %v1516
    %2045 = vmatprep.subr.bf16.mxu0 0
    %2046 = vmatpush1.bf16.msra.mxu0 %v1517
    %2047 = vmatprep.subr.bf16.mxu0 0
    %2048 = vmatpush1.bf16.msra.mxu0 %v1518
    %2049 = vmatprep.subr.bf16.mxu0 0
    %2050 = vmatpush1.bf16.msra.mxu0 %v1519
    %2051 = vmatprep.subr.bf16.mxu0 0
    %2052 = vmatpush1.bf16.msra.mxu0 %v1520
    %2053 = vmatprep.subr.bf16.mxu0 0
    %2054 = vmatpush1.bf16.msra.mxu0 %v1521
    %2055 = vmatprep.subr.bf16.mxu0 0
    %2056 = vmatpush1.bf16.msra.mxu0 %v1522
    %2057 = vmatprep.subr.bf16.mxu0 0
    %2058 = vmatpush1.bf16.msra.mxu0 %v1523
    %2059 = vmatprep.subr.bf16.mxu0 0
    %2060 = vmatpush1.bf16.msra.mxu0 %v1524
    %2061 = vmatprep.mubr.bf16.mxu0 %v539
    %2062 = vmatmul.mubr.bf16.gmra.mrb[0].mxu0 %v537
    %v2063 = vpop.f32.mrb[0].mxu0
    %v2064 = vadd.f32 %v2024, %v2063
    %v2065 = vpop.f32.mrb[0].mxu0
    %v2066 = vpop.f32.mrb[0].mxu0
    %v2067 = vpop.f32.mrb[0].mxu0
    %2068 = vdwg.mxu0
    %2069 = vmatprep.subr.bf16.mxu0 0
    %2070 = vmatpush1.bf16.msra.mxu0 %v1525
    %2071 = vmatprep.subr.bf16.mxu0 0
    %2072 = vmatpush1.bf16.msra.mxu0 %v1526
    %2073 = vmatprep.subr.bf16.mxu0 0
    %2074 = vmatpush1.bf16.msra.mxu0 %v1527
    %2075 = vmatprep.subr.bf16.mxu0 0
    %2076 = vmatpush1.bf16.msra.mxu0 %v1528
    %2077 = vmatprep.subr.bf16.mxu0 0
    %2078 = vmatpush1.bf16.msra.mxu0 %v1529
    %2079 = vmatprep.subr.bf16.mxu0 0
    %2080 = vmatpush1.bf16.msra.mxu0 %v1530
    %2081 = vmatprep.subr.bf16.mxu0 0
    %2082 = vmatpush1.bf16.msra.mxu0 %v1531
    %2083 = vmatprep.subr.bf16.mxu0 0
    %2084 = vmatpush1.bf16.msra.mxu0 %v1532
    %2085 = vmatprep.subr.bf16.mxu0 0
    %2086 = vmatpush1.bf16.msra.mxu0 %v1533
    %2087 = vmatprep.subr.bf16.mxu0 0
    %2088 = vmatpush1.bf16.msra.mxu0 %v1534
    %2089 = vmatprep.subr.bf16.mxu0 0
    %2090 = vmatpush1.bf16.msra.mxu0 %v1535
    %2091 = vmatprep.subr.bf16.mxu0 0
    %2092 = vmatpush1.bf16.msra.mxu0 %v1536
    %2093 = vmatprep.subr.bf16.mxu0 0
    %2094 = vmatpush1.bf16.msra.mxu0 %v1537
    %2095 = vmatprep.subr.bf16.mxu0 0
    %2096 = vmatpush1.bf16.msra.mxu0 %v1538
    %2097 = vmatprep.subr.bf16.mxu0 0
    %2098 = vmatpush1.bf16.msra.mxu0 %v1539
    %2099 = vmatprep.subr.bf16.mxu0 0
    %2100 = vmatpush1.bf16.msra.mxu0 %v1540
    %2101 = vmatprep.mubr.bf16.mxu0 %v536
    %2102 = vmatmul.mubr.bf16.gmra.mrb[0].mxu0 %v522
    %v2103 = vpop.f32.mrb[0].mxu0
    %v2104 = vadd.f32 %v2064, %v2103
    %v2105 = vpop.f32.mrb[0].mxu0
    %v2106 = vpop.f32.mrb[0].mxu0
    %v2107 = vpop.f32.mrb[0].mxu0
    %2108 = vdwg.mxu0
    %2109 = vmatprep.subr.bf16.mxu0 0
    %2110 = vmatpush1.bf16.msra.mxu0 %v1541
    %2111 = vmatprep.subr.bf16.mxu0 0
    %2112 = vmatpush1.bf16.msra.mxu0 %v1542
    %2113 = vmatprep.subr.bf16.mxu0 0
    %2114 = vmatpush1.bf16.msra.mxu0 %v1543
    %2115 = vmatprep.subr.bf16.mxu0 0
    %2116 = vmatpush1.bf16.msra.mxu0 %v1544
    %2117 = vmatprep.subr.bf16.mxu0 0
    %2118 = vmatpush1.bf16.msra.mxu0 %v1545
    %2119 = vmatprep.subr.bf16.mxu0 0
    %2120 = vmatpush1.bf16.msra.mxu0 %v1546
    %2121 = vmatprep.subr.bf16.mxu0 0
    %2122 = vmatpush1.bf16.msra.mxu0 %v1547
    %2123 = vmatprep.subr.bf16.mxu0 0
    %2124 = vmatpush1.bf16.msra.mxu0 %v1548
    %2125 = vmatprep.subr.bf16.mxu0 0
    %2126 = vmatpush1.bf16.msra.mxu0 %v1549
    %2127 = vmatprep.subr.bf16.mxu0 0
    %2128 = vmatpush1.bf16.msra.mxu0 %v1550
    %2129 = vmatprep.subr.bf16.mxu0 0
    %2130 = vmatpush1.bf16.msra.mxu0 %v1551
    %2131 = vmatprep.subr.bf16.mxu0 0
    %2132 = vmatpush1.bf16.msra.mxu0 %v1552
    %2133 = vmatprep.subr.bf16.mxu0 0
    %2134 = vmatpush1.bf16.msra.mxu0 %v1553
    %2135 = vmatprep.subr.bf16.mxu0 0
    %2136 = vmatpush1.bf16.msra.mxu0 %v1554
    %2137 = vmatprep.subr.bf16.mxu0 0
    %2138 = vmatpush1.bf16.msra.mxu0 %v1555
    %2139 = vmatprep.subr.bf16.mxu0 0
    %2140 = vmatpush1.bf16.msra.mxu0 %v1556
    %2141 = vmatprep.mubr.bf16.mxu0 %v540
    %2142 = vmatmul.mubr.bf16.gmra.mrb[0].mxu0 %v538
    %v2143 = vpop.f32.mrb[0].mxu0
    %v2144 = vadd.f32 %v2104, %v2143
    %v2145 = vpop.f32.mrb[0].mxu0
    %v2146 = vpop.f32.mrb[0].mxu0
    %v2147 = vpop.f32.mrb[0].mxu0
    %2148 = vdwg.mxu0
    %2149 = vmatprep.subr.bf16.mxu0 0
    %2150 = vmatpush1.bf16.msra.mxu0 %v1557
    %2151 = vmatprep.subr.bf16.mxu0 0
    %2152 = vmatpush1.bf16.msra.mxu0 %v1558
    %2153 = vmatprep.subr.bf16.mxu0 0
    %2154 = vmatpush1.bf16.msra.mxu0 %v1559
    %2155 = vmatprep.subr.bf16.mxu0 0
    %2156 = vmatpush1.bf16.msra.mxu0 %v1560
    %2157 = vmatprep.subr.bf16.mxu0 0
    %2158 = vmatpush1.bf16.msra.mxu0 %v1561
    %2159 = vmatprep.subr.bf16.mxu0 0
    %2160 = vmatpush1.bf16.msra.mxu0 %v1562
    %2161 = vmatprep.subr.bf16.mxu0 0
    %2162 = vmatpush1.bf16.msra.mxu0 %v1563
    %2163 = vmatprep.subr.bf16.mxu0 0
    %2164 = vmatpush1.bf16.msra.mxu0 %v1564
    %2165 = vmatprep.subr.bf16.mxu0 0
    %2166 = vmatpush1.bf16.msra.mxu0 %v1565
    %2167 = vmatprep.subr.bf16.mxu0 0
    %2168 = vmatpush1.bf16.msra.mxu0 %v1566
    %2169 = vmatprep.subr.bf16.mxu0 0
    %2170 = vmatpush1.bf16.msra.mxu0 %v1567
    %2171 = vmatprep.subr.bf16.mxu0 0
    %2172 = vmatpush1.bf16.msra.mxu0 %v1568
    %2173 = vmatprep.subr.bf16.mxu0 0
    %2174 = vmatpush1.bf16.msra.mxu0 %v1569
    %2175 = vmatprep.subr.bf16.mxu0 0
    %2176 = vmatpush1.bf16.msra.mxu0 %v1570
    %2177 = vmatprep.subr.bf16.mxu0 0
    %2178 = vmatpush1.bf16.msra.mxu0 %v1571
    %2179 = vmatprep.subr.bf16.mxu0 0
    %2180 = vmatpush1.bf16.msra.mxu0 %v1572
    %2181 = vmatprep.mubr.bf16.mxu0 %v578
    %2182 = vmatmul.mubr.bf16.gmra.mrb[0].mxu0 %v564
    %v2183 = vpop.f32.mrb[0].mxu0
    %v2184 = vadd.f32 %v2144, %v2183
    %v2185 = vpop.f32.mrb[0].mxu0
    %v2186 = vpop.f32.mrb[0].mxu0
    %v2187 = vpop.f32.mrb[0].mxu0
    %2188 = vdwg.mxu0
    %2189 = vmatprep.subr.bf16.mxu0 0
    %2190 = vmatpush1.bf16.msra.mxu0 %v1573
    %2191 = vmatprep.subr.bf16.mxu0 0
    %2192 = vmatpush1.bf16.msra.mxu0 %v1574
    %2193 = vmatprep.subr.bf16.mxu0 0
    %2194 = vmatpush1.bf16.msra.mxu0 %v1575
    %2195 = vmatprep.subr.bf16.mxu0 0
    %2196 = vmatpush1.bf16.msra.mxu0 %v1576
    %2197 = vmatprep.subr.bf16.mxu0 0
    %2198 = vmatpush1.bf16.msra.mxu0 %v1577
    %2199 = vmatprep.subr.bf16.mxu0 0
    %2200 = vmatpush1.bf16.msra.mxu0 %v1578
    %2201 = vmatprep.subr.bf16.mxu0 0
    %2202 = vmatpush1.bf16.msra.mxu0 %v1579
    %2203 = vmatprep.subr.bf16.mxu0 0
    %2204 = vmatpush1.bf16.msra.mxu0 %v1580
    %2205 = vmatprep.subr.bf16.mxu0 0
    %2206 = vmatpush1.bf16.msra.mxu0 %v1581
    %2207 = vmatprep.subr.bf16.mxu0 0
    %2208 = vmatpush1.bf16.msra.mxu0 %v1582
    %2209 = vmatprep.subr.bf16.mxu0 0
    %2210 = vmatpush1.bf16.msra.mxu0 %v1583
    %2211 = vmatprep.subr.bf16.mxu0 0
    %2212 = vmatpush1.bf16.msra.mxu0 %v1584
    %2213 = vmatprep.subr.bf16.mxu0 0
    %2214 = vmatpush1.bf16.msra.mxu0 %v1585
    %2215 = vmatprep.subr.bf16.mxu0 0
    %2216 = vmatpush1.bf16.msra.mxu0 %v1586
    %2217 = vmatprep.subr.bf16.mxu0 0
    %2218 = vmatpush1.bf16.msra.mxu0 %v1587
    %2219 = vmatprep.subr.bf16.mxu0 0
    %2220 = vmatpush1.bf16.msra.mxu0 %v1588
    %2221 = vmatprep.mubr.bf16.mxu0 %v588
    %2222 = vmatmul.mubr.bf16.gmra.mrb[0].mxu0 %v586
    %v2223 = vpop.f32.mrb[0].mxu0
    %v2224 = vadd.f32 %v2184, %v2223
    %v2225 = vpop.f32.mrb[0].mxu0
    %v2226 = vpop.f32.mrb[0].mxu0
    %v2227 = vpop.f32.mrb[0].mxu0
    %2228 = vdwg.mxu0
    %2229 = vmatprep.subr.bf16.mxu0 0
    %2230 = vmatpush1.bf16.msra.mxu0 %v1589
    %2231 = vmatprep.subr.bf16.mxu0 0
    %2232 = vmatpush1.bf16.msra.mxu0 %v1590
    %2233 = vmatprep.subr.bf16.mxu0 0
    %2234 = vmatpush1.bf16.msra.mxu0 %v1591
    %2235 = vmatprep.subr.bf16.mxu0 0
    %2236 = vmatpush1.bf16.msra.mxu0 %v1592
    %2237 = vmatprep.subr.bf16.mxu0 0
    %2238 = vmatpush1.bf16.msra.mxu0 %v1593
    %2239 = vmatprep.subr.bf16.mxu0 0
    %2240 = vmatpush1.bf16.msra.mxu0 %v1594
    %2241 = vmatprep.subr.bf16.mxu0 0
    %2242 = vmatpush1.bf16.msra.mxu0 %v1595
    %2243 = vmatprep.subr.bf16.mxu0 0
    %2244 = vmatpush1.bf16.msra.mxu0 %v1596
    %2245 = vmatprep.subr.bf16.mxu0 0
    %2246 = vmatpush1.bf16.msra.mxu0 %v1597
    %2247 = vmatprep.subr.bf16.mxu0 0
    %2248 = vmatpush1.bf16.msra.mxu0 %v1598
    %2249 = vmatprep.subr.bf16.mxu0 0
    %2250 = vmatpush1.bf16.msra.mxu0 %v1599
    %2251 = vmatprep.subr.bf16.mxu0 0
    %2252 = vmatpush1.bf16.msra.mxu0 %v1600
    %2253 = vmatprep.subr.bf16.mxu0 0
    %2254 = vmatpush1.bf16.msra.mxu0 %v1601
    %2255 = vmatprep.subr.bf16.mxu0 0
    %2256 = vmatpush1.bf16.msra.mxu0 %v1602
    %2257 = vmatprep.subr.bf16.mxu0 0
    %2258 = vmatpush1.bf16.msra.mxu0 %v1603
    %2259 = vmatprep.subr.bf16.mxu0 0
    %2260 = vmatpush1.bf16.msra.mxu0 %v1604
    %2261 = vmatprep.mubr.bf16.mxu0 %v585
    %2262 = vmatmul.mubr.bf16.gmra.mrb[0].mxu0 %v571
    %v2263 = vpop.f32.mrb[0].mxu0
    %v2264 = vadd.f32 %v2224, %v2263
    %v2265 = vpop.f32.mrb[0].mxu0
    %v2266 = vpop.f32.mrb[0].mxu0
    %v2267 = vpop.f32.mrb[0].mxu0
    %2268 = vdwg.mxu0
    %2269 = vmatprep.subr.bf16.mxu0 0
    %2270 = vmatpush1.bf16.msra.mxu0 %v1605
    %2271 = vmatprep.subr.bf16.mxu0 0
    %2272 = vmatpush1.bf16.msra.mxu0 %v1606
    %2273 = vmatprep.subr.bf16.mxu0 0
    %2274 = vmatpush1.bf16.msra.mxu0 %v1607
    %2275 = vmatprep.subr.bf16.mxu0 0
    %2276 = vmatpush1.bf16.msra.mxu0 %v1608
    %2277 = vmatprep.subr.bf16.mxu0 0
    %2278 = vmatpush1.bf16.msra.mxu0 %v1609
    %2279 = vmatprep.subr.bf16.mxu0 0
    %2280 = vmatpush1.bf16.msra.mxu0 %v1610
    %2281 = vmatprep.subr.bf16.mxu0 0
    %2282 = vmatpush1.bf16.msra.mxu0 %v1611
    %2283 = vmatprep.subr.bf16.mxu0 0
    %2284 = vmatpush1.bf16.msra.mxu0 %v1612
    %2285 = vmatprep.subr.bf16.mxu0 0
    %2286 = vmatpush1.bf16.msra.mxu0 %v1613
    %2287 = vmatprep.subr.bf16.mxu0 0
    %2288 = vmatpush1.bf16.msra.mxu0 %v1614
    %2289 = vmatprep.subr.bf16.mxu0 0
    %2290 = vmatpush1.bf16.msra.mxu0 %v1615
    %2291 = vmatprep.subr.bf16.mxu0 0
    %2292 = vmatpush1.bf16.msra.mxu0 %v1616
    %2293 = vmatprep.subr.bf16.mxu0 0
    %2294 = vmatpush1.bf16.msra.mxu0 %v1617
    %2295 = vmatprep.subr.bf16.mxu0 0
    %2296 = vmatpush1.bf16.msra.mxu0 %v1618
    %2297 = vmatprep.subr.bf16.mxu0 0
    %2298 = vmatpush1.bf16.msra.mxu0 %v1619
    %2299 = vmatprep.subr.bf16.mxu0 0
    %2300 = vmatpush1.bf16.msra.mxu0 %v1620
    %2301 = vmatprep.mubr.bf16.mxu0 %v589
    %2302 = vmatmul.mubr.bf16.gmra.mrb[0].mxu0 %v587
    %v2303 = vpop.f32.mrb[0].mxu0
    %v2304 = vadd.f32 %v2264, %v2303
    %v2305 = vpop.f32.mrb[0].mxu0
    %v2306 = vpop.f32.mrb[0].mxu0
    %v2307 = vpop.f32.mrb[0].mxu0
    %2308 = vdwg.mxu0
    %2309 = vmatprep.subr.bf16.mxu0 0
    %2310 = vmatpush1.bf16.msra.mxu0 %v1621
    %2311 = vmatprep.subr.bf16.mxu0 0
    %2312 = vmatpush1.bf16.msra.mxu0 %v1622
    %2313 = vmatprep.subr.bf16.mxu0 0
    %2314 = vmatpush1.bf16.msra.mxu0 %v1623
    %2315 = vmatprep.subr.bf16.mxu0 0
    %2316 = vmatpush1.bf16.msra.mxu0 %v1624
    %2317 = vmatprep.subr.bf16.mxu0 0
    %2318 = vmatpush1.bf16.msra.mxu0 %v1625
    %2319 = vmatprep.subr.bf16.mxu0 0
    %2320 = vmatpush1.bf16.msra.mxu0 %v1626
    %2321 = vmatprep.subr.bf16.mxu0 0
    %2322 = vmatpush1.bf16.msra.mxu0 %v1627
    %2323 = vmatprep.subr.bf16.mxu0 0
    %2324 = vmatpush1.bf16.msra.mxu0 %v1628
    %2325 = vmatprep.subr.bf16.mxu0 0
    %2326 = vmatpush1.bf16.msra.mxu0 0
    %2327 = vmatprep.subr.bf16.mxu0 0
    %2328 = vmatpush1.bf16.msra.mxu0 0
    %2329 = vmatprep.subr.bf16.mxu0 0
    %2330 = vmatpush1.bf16.msra.mxu0 0
    %2331 = vmatprep.subr.bf16.mxu0 0
    %2332 = vmatpush1.bf16.msra.mxu0 0
    %2333 = vmatprep.subr.bf16.mxu0 0
    %2334 = vmatpush1.bf16.msra.mxu0 0
    %2335 = vmatprep.subr.bf16.mxu0 0
    %2336 = vmatpush1.bf16.msra.mxu0 0
    %2337 = vmatprep.subr.bf16.mxu0 0
    %2338 = vmatpush1.bf16.msra.mxu0 0
    %2339 = vmatprep.subr.bf16.mxu0 0
    %2340 = vmatpush1.bf16.msra.mxu0 0
    %2341 = vmatprep.mubr.bf16.mxu0 0
    %2342 = vmatmul.mubr.bf16.gmra.mrb[0].mxu0 %v603
    %v2343 = vpop.f32.mrb[0].mxu0
    %v2344 = vadd.f32 %v2304, %v2343
    %v2345 = vpop.f32.mrb[0].mxu0
    %v2346 = vpop.f32.mrb[0].mxu0
    %v2347 = vpop.f32.mrb[0].mxu0
    %2348 = vdwg.mxu0
    %v2349 = vtanh.pop %v2344
    %v2350 = vpack.c.bf16 %v2349, %v2349
    %v2351 = vld [vmem:[%s3] sm:$0xf]
    %v2352 = vld [vmem:[%s3 + $0x4] sm:$0xf]
    %v2353 = vld [vmem:[%s3 + $0x8] sm:$0xf]
    %v2354 = vld [vmem:[%s3 + $0xc] sm:$0xf]
    %v2355 = vld [vmem:[%s3 + $0x10] sm:$0xf]
    %v2356 = vld [vmem:[%s3 + $0x14] sm:$0xf]
    %v2357 = vld [vmem:[%s3 + $0x18] sm:$0xf]
    %v2358 = vld [vmem:[%s3 + $0x1c] sm:$0xf]
    %v2359 = vld [vmem:[%s3 + $0x20] sm:$0xf]
    %v2360 = vld [vmem:[%s3 + $0x24] sm:$0xf]
    %v2361 = vld [vmem:[%s3 + $0x28] sm:$0xf]
    %v2362 = vld [vmem:[%s3 + $0x2c] sm:$0xf]
    %v2363 = vld [vmem:[%s3 + $0x30] sm:$0xf]
    %v2364 = vld [vmem:[%s3 + $0x34] sm:$0xf]
    %v2365 = vld [vmem:[%s3 + $0x38] sm:$0xf]
    %v2366 = vld [vmem:[%s3 + $0x3c] sm:$0xf]
    %v2367 = vld [vmem:[%s4] sm:$0x1]
    %v2369 = vlaneseq
    %v2370 = vshrl.u32 %v2369, 7
    %v2371 = vsub.s32 0, %v2370
    %v2372 = vrot.slane %v2367, %v2371
    %v2390 = vunpack.c.l.b16 %v2351
    %v2391 = vunpack.c.l.b16 %v2352
    %v2392 = vunpack.c.l.b16 %v2353
    %v2393 = vunpack.c.l.b16 %v2354
    %v2394 = vunpack.c.l.b16 %v2355
    %v2395 = vunpack.c.l.b16 %v2356
    %v2396 = vunpack.c.l.b16 %v2357
    %v2397 = vunpack.c.l.b16 %v2358
    %v2398 = vunpack.c.l.b16 %v2359
    %v2399 = vunpack.c.l.b16 %v2360
    %v2400 = vunpack.c.l.b16 %v2361
    %v2401 = vunpack.c.l.b16 %v2362
    %v2402 = vunpack.c.l.b16 %v2363
    %v2403 = vunpack.c.l.b16 %v2364
    %v2404 = vunpack.c.l.b16 %v2365
    %v2405 = vunpack.c.l.b16 %v2366
    %v2406 = vpack.c.b16 %v2391, %v2390
    %v2407 = vpack.c.b16 %v2393, %v2392
    %v2408 = vpack.c.b16 %v2395, %v2394
    %v2409 = vpack.c.b16 %v2397, %v2396
    %v2410 = vpack.c.b16 %v2399, %v2398
    %v2411 = vpack.c.b16 %v2401, %v2400
    %v2412 = vpack.c.b16 %v2403, %v2402
    %v2413 = vpack.c.b16 %v2405, %v2404
    %2422 = vmatprep.subr.bf16.mxu0 0
    %2423 = vmatpush1.bf16.msra.mxu0 %v2406
    %2424 = vmatprep.subr.bf16.mxu0 0
    %2425 = vmatpush1.bf16.msra.mxu0 %v2407
    %2426 = vmatprep.subr.bf16.mxu0 0
    %2427 = vmatpush1.bf16.msra.mxu0 %v2408
    %2428 = vmatprep.subr.bf16.mxu0 0
    %2429 = vmatpush1.bf16.msra.mxu0 %v2409
    %2430 = vmatprep.subr.bf16.mxu0 0
    %2431 = vmatpush1.bf16.msra.mxu0 %v2410
    %2432 = vmatprep.subr.bf16.mxu0 0
    %2433 = vmatpush1.bf16.msra.mxu0 %v2411
    %2434 = vmatprep.subr.bf16.mxu0 0
    %2435 = vmatpush1.bf16.msra.mxu0 %v2412
    %2436 = vmatprep.subr.bf16.mxu0 0
    %2437 = vmatpush1.bf16.msra.mxu0 %v2413
    %2438 = vmatprep.subr.bf16.mxu0 0
    %2439 = vmatpush1.bf16.msra.mxu0 0
    %2440 = vmatprep.subr.bf16.mxu0 0
    %2441 = vmatpush1.bf16.msra.mxu0 0
    %2442 = vmatprep.subr.bf16.mxu0 0
    %2443 = vmatpush1.bf16.msra.mxu0 0
    %2444 = vmatprep.subr.bf16.mxu0 0
    %2445 = vmatpush1.bf16.msra.mxu0 0
    %2446 = vmatprep.subr.bf16.mxu0 0
    %2447 = vmatpush1.bf16.msra.mxu0 0
    %2448 = vmatprep.subr.bf16.mxu0 0
    %2449 = vmatpush1.bf16.msra.mxu0 0
    %2450 = vmatprep.subr.bf16.mxu0 0
    %2451 = vmatpush1.bf16.msra.mxu0 0
    %2452 = vmatprep.subr.bf16.mxu0 0
    %2453 = vmatpush1.bf16.msra.mxu0 0
    %2454 = vmatprep.mubr.bf16.mxu0 0
    %2455 = vmatmul.mubr.bf16.gmra.mrb[0].mxu0 %v2350
    %v2456 = vpop.f32.mrb[0].mxu0
    %v2457 = vadd.f32 %v2372, %v2456
    %v2458 = vpop.f32.mrb[0].mxu0
    %v2459 = vpop.f32.mrb[0].mxu0
    %v2460 = vpop.f32.mrb[0].mxu0
    %2461 = vdwg.mxu0
    %v2462 = vtanh.pop %v2457
    %v2463 = vpack.c.bf16 %v2462, %v2462
    %v2464 = vld [vmem:[%s5] sm:$0xf]
    %v2465 = vld [vmem:[%s5 + $0x4] sm:$0xf]
    %v2466 = vld [vmem:[%s5 + $0x8] sm:$0xf]
    %v2467 = vld [vmem:[%s5 + $0xc] sm:$0xf]
    %v2468 = vld [vmem:[%s5 + $0x10] sm:$0xf]
    %v2469 = vld [vmem:[%s5 + $0x14] sm:$0xf]
    %v2470 = vld [vmem:[%s5 + $0x18] sm:$0xf]
    %v2471 = vld [vmem:[%s5 + $0x1c] sm:$0xf]
    %v2472 = vld [vmem:[%s5 + $0x20] sm:$0xf]
    %v2473 = vld [vmem:[%s5 + $0x24] sm:$0xf]
    %v2474 = vld [vmem:[%s5 + $0x28] sm:$0xf]
    %v2475 = vld [vmem:[%s5 + $0x2c] sm:$0xf]
    %v2476 = vld [vmem:[%s5 + $0x30] sm:$0xf]
    %v2477 = vld [vmem:[%s5 + $0x34] sm:$0xf]
    %v2478 = vld [vmem:[%s5 + $0x38] sm:$0xf]
    %v2479 = vld [vmem:[%s5 + $0x3c] sm:$0xf]
    %v2480 = vld [vmem:[%s6] sm:$0x1]
    %v2482 = vlaneseq
    %v2483 = vshrl.u32 %v2482, 7
    %v2484 = vsub.s32 0, %v2483
    %v2485 = vrot.slane %v2480, %v2484
    %v2503 = vunpack.c.l.b16 %v2464
    %v2504 = vunpack.c.l.b16 %v2465
    %v2505 = vunpack.c.l.b16 %v2466
    %v2506 = vunpack.c.l.b16 %v2467
    %v2507 = vunpack.c.l.b16 %v2468
    %v2508 = vunpack.c.l.b16 %v2469
    %v2509 = vunpack.c.l.b16 %v2470
    %v2510 = vunpack.c.l.b16 %v2471
    %v2511 = vunpack.c.l.b16 %v2472
    %v2512 = vunpack.c.l.b16 %v2473
    %v2513 = vunpack.c.l.b16 %v2474
    %v2514 = vunpack.c.l.b16 %v2475
    %v2515 = vunpack.c.l.b16 %v2476
    %v2516 = vunpack.c.l.b16 %v2477
    %v2517 = vunpack.c.l.b16 %v2478
    %v2518 = vunpack.c.l.b16 %v2479
    %v2519 = vpack.c.b16 %v2504, %v2503
    %v2520 = vpack.c.b16 %v2506, %v2505
    %v2521 = vpack.c.b16 %v2508, %v2507
    %v2522 = vpack.c.b16 %v2510, %v2509
    %v2523 = vpack.c.b16 %v2512, %v2511
    %v2524 = vpack.c.b16 %v2514, %v2513
    %v2525 = vpack.c.b16 %v2516, %v2515
    %v2526 = vpack.c.b16 %v2518, %v2517
    %2535 = vmatprep.subr.bf16.mxu0 0
    %2536 = vmatpush1.bf16.msra.mxu0 %v2519
    %2537 = vmatprep.subr.bf16.mxu0 0
    %2538 = vmatpush1.bf16.msra.mxu0 %v2520
    %2539 = vmatprep.subr.bf16.mxu0 0
    %2540 = vmatpush1.bf16.msra.mxu0 %v2521
    %2541 = vmatprep.subr.bf16.mxu0 0
    %2542 = vmatpush1.bf16.msra.mxu0 %v2522
    %2543 = vmatprep.subr.bf16.mxu0 0
    %2544 = vmatpush1.bf16.msra.mxu0 %v2523
    %2545 = vmatprep.subr.bf16.mxu0 0
    %2546 = vmatpush1.bf16.msra.mxu0 %v2524
    %2547 = vmatprep.subr.bf16.mxu0 0
    %2548 = vmatpush1.bf16.msra.mxu0 %v2525
    %2549 = vmatprep.subr.bf16.mxu0 0
    %2550 = vmatpush1.bf16.msra.mxu0 %v2526
    %2551 = vmatprep.subr.bf16.mxu0 0
    %2552 = vmatpush1.bf16.msra.mxu0 0
    %2553 = vmatprep.subr.bf16.mxu0 0
    %2554 = vmatpush1.bf16.msra.mxu0 0
    %2555 = vmatprep.subr.bf16.mxu0 0
    %2556 = vmatpush1.bf16.msra.mxu0 0
    %2557 = vmatprep.subr.bf16.mxu0 0
    %2558 = vmatpush1.bf16.msra.mxu0 0
    %2559 = vmatprep.subr.bf16.mxu0 0
    %2560 = vmatpush1.bf16.msra.mxu0 0
    %2561 = vmatprep.subr.bf16.mxu0 0
    %2562 = vmatpush1.bf16.msra.mxu0 0
    %2563 = vmatprep.subr.bf16.mxu0 0
    %2564 = vmatpush1.bf16.msra.mxu0 0
    %2565 = vmatprep.subr.bf16.mxu0 0
    %2566 = vmatpush1.bf16.msra.mxu0 0
    %2567 = vmatprep.mubr.bf16.mxu0 0
    %2568 = vmatmul.mubr.bf16.gmra.mrb[0].mxu0 %v2463
    %v2569 = vpop.f32.mrb[0].mxu0
    %v2570 = vadd.f32 %v2485, %v2569
    %v2571 = vpop.f32.mrb[0].mxu0
    %v2572 = vpop.f32.mrb[0].mxu0
    %v2573 = vpop.f32.mrb[0].mxu0
    %2574 = vdwg.mxu0
    %v2575 = vlaneseq
    %v2576 = vand.u32 %v2575, 127
    %vm2577 = vcmp.lt.s32.totalorder %v2576, 10
    %v2578 = vsel %vm2577, %v2570, -1e+30
    %vm2579 = vcmask 1041408
    %v2580 = vsel %vm2579, %v2578, -inf
    %2581 = vmax.xlane.f32.xlu0 %v2580
    %v2582 = vpop.xlane.xlu0 %2581
    %v2583 = vsub.f32 %v2578, %v2582
    %v2584 = vmul.f32 %v2583, 1.442695
    %v2585 = vpow.pop %v2584
    %v2586 = vsel %vm2579, %v2585, 0.0
    %2587 = vadd.xlane.f32.xlu0 %v2586
    %v2588 = vpop.xlane.xlu0 %2587
    %v2589 = vlog2.pop %v2588
    %v2590 = vmul.f32 %v2589, 0.6931472
    %v2591 = vsub.f32 %v2583, %v2590
    %2592 = vst [vmem:[#allocation2] sm:$0x3] %v2591
    // Predicated region
    $region30: #{_lambda_.5} parent=1 // pred_check
      _
    $region31: #{_lambda_.5} parent=1 // pred_check_branch
      %2594 = sbr.rel (0) target = $region33
    $region32: #{_lambda_.5} parent=1 // pred_region
      %s2596 = ssub.s32 32, 32
      %2597 = vsyncadd [#allocation3], %s2596
      %s2599 = sshll.u32 [#allocation2], 4
      %s2600 = int_to_ptr.vmem [resolvable:$true] %s2599
      %2602 = dma.vmem_to_hbm [thread:$0]  %s2600, 32, %s7, [#allocation3]
    $region33: #{_lambda_.5} parent=1 // pred_fallthru
      _
    // Predicated region
    $region34: #{_lambda_.5} parent=1 // pred_check
      _
    $region35: #{_lambda_.5} parent=1 // pred_check_branch
      %2604 = sbr.rel (0) target = $region37
    $region36: #{_lambda_.5} parent=1 // pred_region
      %2605 = dma.done [#allocation3], 32
    $region37: #{_lambda_.5} parent=1 // pred_fallthru
      _
    %2606 = vsyncpa [#allocation3], 1

</llo_original>
